<compile_context>
chip_gen: v7x
topology: tpu7x:2x2x1
jax: 0.10.0
libtpu: 0.0.40
codegen_flags: <defaults>
</compile_context>

<pallas_src>
import math

import jax
import jax.numpy as jnp
from jax.experimental import pallas as pl
from jax.experimental.pallas import tpu as pltpu


def _gated_product(z, d):
    """tanh * sigmoid * sin * cos over the four d-wide activation stripes of z."""
    t = jnp.tanh(z[:, 0 * d:1 * d])
    # sigmoid(x) == 0.5*(tanh(x/2)+1): reuses the tanh/EUP path, no exp+divide.
    s = 0.5 * (jnp.tanh(0.5 * z[:, 1 * d:2 * d]) + 1.0)
    si = jnp.sin(z[:, 2 * d:3 * d])
    co = jnp.cos(z[:, 3 * d:4 * d])
    return t * s * si * co


def _parallel_split_net_kernel(x_ref, rff_ref, w1_ref, b1_ref, w2_ref, b2_ref,
                               w3_ref, b3_ref, o_ref):
    """Fused ParallelSplitNet forward for one batch tile.

    x_ref  : (Bt, 2)   f32       input points
    rff_ref: (2, E)    f32       2*pi * B^T  (Gaussian encoding matrix)
    w1_ref : (2E, 4*N*h1)        layer-1 weights, all nets, activation-grouped cols
    b1_ref : (1, 4*N*h1)  f32
    w2_ref : (N*h1, 4*N*h2)      layer-2 block-diagonal weights (m1 folded in)
    b2_ref : (1, 4*N*h2)  f32
    w3_ref : (N*h2, Dout)        final weights stacked along K (m2 folded in)
    b3_ref : (1, Dout)    f32    final biases pre-summed over nets
    o_ref  : (Bt, Dout)   f32    sum over the N parallel networks
    """
    x = x_ref[...]                      # (Bt, 2)
    rff = rff_ref[...]                  # (2, E)
    E = rff.shape[1]
    nh1 = w1_ref.shape[1] // 4          # N * h1  (layer-1 activation stripe width)
    nh2 = w2_ref.shape[1] // 4          # N * h2  (layer-2 activation stripe width)
    cd = w1_ref.dtype                   # MXU operand dtype (f32 or bf16)

    # RFF projection v = x @ (2*pi*B^T), K == 2 -> two broadcast FMAs (VPU),
    # not a degenerate K=2 MXU matmul.
    v = x[:, 0:1] * rff[0:1, :]
    for d in range(1, x.shape[1]):      # static tiny loop (input_size == 2)
        v = v + x[:, d:d + 1] * rff[d:d + 1, :]
    cos_v = jnp.cos(v)                  # (Bt, E)
    sin_v = jnp.sin(v)                  # (Bt, E)

    # Layer 1: all N nets in one wide matmul; enc concat never materialized.
    z1 = (jnp.dot(cos_v.astype(cd), w1_ref[:E, :],
                  preferred_element_type=jnp.float32)
          + jnp.dot(sin_v.astype(cd), w1_ref[E:, :],
                    preferred_element_type=jnp.float32)
          + b1_ref[...])                                   # (Bt, 4*N*h1)
    a1 = _gated_product(z1, nh1)                            # (Bt, N*h1)

    # Layer 2: block-diagonal over the N nets -> a single matmul.
    z2 = jnp.dot(a1.astype(cd), w2_ref[...],
                 preferred_element_type=jnp.float32) + b2_ref[...]
    a2 = _gated_product(z2, nh2)                            # (Bt, N*h2)

    # Final Linear: stacking the nets along K makes this dot the sum over nets.
    out = jnp.dot(a2.astype(cd), w3_ref[...],
                  preferred_element_type=jnp.float32) + b3_ref[...]
    o_ref[...] = out.astype(o_ref.dtype)


def parallel_split_net_forward(x, rff_w, w1, b1, w2, b2, w3, b3, *,
                               batch_tile=None):
    """x: (B, 2); stacked, pre-folded parameters (see build_stacked_params)."""
    B, in_dim = x.shape
    out_dim = w3.shape[-1]

    # Default: the whole batch as ONE grid step (overhead-dominated kernel).
    # On v7x pass batch_tile = B // 2 so each TensorCore gets one tile.
    if batch_tile is None:
        batch_tile = B
    assert B % batch_tile == 0 and (batch_tile == B or batch_tile % 8 == 0), (
        B, batch_tile)

    def const2d(shape):
        # Grid-invariant block (weights / biases / RFF matrix).
        # TODO(synk): add pipeline_mode=pl.Buffered(1) here if the batch grid
        # grows and the net is scaled up (skip double-buffer VMEM reservation).
        return pl.BlockSpec(shape, lambda i: (0, 0))

    return pl.pallas_call(
        _parallel_split_net_kernel,
        out_shape=jax.ShapeDtypeStruct((B, out_dim), x.dtype),
        grid=(B // batch_tile,),
        in_specs=[
            pl.BlockSpec((batch_tile, in_dim), lambda i: (i, 0)),
            const2d(rff_w.shape),
            const2d(w1.shape), const2d(b1.shape),
            const2d(w2.shape), const2d(b2.shape),
            const2d(w3.shape), const2d(b3.shape),
        ],
        out_specs=pl.BlockSpec((batch_tile, out_dim), lambda i: (i, 0)),
        compiler_params=pltpu.CompilerParams(
            dimension_semantics=("parallel",)),   # batch tiles split across TCs on v7x
    )(x, rff_w, w1, b1, w2, b2, w3, b3)


if __name__ == "__main__":
    # ---- hyperparameters (ParallelSplitNet / SimpleSplitNet structure) ----
    encoded_size = 128                    # rff GaussianEncoding encoded_size
    sigma = 10.0
    in_features = 2 * encoded_size        # 256
    h1, h2 = 64, 32                       # SplitLayer widths
    out_features = 3
    batch = 64

    # Two parallel SimpleSplitNets with distinct hyperparameters.
    model_configs = [
        dict(cs=((0.08, 0.08, 0.08, 0.08), (0.15, 0.15, 0.15, 0.15), 0.2),
             omegas=(1.0, 2.0, 0.5, 1.5), m=0.8),
        dict(cs=((0.06, 0.10, 0.07, 0.09), (0.12, 0.18, 0.10, 0.14), 0.25),
             omegas=(0.7, 1.3, 1.0, 0.5), m=1.2),
    ]
    N = len(model_configs)

    key = jax.random.PRNGKey(0)
    k_x, k_rff, k_net = jax.random.split(key, 3)

    # RFF Gaussian encoding matrix b ~ N(0, sigma^2), shape (encoded_size, 2).
    rff_b = sigma * jax.random.normal(k_rff, (encoded_size, 2), jnp.float32)
    rff_w = (2.0 * math.pi) * rff_b.T                        # (2, E)

    # Raw (PyTorch-equivalent) parameters, stored pre-transposed as (Din, 4*Dout).
    def init_split_layer(k, din, dout, cs):
        kw = jax.random.split(k, 4)
        w = jnp.concatenate(
            [jax.random.uniform(kw[i], (din, dout), jnp.float32,
                                minval=-cs[i], maxval=cs[i]) for i in range(4)],
            axis=-1)                                   # (din, 4*dout)
        b = jnp.zeros((4 * dout,), jnp.float32)         # init_weights(): bias ~ U(0,0)
        return w, b

    raw = []
    net_keys = jax.random.split(k_net, N)
    for n, cfg in enumerate(model_configs):
        k1, k2, k3, k3b = jax.random.split(net_keys[n], 4)
        w1, b1 = init_split_layer(k1, in_features, h1, cfg["cs"][0])
        w2, b2 = init_split_layer(k2, h1, h2, cfg["cs"][1])
        w3 = jax.random.uniform(k3, (h2, out_features), jnp.float32,
                                minval=-cfg["cs"][2], maxval=cfg["cs"][2])
        kb = 1.0 / math.sqrt(h2)   # nn.Linear default bias init (not re-inited)
        b3 = jax.random.uniform(k3b, (out_features,), jnp.float32,
                                minval=-kb, maxval=kb)
        raw.append(dict(w1=w1, b1=b1, w2=w2, b2=b2, w3=w3, b3=b3,
                        omegas=cfg["omegas"], m=float(cfg["m"])))

    # ---- fold omegas/m, stack nets, and group columns by activation ----
    def build_stacked_params(dtype):
        # Layer 1: columns grouped as [tanh(net0|net1)|sigmoid(..)|sin(..)|cos(..)]
        # so each transcendental runs on a full (N*h1 = 128)-lane slab.
        W1_cols, B1_cols = [], []
        for k in range(4):
            for p in raw:
                om = p["omegas"][k]
                W1_cols.append(om * p["w1"][:, k * h1:(k + 1) * h1])
                B1_cols.append(om * p["b1"][k * h1:(k + 1) * h1])
        W1 = jnp.concatenate(W1_cols, axis=1)            # (2E, 4*N*h1)
        B1 = jnp.concatenate(B1_cols)[None, :]            # (1, 4*N*h1)

        # Layer 2: block-diagonal over nets along K; m of layer 1 folded in.
        W2 = jnp.zeros((N * h1, 4 * N * h2), jnp.float32)
        B2 = jnp.zeros((1, 4 * N * h2), jnp.float32)
        for k in range(4):
            for n, p in enumerate(raw):
                om = p["omegas"][k]
                c0 = k * N * h2 + n * h2
                W2 = W2.at[n * h1:(n + 1) * h1, c0:c0 + h2].set(
                    p["m"] * om * p["w2"][:, k * h2:(k + 1) * h2])
                B2 = B2.at[0, c0:c0 + h2].set(om * p["b2"][k * h2:(k + 1) * h2])

        # Layer 3: stack along K (dot sums over nets); m of layer 2 folded in;
        # biases pre-summed over nets.
        W3 = jnp.concatenate([p["m"] * p["w3"] for p in raw], axis=0)  # (N*h2, 3)
        B3 = sum(p["b3"] for p in raw)[None, :]                         # (1, 3)

        return (W1.astype(dtype), B1, W2.astype(dtype), B2,
                W3.astype(dtype), B3)

    # ---- inputs ----
    x = jax.random.uniform(k_x, (batch, 2), jnp.float32, minval=-1.0, maxval=1.0)

    # ---- pure-JAX reference (faithful to the PyTorch forward, unfolded) ----
    def reference(x):
        hi = jax.lax.Precision.HIGHEST
        v = (2.0 * math.pi) * jnp.dot(x, rff_b.T, precision=hi)
        enc = jnp.concatenate([jnp.cos(v), jnp.sin(v)], axis=-1)
        out = jnp.zeros((x.shape[0], out_features), jnp.float32)
        for p in raw:
            h = enc
            for (w, b, d) in ((p["w1"], p["b1"], h1), (p["w2"], p["b2"], h2)):
                z = jnp.dot(h, w, precision=hi) + b
                zs = [p["omegas"][i] * z[:, i * d:(i + 1) * d] for i in range(4)]
                h = (jnp.tanh(zs[0]) * jax.nn.sigmoid(zs[1])
                     * jnp.sin(zs[2]) * jnp.cos(zs[3])) * p["m"]
            out = out + jnp.dot(h, p["w3"], precision=hi) + p["b3"]
        return out

    ref = reference(x)

    # ---- f32 weights: tight accuracy check vs HIGHEST-precision reference ----
    params_f32 = build_stacked_params(jnp.float32)
    out_f32 = jax.block_until_ready(
        parallel_split_net_forward(x, rff_w, *params_f32))
    assert out_f32.shape == (batch, out_features)
    diff_f32 = float(jnp.max(jnp.abs(out_f32 - ref)))
    assert jnp.allclose(out_f32, ref, atol=2e-3, rtol=2e-3), (
        f"f32 mismatch vs reference, max abs diff = {diff_f32}")

    # ---- bf16 weights / MXU operands (f32 accumulation): halves weight DMA
    # and MXU passes on v6e/v7x; looser tolerance (bf16 rounding). ----
    params_bf16 = build_stacked_params(jnp.bfloat16)
    out_bf16 = jax.block_until_ready(
        parallel_split_net_forward(x, rff_w, *params_bf16))
    diff_bf16 = float(jnp.max(jnp.abs(out_bf16 - ref)))
    assert jnp.allclose(out_bf16, ref, atol=5e-2, rtol=5e-2), (
        f"bf16 mismatch vs reference, max abs diff = {diff_bf16}")

    print("KERNEL_OK")
</pallas_src>

<mosaic_0001>
module attributes {stable_mosaic.version = 11 : i64} {
  func.func @_parallel_split_net_kernel(%arg0: i32, %arg1: memref<64x2xf32, #tpu.memory_space<vmem>>, %arg2: memref<2x128xf32, #tpu.memory_space<vmem>>, %arg3: memref<256x512xf32, #tpu.memory_space<vmem>>, %arg4: memref<1x512xf32, #tpu.memory_space<vmem>>, %arg5: memref<128x256xf32, #tpu.memory_space<vmem>>, %arg6: memref<1x256xf32, #tpu.memory_space<vmem>>, %arg7: memref<64x3xf32, #tpu.memory_space<vmem>>, %arg8: memref<1x3xf32, #tpu.memory_space<vmem>>, %arg9: memref<64x3xf32, #tpu.memory_space<vmem>>) attributes {dimension_semantics = [#tpu.dimension_semantics<parallel>], iteration_bounds = array<i64: 1>, scalar_prefetch = 0 : i64, scratch_operands = 0 : i64, tpu.core_type = #tpu.core_type<tc>, window_params = [{transform_indices = @transform_0, window_bounds = array<i64: 64, 2>}, {pipeline_mode = #tpu.pipeline_mode<synchronous>, transform_indices = @transform_1, window_bounds = array<i64: 2, 128>}, {pipeline_mode = #tpu.pipeline_mode<synchronous>, transform_indices = @transform_2, window_bounds = array<i64: 256, 512>}, {pipeline_mode = #tpu.pipeline_mode<synchronous>, transform_indices = @transform_3, window_bounds = array<i64: 1, 512>}, {pipeline_mode = #tpu.pipeline_mode<synchronous>, transform_indices = @transform_4, window_bounds = array<i64: 128, 256>}, {pipeline_mode = #tpu.pipeline_mode<synchronous>, transform_indices = @transform_5, window_bounds = array<i64: 1, 256>}, {pipeline_mode = #tpu.pipeline_mode<synchronous>, transform_indices = @transform_6, window_bounds = array<i64: 64, 3>}, {pipeline_mode = #tpu.pipeline_mode<synchronous>, transform_indices = @transform_7, window_bounds = array<i64: 1, 3>}, {transform_indices = @transform_8, window_bounds = array<i64: 64, 3>}]} {
    %c0 = arith.constant 0 : index
    %c0_0 = arith.constant 0 : index
    %0 = vector.load %arg1[%c0, %c0_0] : memref<64x2xf32, #tpu.memory_space<vmem>>, vector<64x2xf32>
    %c0_1 = arith.constant 0 : index
    %c0_2 = arith.constant 0 : index
    %1 = vector.load %arg2[%c0_1, %c0_2] : memref<2x128xf32, #tpu.memory_space<vmem>>, vector<2x128xf32>
    %2 = vector.extract_strided_slice %0 {offsets = [0, 0], sizes = [64, 1], strides = [1, 1]} : vector<64x2xf32> to vector<64x1xf32>
    %3 = vector.extract_strided_slice %1 {offsets = [0, 0], sizes = [1, 128], strides = [1, 1]} : vector<2x128xf32> to vector<1x128xf32>
    %4 = vector.broadcast %2 : vector<64x1xf32> to vector<64x128xf32>
    %5 = vector.broadcast %3 : vector<1x128xf32> to vector<64x128xf32>
    %6 = arith.mulf %4, %5 : vector<64x128xf32>
    %7 = vector.extract_strided_slice %0 {offsets = [0, 1], sizes = [64, 1], strides = [1, 1]} : vector<64x2xf32> to vector<64x1xf32>
    %8 = vector.extract_strided_slice %1 {offsets = [1, 0], sizes = [1, 128], strides = [1, 1]} : vector<2x128xf32> to vector<1x128xf32>
    %9 = vector.broadcast %7 : vector<64x1xf32> to vector<64x128xf32>
    %10 = vector.broadcast %8 : vector<1x128xf32> to vector<64x128xf32>
    %11 = arith.mulf %9, %10 : vector<64x128xf32>
    %12 = arith.addf %6, %11 : vector<64x128xf32>
    %13 = math.cos %12 : vector<64x128xf32>
    %14 = math.sin %12 : vector<64x128xf32>
    %c0_3 = arith.constant 0 : index
    %c0_4 = arith.constant 0 : index
    %15 = vector.load %arg3[%c0_3, %c0_4] : memref<256x512xf32, #tpu.memory_space<vmem>>, vector<128x512xf32>
    %cst = arith.constant dense<0.000000e+00> : vector<64x512xf32>
    %16 = tpu.matmul %13, %15, %cst {dimension_numbers = #tpu.dot_dimension_numbers<[1], [0], [0], [1], [0, 0, 1, 1], [], []>} : vector<64x128xf32>, vector<128x512xf32>, vector<64x512xf32> -> vector<64x512xf32>
    %c128 = arith.constant 128 : index
    %c0_5 = arith.constant 0 : index
    %17 = vector.load %arg3[%c128, %c0_5] : memref<256x512xf32, #tpu.memory_space<vmem>>, vector<128x512xf32>
    %cst_6 = arith.constant dense<0.000000e+00> : vector<64x512xf32>
    %18 = tpu.matmul %14, %17, %cst_6 {dimension_numbers = #tpu.dot_dimension_numbers<[1], [0], [0], [1], [0, 0, 1, 1], [], []>} : vector<64x128xf32>, vector<128x512xf32>, vector<64x512xf32> -> vector<64x512xf32>
    %19 = arith.addf %16, %18 : vector<64x512xf32>
    %c0_7 = arith.constant 0 : index
    %c0_8 = arith.constant 0 : index
    %20 = vector.load %arg4[%c0_7, %c0_8] : memref<1x512xf32, #tpu.memory_space<vmem>>, vector<1x512xf32>
    %21 = vector.broadcast %20 : vector<1x512xf32> to vector<64x512xf32>
    %22 = arith.addf %19, %21 : vector<64x512xf32>
    %23 = vector.extract_strided_slice %22 {offsets = [0, 0], sizes = [64, 128], strides = [1, 1]} : vector<64x512xf32> to vector<64x128xf32>
    %24 = math.tanh %23 : vector<64x128xf32>
    %25 = vector.extract_strided_slice %22 {offsets = [0, 128], sizes = [64, 128], strides = [1, 1]} : vector<64x512xf32> to vector<64x128xf32>
    %cst_9 = arith.constant 5.000000e-01 : f32
    %26 = vector.broadcast %cst_9 : f32 to vector<64x128xf32>
    %27 = arith.mulf %26, %25 : vector<64x128xf32>
    %28 = math.tanh %27 : vector<64x128xf32>
    %cst_10 = arith.constant 1.000000e+00 : f32
    %29 = vector.broadcast %cst_10 : f32 to vector<64x128xf32>
    %30 = arith.addf %28, %29 : vector<64x128xf32>
    %cst_11 = arith.constant 5.000000e-01 : f32
    %31 = vector.broadcast %cst_11 : f32 to vector<64x128xf32>
    %32 = arith.mulf %31, %30 : vector<64x128xf32>
    %33 = vector.extract_strided_slice %22 {offsets = [0, 256], sizes = [64, 128], strides = [1, 1]} : vector<64x512xf32> to vector<64x128xf32>
    %34 = math.sin %33 : vector<64x128xf32>
    %35 = vector.extract_strided_slice %22 {offsets = [0, 384], sizes = [64, 128], strides = [1, 1]} : vector<64x512xf32> to vector<64x128xf32>
    %36 = math.cos %35 : vector<64x128xf32>
    %37 = arith.mulf %24, %32 : vector<64x128xf32>
    %38 = arith.mulf %37, %34 : vector<64x128xf32>
    %39 = arith.mulf %38, %36 : vector<64x128xf32>
    %c0_12 = arith.constant 0 : index
    %c0_13 = arith.constant 0 : index
    %40 = vector.load %arg5[%c0_12, %c0_13] : memref<128x256xf32, #tpu.memory_space<vmem>>, vector<128x256xf32>
    %cst_14 = arith.constant dense<0.000000e+00> : vector<64x256xf32>
    %41 = tpu.matmul %39, %40, %cst_14 {dimension_numbers = #tpu.dot_dimension_numbers<[1], [0], [0], [1], [0, 0, 1, 1], [], []>} : vector<64x128xf32>, vector<128x256xf32>, vector<64x256xf32> -> vector<64x256xf32>
    %c0_15 = arith.constant 0 : index
    %c0_16 = arith.constant 0 : index
    %42 = vector.load %arg6[%c0_15, %c0_16] : memref<1x256xf32, #tpu.memory_space<vmem>>, vector<1x256xf32>
    %43 = vector.broadcast %42 : vector<1x256xf32> to vector<64x256xf32>
    %44 = arith.addf %41, %43 : vector<64x256xf32>
    %45 = vector.extract_strided_slice %44 {offsets = [0, 0], sizes = [64, 64], strides = [1, 1]} : vector<64x256xf32> to vector<64x64xf32>
    %46 = math.tanh %45 : vector<64x64xf32>
    %47 = vector.extract_strided_slice %44 {offsets = [0, 64], sizes = [64, 64], strides = [1, 1]} : vector<64x256xf32> to vector<64x64xf32>
    %cst_17 = arith.constant 5.000000e-01 : f32
    %48 = vector.broadcast %cst_17 : f32 to vector<64x64xf32>
    %49 = arith.mulf %48, %47 : vector<64x64xf32>
    %50 = math.tanh %49 : vector<64x64xf32>
    %cst_18 = arith.constant 1.000000e+00 : f32
    %51 = vector.broadcast %cst_18 : f32 to vector<64x64xf32>
    %52 = arith.addf %50, %51 : vector<64x64xf32>
    %cst_19 = arith.constant 5.000000e-01 : f32
    %53 = vector.broadcast %cst_19 : f32 to vector<64x64xf32>
    %54 = arith.mulf %53, %52 : vector<64x64xf32>
    %55 = vector.extract_strided_slice %44 {offsets = [0, 128], sizes = [64, 64], strides = [1, 1]} : vector<64x256xf32> to vector<64x64xf32>
    %56 = math.sin %55 : vector<64x64xf32>
    %57 = vector.extract_strided_slice %44 {offsets = [0, 192], sizes = [64, 64], strides = [1, 1]} : vector<64x256xf32> to vector<64x64xf32>
    %58 = math.cos %57 : vector<64x64xf32>
    %59 = arith.mulf %46, %54 : vector<64x64xf32>
    %60 = arith.mulf %59, %56 : vector<64x64xf32>
    %61 = arith.mulf %60, %58 : vector<64x64xf32>
    %c0_20 = arith.constant 0 : index
    %c0_21 = arith.constant 0 : index
    %62 = vector.load %arg7[%c0_20, %c0_21] : memref<64x3xf32, #tpu.memory_space<vmem>>, vector<64x3xf32>
    %cst_22 = arith.constant dense<0.000000e+00> : vector<64x3xf32>
    %63 = tpu.matmul %61, %62, %cst_22 {dimension_numbers = #tpu.dot_dimension_numbers<[1], [0], [0], [1], [0, 0, 1, 1], [], []>} : vector<64x64xf32>, vector<64x3xf32>, vector<64x3xf32> -> vector<64x3xf32>
    %c0_23 = arith.constant 0 : index
    %c0_24 = arith.constant 0 : index
    %64 = vector.load %arg8[%c0_23, %c0_24] : memref<1x3xf32, #tpu.memory_space<vmem>>, vector<1x3xf32>
    %65 = vector.broadcast %64 : vector<1x3xf32> to vector<64x3xf32>
    %66 = arith.addf %63, %65 : vector<64x3xf32>
    %c0_25 = arith.constant 0 : index
    %c0_26 = arith.constant 0 : index
    %67 = vector.load %arg9[%c0_25, %c0_26] : memref<64x3xf32, #tpu.memory_space<vmem>>, vector<64x3xf32>
    tpu.vector_store %arg9[%c0_25, %c0_26], %66 {strides = array<i32>} : memref<64x3xf32, #tpu.memory_space<vmem>>, vector<64x3xf32>,
    return
  }
  func.func @transform_0(%arg0: i32) -> (i32, i32) {
    %c0_i32 = arith.constant 0 : i32
    %c0_i32_0 = arith.constant 0 : i32
    return %arg0, %c0_i32 : i32, i32
  }
  func.func @transform_1(%arg0: i32) -> (i32, i32) {
    %c0_i32 = arith.constant 0 : i32
    %c0_i32_0 = arith.constant 0 : i32
    %c0_i32_1 = arith.constant 0 : i32
    return %c0_i32, %c0_i32_0 : i32, i32
  }
  func.func @transform_2(%arg0: i32) -> (i32, i32) {
    %c0_i32 = arith.constant 0 : i32
    %c0_i32_0 = arith.constant 0 : i32
    %c0_i32_1 = arith.constant 0 : i32
    return %c0_i32, %c0_i32_0 : i32, i32
  }
  func.func @transform_3(%arg0: i32) -> (i32, i32) {
    %c0_i32 = arith.constant 0 : i32
    %c0_i32_0 = arith.constant 0 : i32
    %c0_i32_1 = arith.constant 0 : i32
    return %c0_i32, %c0_i32_0 : i32, i32
  }
  func.func @transform_4(%arg0: i32) -> (i32, i32) {
    %c0_i32 = arith.constant 0 : i32
    %c0_i32_0 = arith.constant 0 : i32
    %c0_i32_1 = arith.constant 0 : i32
    return %c0_i32, %c0_i32_0 : i32, i32
  }
  func.func @transform_5(%arg0: i32) -> (i32, i32) {
    %c0_i32 = arith.constant 0 : i32
    %c0_i32_0 = arith.constant 0 : i32
    %c0_i32_1 = arith.constant 0 : i32
    return %c0_i32, %c0_i32_0 : i32, i32
  }
  func.func @transform_6(%arg0: i32) -> (i32, i32) {
    %c0_i32 = arith.constant 0 : i32
    %c0_i32_0 = arith.constant 0 : i32
    %c0_i32_1 = arith.constant 0 : i32
    return %c0_i32, %c0_i32_0 : i32, i32
  }
  func.func @transform_7(%arg0: i32) -> (i32, i32) {
    %c0_i32 = arith.constant 0 : i32
    %c0_i32_0 = arith.constant 0 : i32
    %c0_i32_1 = arith.constant 0 : i32
    return %c0_i32, %c0_i32_0 : i32, i32
  }
  func.func @transform_8(%arg0: i32) -> (i32, i32) {
    %c0_i32 = arith.constant 0 : i32
    %c0_i32_0 = arith.constant 0 : i32
    return %arg0, %c0_i32 : i32, i32
  }
}

</mosaic_0001>

<llo_original>
// kernel: tpu_custom_call.1
$region0: #{tpu_custom_call.1}
  #allocation0 [shape = 'u32[]', space=smem, size = 0x4, offset = 0x4, fixed_abs, tag = 'smem constant byte address 0x4 - core index']
  #allocation1 [shape = 'u32[144,128]{1,0:T(1,128)}', space=vmem, size = 0x12000, scoped, tag = 'internal scratch']
  %s0 = inlined_call_operand.vmem [shape: f32[64,2], index: 0, kind: input, shape index: {}]
  %s1 = inlined_call_operand.vmem [shape: f32[2,128], index: 1, kind: input, shape index: {}]
  %s2 = inlined_call_operand.hbm [shape: f32[256,512], index: 2, kind: input, shape index: {}]
  %s3 = inlined_call_operand.vmem [shape: f32[1,512], index: 3, kind: input, shape index: {}]
  %s4 = inlined_call_operand.hbm [shape: f32[128,256], index: 4, kind: input, shape index: {}]
  %s5 = inlined_call_operand.vmem [shape: f32[1,256], index: 5, kind: input, shape index: {}]
  %s6 = inlined_call_operand.vmem [shape: f32[64,3], index: 6, kind: input, shape index: {}]
  %s7 = inlined_call_operand.vmem [shape: f32[1,3], index: 7, kind: input, shape index: {}]
  %s8 = inlined_call_operand.vmem [shape: f32[64,3], index: 8, kind: output, shape index: {}]
  %s9 = sld [smem:[#allocation0]]
  $region50: #{tpu_custom_call.1} parent=0
    _
  %s11 = ssub.s32 1, %s9
  %s12 = scalar_select 0, %s11, %s9
  $region1: #{tpu_custom_call.1} parent=0
    #allocation2 [shape = 'u8[524288]{0}', space=vmem, size = 0x80000, scoped, tag = 'input window, operand 2, single buffered']
    #allocation3 [shape = 's32[1]{0}', space=sflag, size = 0x4, scoped, tag = 'scoped memory for tpu_custom_call.1']
    #allocation4 [shape = 'u8[131072]{0}', space=vmem, size = 0x20000, scoped, tag = 'input window, operand 4, single buffered']
    #allocation5 [shape = 's32[1]{0}', space=sflag, size = 0x4, scoped, tag = 'scoped memory for tpu_custom_call.1']
    %13 = vsyncpa [#allocation3], 0
    %14 = vsyncpa [#allocation5], 0
    // Predicated region
    $region2: #{tpu_custom_call.1} parent=1 // pred_check
      _
    $region3: #{tpu_custom_call.1} parent=1 // pred_check_branch
      %16 = sbr.rel (0) target = $region5
    $region4: #{tpu_custom_call.1} parent=1 // pred_region
      _
    $region5: #{tpu_custom_call.1} parent=1 // pred_fallthru
      _
    // Predicated region
    $region6: #{tpu_custom_call.1} parent=1 // pred_check
      _
    $region7: #{tpu_custom_call.1} parent=1 // pred_check_branch
      %18 = sbr.rel (0) target = $region9
    $region8: #{tpu_custom_call.1} parent=1 // pred_region
      _
    $region9: #{tpu_custom_call.1} parent=1 // pred_fallthru
      _
    // Predicated region
    $region10: #{tpu_custom_call.1} parent=1 // pred_check
      _
    $region11: #{tpu_custom_call.1} parent=1 // pred_check_branch
      %20 = sbr.rel (0) target = $region13
    $region12: #{tpu_custom_call.1} parent=1 // pred_region
      %s22 = ssub.s32 16384, 16384
      %23 = vsyncadd [#allocation3], %s22
      %s24 = sshll.u32 [#allocation2], 4
      %s25 = int_to_ptr.vmem [resolvable:$true] %s24
      %30 = dma.hbm_to_vmem [thread:$0]  %s2, 16384, %s25, [#allocation3], 512, 512, 32
    $region13: #{tpu_custom_call.1} parent=1 // pred_fallthru
      _
    // Predicated region
    $region14: #{tpu_custom_call.1} parent=1 // pred_check
      _
    $region15: #{tpu_custom_call.1} parent=1 // pred_check_branch
      %32 = sbr.rel (0) target = $region17
    $region16: #{tpu_custom_call.1} parent=1 // pred_region
      _
    $region17: #{tpu_custom_call.1} parent=1 // pred_fallthru
      _
    // Predicated region
    $region18: #{tpu_custom_call.1} parent=1 // pred_check
      _
    $region19: #{tpu_custom_call.1} parent=1 // pred_check_branch
      %34 = sbr.rel (0) target = $region21
    $region20: #{tpu_custom_call.1} parent=1 // pred_region
      %s36 = ssub.s32 4096, 4096
      %37 = vsyncadd [#allocation5], %s36
      %s38 = sshll.u32 [#allocation4], 4
      %s39 = int_to_ptr.vmem [resolvable:$true] %s38
      %44 = dma.hbm_to_vmem [thread:$0]  %s4, 4096, %s39, [#allocation5], 256, 256, 16
    $region21: #{tpu_custom_call.1} parent=1 // pred_fallthru
      _
    // Predicated region
    $region22: #{tpu_custom_call.1} parent=1 // pred_check
      _
    $region23: #{tpu_custom_call.1} parent=1 // pred_check_branch
      %46 = sbr.rel (0) target = $region25
    $region24: #{tpu_custom_call.1} parent=1 // pred_region
      _
    $region25: #{tpu_custom_call.1} parent=1 // pred_fallthru
      _
    // Predicated region
    $region26: #{tpu_custom_call.1} parent=1 // pred_check
      _
    $region27: #{tpu_custom_call.1} parent=1 // pred_check_branch
      %48 = sbr.rel (0) target = $region29
    $region28: #{tpu_custom_call.1} parent=1 // pred_region
      _
    $region29: #{tpu_custom_call.1} parent=1 // pred_fallthru
      _
    // Predicated region
    $region30: #{tpu_custom_call.1} parent=1 // pred_check
      _
    $region31: #{tpu_custom_call.1} parent=1 // pred_check_branch
      %50 = sbr.rel (0) target = $region33
    $region32: #{tpu_custom_call.1} parent=1 // pred_region
      _
    $region33: #{tpu_custom_call.1} parent=1 // pred_fallthru
      _
    // Predicated region
    $region34: #{tpu_custom_call.1} parent=1 // pred_check
      _
    $region35: #{tpu_custom_call.1} parent=1 // pred_check_branch
      %52 = sbr.rel (0) target = $region37
    $region36: #{tpu_custom_call.1} parent=1 // pred_region
      %53 = dma.done [#allocation3], 16384
    $region37: #{tpu_custom_call.1} parent=1 // pred_fallthru
      _
    // Predicated region
    $region38: #{tpu_custom_call.1} parent=1 // pred_check
      _
    $region39: #{tpu_custom_call.1} parent=1 // pred_check_branch
      %55 = sbr.rel (0) target = $region41
    $region40: #{tpu_custom_call.1} parent=1 // pred_region
      %56 = dma.done [#allocation5], 4096
    $region41: #{tpu_custom_call.1} parent=1 // pred_fallthru
      _
    %v57 = vld [vmem:[%s0] sm:$0xff]
    %v58 = vld [vmem:[%s0 + $0x8] sm:$0xff]
    %v59 = vld [vmem:[%s0 + $0x10] sm:$0xff]
    %v60 = vld [vmem:[%s0 + $0x18] sm:$0xff]
    %v61 = vld [vmem:[%s0 + $0x20] sm:$0xff]
    %v62 = vld [vmem:[%s0 + $0x28] sm:$0xff]
    %v63 = vld [vmem:[%s0 + $0x30] sm:$0xff]
    %v64 = vld [vmem:[%s0 + $0x38] sm:$0xff]
    %v65 = vld [vmem:[%s1] sm:$0x3]
    %67 = vset.pattern.permute.xlu0 0
    %68 = vperm.xlu0 %67, %v57
    %v69 = vpop.permute.xlu0 %68
    %72 = vset.pattern.permute.xlu0 0
    %73 = vperm.xlu0 %72, %v58
    %v74 = vpop.permute.xlu0 %73
    %77 = vset.pattern.permute.xlu0 0
    %78 = vperm.xlu0 %77, %v59
    %v79 = vpop.permute.xlu0 %78
    %82 = vset.pattern.permute.xlu0 0
    %83 = vperm.xlu0 %82, %v60
    %v84 = vpop.permute.xlu0 %83
    %87 = vset.pattern.permute.xlu0 0
    %88 = vperm.xlu0 %87, %v61
    %v89 = vpop.permute.xlu0 %88
    %92 = vset.pattern.permute.xlu0 0
    %93 = vperm.xlu0 %92, %v62
    %v94 = vpop.permute.xlu0 %93
    %97 = vset.pattern.permute.xlu0 0
    %98 = vperm.xlu0 %97, %v63
    %v99 = vpop.permute.xlu0 %98
    %102 = vset.pattern.permute.xlu0 0
    %103 = vperm.xlu0 %102, %v64
    %v104 = vpop.permute.xlu0 %103
    %v106 = vlaneseq
    %v107 = vshrl.u32 %v106, 7
    %v108 = vsub.s32 0, %v107
    %v109 = vrot.slane %v65, %v108
    %v110 = vmul.f32 %v69, %v109
    %v111 = vmul.f32 %v74, %v109
    %v112 = vmul.f32 %v79, %v109
    %v113 = vmul.f32 %v84, %v109
    %v114 = vmul.f32 %v89, %v109
    %v115 = vmul.f32 %v94, %v109
    %v116 = vmul.f32 %v99, %v109
    %v117 = vmul.f32 %v104, %v109
    %118 = vset.pattern.permute.xlu0 1
    %119 = vperm.xlu0 %118, %v57
    %v120 = vpop.permute.xlu0 %119
    %122 = vset.pattern.permute.xlu0 1
    %123 = vperm.xlu0 %122, %v58
    %v124 = vpop.permute.xlu0 %123
    %126 = vset.pattern.permute.xlu0 1
    %127 = vperm.xlu0 %126, %v59
    %v128 = vpop.permute.xlu0 %127
    %130 = vset.pattern.permute.xlu0 1
    %131 = vperm.xlu0 %130, %v60
    %v132 = vpop.permute.xlu0 %131
    %134 = vset.pattern.permute.xlu0 1
    %135 = vperm.xlu0 %134, %v61
    %v136 = vpop.permute.xlu0 %135
    %138 = vset.pattern.permute.xlu0 1
    %139 = vperm.xlu0 %138, %v62
    %v140 = vpop.permute.xlu0 %139
    %142 = vset.pattern.permute.xlu0 1
    %143 = vperm.xlu0 %142, %v63
    %v144 = vpop.permute.xlu0 %143
    %146 = vset.pattern.permute.xlu0 1
    %147 = vperm.xlu0 %146, %v64
    %v148 = vpop.permute.xlu0 %147
    %v150 = vlaneseq
    %v151 = vshrl.u32 %v150, 7
    %v152 = vsub.s32 1, %v151
    %v153 = vrot.slane %v65, %v152
    %v154 = vmul.f32 %v120, %v153
    %v155 = vmul.f32 %v124, %v153
    %v156 = vmul.f32 %v128, %v153
    %v157 = vmul.f32 %v132, %v153
    %v158 = vmul.f32 %v136, %v153
    %v159 = vmul.f32 %v140, %v153
    %v160 = vmul.f32 %v144, %v153
    %v161 = vmul.f32 %v148, %v153
    %v162 = vadd.f32 %v110, %v154
    %v163 = vadd.f32 %v111, %v155
    %v164 = vadd.f32 %v112, %v156
    %v165 = vadd.f32 %v113, %v157
    %v166 = vadd.f32 %v114, %v158
    %v167 = vadd.f32 %v115, %v159
    %v168 = vadd.f32 %v116, %v160
    %v169 = vadd.f32 %v117, %v161
    %v170 = vand.u32 2147483647, %v162
    %vm171 = vcmp.le.f32.partialorder %v170, 0.7853982
    %vm172 = vcmp.lt.s32.totalorder %v162, 0
    %v173 = vand.u32 %v162, 2139095040
    %v174 = vshrl.u32 %v173, 23
    %v175 = vsub.s32 %v174, 127
    %v176 = vand.u32 2147483647, %v162
    %v177 = vand.u32 %v176, 8388607
    %v178 = vor.u32 %v177, 8388608
    %v179 = vsub.s32 0, %v178
    %v180 = vadd.s32 %v175, 1
    %vm181 = vcmp.gt.s32.totalorder %v180, 0
    %v182 = vsel %vm181, %v180, 0
    %v183 = vshrl.u32 %v182, 5
    %v184 = vand.u32 %v182, 31
    %v185 = vsub.s32 32, %v184
    %v186 = vshrl.u32 683565275, %v185
    %v187 = vshll.u32 683565275, %v184
    %v188 = vshrl.u32 2475754826, %v185
    %v189 = vor.u32 %v187, %v188
    %v190 = vshll.u32 2475754826, %v184
    %v191 = vshrl.u32 2131351028, %v185
    %v192 = vor.u32 %v190, %v191
    %v193 = vshll.u32 2131351028, %v184
    %v194 = vshrl.u32 2102212464, %v185
    %v195 = vor.u32 %v193, %v194
    %v196 = vshll.u32 2102212464, %v184
    %v197 = vshrl.u32 920167782, %v185
    %v198 = vor.u32 %v196, %v197
    %v199 = vshll.u32 920167782, %v184
    %v200 = vshrl.u32 1326507024, %v185
    %v201 = vor.u32 %v199, %v200
    %vm202 = vcmp.lt.s32.totalorder %v183, 1
    %vm203 = vcmp.lt.s32.totalorder %v183, 2
    %vm204 = vcmp.lt.s32.totalorder %v183, 3
    %vm205 = vcmp.lt.s32.totalorder %v183, 4
    %v206 = vsel %vm202, %v186, %v189
    %v207 = vsel %vm205, %v195, 2102212464
    %v208 = vsel %vm204, %v192, %v207
    %v209 = vsel %vm203, %v206, %v208
    %v210 = vsel %vm202, %v189, %v192
    %v211 = vsel %vm205, %v198, 920167782
    %v212 = vsel %vm204, %v195, %v211
    %v213 = vsel %vm203, %v210, %v212
    %v214 = vsel %vm202, %v192, %v195
    %v215 = vsel %vm205, %v201, 1326507024
    %v216 = vsel %vm204, %v198, %v215
    %v217 = vsel %vm203, %v214, %v216
    %v218 = vshll.u32 %v178, 8
    %v219 = vmul.u32.u64.compose %v218, %v217
    %v220 = vextract.low.u32 %v219
    %v221 = vextract.high.u32 %v219
    %v222 = vmul.u32.u64.compose %v218, %v213
    %v223 = vextract.low.u32 %v222
    %v224 = vextract.high.u32 %v222
    %v225 = vmul.u32 %v218, %v209
    %v226 = vadd.s32 %v221, %v223
    %vm227 = vc.u32 %v221, %v223
    %v228 = vadd.s32 %v224, 1
    %v229 = vsel %vm227, %v228, %v224
    %v230 = vadd.s32 %v225, %v229
    %v231 = vadd.s32 %v230, 536870912
    %v232 = vshrl.u32 %v231, 30
    %v233 = vshll.u32 %v232, 30
    %v234 = vsub.s32 %v230, %v233
    %vm235 = vcmp.lt.s32.totalorder %v234, 0
    %v236 = vsub.s32 0, %v234
    %v237 = vsel %vm235, %v236, %v234
    %v238 = vclz %v237
    %v239 = vsub.s32 %v238, 2
    %vm240 = vcmp.gt.s32.totalorder 0, %v239
    %v241 = vsel %vm240, 0, %v239
    %v242 = vsub.s32 32, %v241
    %v243 = vshll.u32 %v234, %v241
    %v244 = vshrl.u32 %v226, %v242
    %v245 = vor.u32 %v243, %v244
    %v246 = vsub.s32 4294967266, %v241
    %v247 = vadd.s32 %v246, 127
    %v248 = vshll.u32 %v247, 23
    %v249 = vor.u32 4788187, %v248
    %v250 = vand.u32 2147483647, %v249
    %v252 = vcvt.s32.f32 %v245
    %v253 = vmul.f32 %v252, %v250
    %v254 = vxor.u32 %v253, 2147483648
    %v255 = vsel %vm172, %v254, %v253
    %v256 = vsub.s32 4, %v232
    %v257 = vsel %vm172, %v256, %v232
    %v258 = vsel %vm171, %v162, %v255
    %v259 = vsel %vm171, 0, %v257
    %v260 = vcosq.f32.pop %v258
    %v261 = vsinq.f32.pop %v258
    %vm262 = vweird.f32 %v162
    %v263 = vand.u32 %v259, 3
    %vm264 = vcmp.lt.s32.totalorder %v263, 2
    %vm265 = vcmp.eq.s32.totalorder %v263, 0
    %v266 = vxor.u32 %v261, 2147483648
    %v267 = vsel %vm265, %v260, %v266
    %vm268 = vcmp.eq.s32.totalorder %v263, 2
    %v269 = vxor.u32 %v260, 2147483648
    %v270 = vsel %vm268, %v269, %v261
    %v271 = vsel %vm264, %v267, %v270
    %v272 = vsel %vm262, nan, %v271
    %v273 = vand.u32 2147483647, %v163
    %vm274 = vcmp.le.f32.partialorder %v273, 0.7853982
    %vm275 = vcmp.lt.s32.totalorder %v163, 0
    %v276 = vand.u32 %v163, 2139095040
    %v277 = vshrl.u32 %v276, 23
    %v278 = vsub.s32 %v277, 127
    %v279 = vand.u32 2147483647, %v163
    %v280 = vand.u32 %v279, 8388607
    %v281 = vor.u32 %v280, 8388608
    %v282 = vsub.s32 0, %v281
    %v283 = vadd.s32 %v278, 1
    %vm284 = vcmp.gt.s32.totalorder %v283, 0
    %v285 = vsel %vm284, %v283, 0
    %v286 = vshrl.u32 %v285, 5
    %v287 = vand.u32 %v285, 31
    %v288 = vsub.s32 32, %v287
    %v289 = vshrl.u32 683565275, %v288
    %v290 = vshll.u32 683565275, %v287
    %v291 = vshrl.u32 2475754826, %v288
    %v292 = vor.u32 %v290, %v291
    %v293 = vshll.u32 2475754826, %v287
    %v294 = vshrl.u32 2131351028, %v288
    %v295 = vor.u32 %v293, %v294
    %v296 = vshll.u32 2131351028, %v287
    %v297 = vshrl.u32 2102212464, %v288
    %v298 = vor.u32 %v296, %v297
    %v299 = vshll.u32 2102212464, %v287
    %v300 = vshrl.u32 920167782, %v288
    %v301 = vor.u32 %v299, %v300
    %v302 = vshll.u32 920167782, %v287
    %v303 = vshrl.u32 1326507024, %v288
    %v304 = vor.u32 %v302, %v303
    %vm305 = vcmp.lt.s32.totalorder %v286, 1
    %vm306 = vcmp.lt.s32.totalorder %v286, 2
    %vm307 = vcmp.lt.s32.totalorder %v286, 3
    %vm308 = vcmp.lt.s32.totalorder %v286, 4
    %v309 = vsel %vm305, %v289, %v292
    %v310 = vsel %vm308, %v298, 2102212464
    %v311 = vsel %vm307, %v295, %v310
    %v312 = vsel %vm306, %v309, %v311
    %v313 = vsel %vm305, %v292, %v295
    %v314 = vsel %vm308, %v301, 920167782
    %v315 = vsel %vm307, %v298, %v314
    %v316 = vsel %vm306, %v313, %v315
    %v317 = vsel %vm305, %v295, %v298
    %v318 = vsel %vm308, %v304, 1326507024
    %v319 = vsel %vm307, %v301, %v318
    %v320 = vsel %vm306, %v317, %v319
    %v321 = vshll.u32 %v281, 8
    %v322 = vmul.u32.u64.compose %v321, %v320
    %v323 = vextract.low.u32 %v322
    %v324 = vextract.high.u32 %v322
    %v325 = vmul.u32.u64.compose %v321, %v316
    %v326 = vextract.low.u32 %v325
    %v327 = vextract.high.u32 %v325
    %v328 = vmul.u32 %v321, %v312
    %v329 = vadd.s32 %v324, %v326
    %vm330 = vc.u32 %v324, %v326
    %v331 = vadd.s32 %v327, 1
    %v332 = vsel %vm330, %v331, %v327
    %v333 = vadd.s32 %v328, %v332
    %v334 = vadd.s32 %v333, 536870912
    %v335 = vshrl.u32 %v334, 30
    %v336 = vshll.u32 %v335, 30
    %v337 = vsub.s32 %v333, %v336
    %vm338 = vcmp.lt.s32.totalorder %v337, 0
    %v339 = vsub.s32 0, %v337
    %v340 = vsel %vm338, %v339, %v337
    %v341 = vclz %v340
    %v342 = vsub.s32 %v341, 2
    %vm343 = vcmp.gt.s32.totalorder 0, %v342
    %v344 = vsel %vm343, 0, %v342
    %v345 = vsub.s32 32, %v344
    %v346 = vshll.u32 %v337, %v344
    %v347 = vshrl.u32 %v329, %v345
    %v348 = vor.u32 %v346, %v347
    %v349 = vsub.s32 4294967266, %v344
    %v350 = vadd.s32 %v349, 127
    %v351 = vshll.u32 %v350, 23
    %v352 = vor.u32 4788187, %v351
    %v353 = vand.u32 2147483647, %v352
    %v355 = vcvt.s32.f32 %v348
    %v356 = vmul.f32 %v355, %v353
    %v357 = vxor.u32 %v356, 2147483648
    %v358 = vsel %vm275, %v357, %v356
    %v359 = vsub.s32 4, %v335
    %v360 = vsel %vm275, %v359, %v335
    %v361 = vsel %vm274, %v163, %v358
    %v362 = vsel %vm274, 0, %v360
    %v363 = vcosq.f32.pop %v361
    %v364 = vsinq.f32.pop %v361
    %vm365 = vweird.f32 %v163
    %v366 = vand.u32 %v362, 3
    %vm367 = vcmp.lt.s32.totalorder %v366, 2
    %vm368 = vcmp.eq.s32.totalorder %v366, 0
    %v369 = vxor.u32 %v364, 2147483648
    %v370 = vsel %vm368, %v363, %v369
    %vm371 = vcmp.eq.s32.totalorder %v366, 2
    %v372 = vxor.u32 %v363, 2147483648
    %v373 = vsel %vm371, %v372, %v364
    %v374 = vsel %vm367, %v370, %v373
    %v375 = vsel %vm365, nan, %v374
    %v376 = vand.u32 2147483647, %v164
    %vm377 = vcmp.le.f32.partialorder %v376, 0.7853982
    %vm378 = vcmp.lt.s32.totalorder %v164, 0
    %v379 = vand.u32 %v164, 2139095040
    %v380 = vshrl.u32 %v379, 23
    %v381 = vsub.s32 %v380, 127
    %v382 = vand.u32 2147483647, %v164
    %v383 = vand.u32 %v382, 8388607
    %v384 = vor.u32 %v383, 8388608
    %v385 = vsub.s32 0, %v384
    %v386 = vadd.s32 %v381, 1
    %vm387 = vcmp.gt.s32.totalorder %v386, 0
    %v388 = vsel %vm387, %v386, 0
    %v389 = vshrl.u32 %v388, 5
    %v390 = vand.u32 %v388, 31
    %v391 = vsub.s32 32, %v390
    %v392 = vshrl.u32 683565275, %v391
    %v393 = vshll.u32 683565275, %v390
    %v394 = vshrl.u32 2475754826, %v391
    %v395 = vor.u32 %v393, %v394
    %v396 = vshll.u32 2475754826, %v390
    %v397 = vshrl.u32 2131351028, %v391
    %v398 = vor.u32 %v396, %v397
    %v399 = vshll.u32 2131351028, %v390
    %v400 = vshrl.u32 2102212464, %v391
    %v401 = vor.u32 %v399, %v400
    %v402 = vshll.u32 2102212464, %v390
    %v403 = vshrl.u32 920167782, %v391
    %v404 = vor.u32 %v402, %v403
    %v405 = vshll.u32 920167782, %v390
    %v406 = vshrl.u32 1326507024, %v391
    %v407 = vor.u32 %v405, %v406
    %vm408 = vcmp.lt.s32.totalorder %v389, 1
    %vm409 = vcmp.lt.s32.totalorder %v389, 2
    %vm410 = vcmp.lt.s32.totalorder %v389, 3
    %vm411 = vcmp.lt.s32.totalorder %v389, 4
    %v412 = vsel %vm408, %v392, %v395
    %v413 = vsel %vm411, %v401, 2102212464
    %v414 = vsel %vm410, %v398, %v413
    %v415 = vsel %vm409, %v412, %v414
    %v416 = vsel %vm408, %v395, %v398
    %v417 = vsel %vm411, %v404, 920167782
    %v418 = vsel %vm410, %v401, %v417
    %v419 = vsel %vm409, %v416, %v418
    %v420 = vsel %vm408, %v398, %v401
    %v421 = vsel %vm411, %v407, 1326507024
    %v422 = vsel %vm410, %v404, %v421
    %v423 = vsel %vm409, %v420, %v422
    %v424 = vshll.u32 %v384, 8
    %v425 = vmul.u32.u64.compose %v424, %v423
    %v426 = vextract.low.u32 %v425
    %v427 = vextract.high.u32 %v425
    %v428 = vmul.u32.u64.compose %v424, %v419
    %v429 = vextract.low.u32 %v428
    %v430 = vextract.high.u32 %v428
    %v431 = vmul.u32 %v424, %v415
    %v432 = vadd.s32 %v427, %v429
    %vm433 = vc.u32 %v427, %v429
    %v434 = vadd.s32 %v430, 1
    %v435 = vsel %vm433, %v434, %v430
    %v436 = vadd.s32 %v431, %v435
    %v437 = vadd.s32 %v436, 536870912
    %v438 = vshrl.u32 %v437, 30
    %v439 = vshll.u32 %v438, 30
    %v440 = vsub.s32 %v436, %v439
    %vm441 = vcmp.lt.s32.totalorder %v440, 0
    %v442 = vsub.s32 0, %v440
    %v443 = vsel %vm441, %v442, %v440
    %v444 = vclz %v443
    %v445 = vsub.s32 %v444, 2
    %vm446 = vcmp.gt.s32.totalorder 0, %v445
    %v447 = vsel %vm446, 0, %v445
    %v448 = vsub.s32 32, %v447
    %v449 = vshll.u32 %v440, %v447
    %v450 = vshrl.u32 %v432, %v448
    %v451 = vor.u32 %v449, %v450
    %v452 = vsub.s32 4294967266, %v447
    %v453 = vadd.s32 %v452, 127
    %v454 = vshll.u32 %v453, 23
    %v455 = vor.u32 4788187, %v454
    %v456 = vand.u32 2147483647, %v455
    %v458 = vcvt.s32.f32 %v451
    %v459 = vmul.f32 %v458, %v456
    %v460 = vxor.u32 %v459, 2147483648
    %v461 = vsel %vm378, %v460, %v459
    %v462 = vsub.s32 4, %v438
    %v463 = vsel %vm378, %v462, %v438
    %v464 = vsel %vm377, %v164, %v461
    %v465 = vsel %vm377, 0, %v463
    %v466 = vcosq.f32.pop %v464
    %v467 = vsinq.f32.pop %v464
    %vm468 = vweird.f32 %v164
    %v469 = vand.u32 %v465, 3
    %vm470 = vcmp.lt.s32.totalorder %v469, 2
    %vm471 = vcmp.eq.s32.totalorder %v469, 0
    %v472 = vxor.u32 %v467, 2147483648
    %v473 = vsel %vm471, %v466, %v472
    %vm474 = vcmp.eq.s32.totalorder %v469, 2
    %v475 = vxor.u32 %v466, 2147483648
    %v476 = vsel %vm474, %v475, %v467
    %v477 = vsel %vm470, %v473, %v476
    %v478 = vsel %vm468, nan, %v477
    %v479 = vand.u32 2147483647, %v165
    %vm480 = vcmp.le.f32.partialorder %v479, 0.7853982
    %vm481 = vcmp.lt.s32.totalorder %v165, 0
    %v482 = vand.u32 %v165, 2139095040
    %v483 = vshrl.u32 %v482, 23
    %v484 = vsub.s32 %v483, 127
    %v485 = vand.u32 2147483647, %v165
    %v486 = vand.u32 %v485, 8388607
    %v487 = vor.u32 %v486, 8388608
    %v488 = vsub.s32 0, %v487
    %v489 = vadd.s32 %v484, 1
    %vm490 = vcmp.gt.s32.totalorder %v489, 0
    %v491 = vsel %vm490, %v489, 0
    %v492 = vshrl.u32 %v491, 5
    %v493 = vand.u32 %v491, 31
    %v494 = vsub.s32 32, %v493
    %v495 = vshrl.u32 683565275, %v494
    %v496 = vshll.u32 683565275, %v493
    %v497 = vshrl.u32 2475754826, %v494
    %v498 = vor.u32 %v496, %v497
    %v499 = vshll.u32 2475754826, %v493
    %v500 = vshrl.u32 2131351028, %v494
    %v501 = vor.u32 %v499, %v500
    %v502 = vshll.u32 2131351028, %v493
    %v503 = vshrl.u32 2102212464, %v494
    %v504 = vor.u32 %v502, %v503
    %v505 = vshll.u32 2102212464, %v493
    %v506 = vshrl.u32 920167782, %v494
    %v507 = vor.u32 %v505, %v506
    %v508 = vshll.u32 920167782, %v493
    %v509 = vshrl.u32 1326507024, %v494
    %v510 = vor.u32 %v508, %v509
    %vm511 = vcmp.lt.s32.totalorder %v492, 1
    %vm512 = vcmp.lt.s32.totalorder %v492, 2
    %vm513 = vcmp.lt.s32.totalorder %v492, 3
    %vm514 = vcmp.lt.s32.totalorder %v492, 4
    %v515 = vsel %vm511, %v495, %v498
    %v516 = vsel %vm514, %v504, 2102212464
    %v517 = vsel %vm513, %v501, %v516
    %v518 = vsel %vm512, %v515, %v517
    %v519 = vsel %vm511, %v498, %v501
    %v520 = vsel %vm514, %v507, 920167782
    %v521 = vsel %vm513, %v504, %v520
    %v522 = vsel %vm512, %v519, %v521
    %v523 = vsel %vm511, %v501, %v504
    %v524 = vsel %vm514, %v510, 1326507024
    %v525 = vsel %vm513, %v507, %v524
    %v526 = vsel %vm512, %v523, %v525
    %v527 = vshll.u32 %v487, 8
    %v528 = vmul.u32.u64.compose %v527, %v526
    %v529 = vextract.low.u32 %v528
    %v530 = vextract.high.u32 %v528
    %v531 = vmul.u32.u64.compose %v527, %v522
    %v532 = vextract.low.u32 %v531
    %v533 = vextract.high.u32 %v531
    %v534 = vmul.u32 %v527, %v518
    %v535 = vadd.s32 %v530, %v532
    %vm536 = vc.u32 %v530, %v532
    %v537 = vadd.s32 %v533, 1
    %v538 = vsel %vm536, %v537, %v533
    %v539 = vadd.s32 %v534, %v538
    %v540 = vadd.s32 %v539, 536870912
    %v541 = vshrl.u32 %v540, 30
    %v542 = vshll.u32 %v541, 30
    %v543 = vsub.s32 %v539, %v542
    %vm544 = vcmp.lt.s32.totalorder %v543, 0
    %v545 = vsub.s32 0, %v543
    %v546 = vsel %vm544, %v545, %v543
    %v547 = vclz %v546
    %v548 = vsub.s32 %v547, 2
    %vm549 = vcmp.gt.s32.totalorder 0, %v548
    %v550 = vsel %vm549, 0, %v548
    %v551 = vsub.s32 32, %v550
    %v552 = vshll.u32 %v543, %v550
    %v553 = vshrl.u32 %v535, %v551
    %v554 = vor.u32 %v552, %v553
    %v555 = vsub.s32 4294967266, %v550
    %v556 = vadd.s32 %v555, 127
    %v557 = vshll.u32 %v556, 23
    %v558 = vor.u32 4788187, %v557
    %v559 = vand.u32 2147483647, %v558
    %v561 = vcvt.s32.f32 %v554
    %v562 = vmul.f32 %v561, %v559
    %v563 = vxor.u32 %v562, 2147483648
    %v564 = vsel %vm481, %v563, %v562
    %v565 = vsub.s32 4, %v541
    %v566 = vsel %vm481, %v565, %v541
    %v567 = vsel %vm480, %v165, %v564
    %v568 = vsel %vm480, 0, %v566
    %v569 = vcosq.f32.pop %v567
    %v570 = vsinq.f32.pop %v567
    %vm571 = vweird.f32 %v165
    %v572 = vand.u32 %v568, 3
    %vm573 = vcmp.lt.s32.totalorder %v572, 2
    %vm574 = vcmp.eq.s32.totalorder %v572, 0
    %v575 = vxor.u32 %v570, 2147483648
    %v576 = vsel %vm574, %v569, %v575
    %vm577 = vcmp.eq.s32.totalorder %v572, 2
    %v578 = vxor.u32 %v569, 2147483648
    %v579 = vsel %vm577, %v578, %v570
    %v580 = vsel %vm573, %v576, %v579
    %v581 = vsel %vm571, nan, %v580
    %v582 = vand.u32 2147483647, %v166
    %vm583 = vcmp.le.f32.partialorder %v582, 0.7853982
    %vm584 = vcmp.lt.s32.totalorder %v166, 0
    %v585 = vand.u32 %v166, 2139095040
    %v586 = vshrl.u32 %v585, 23
    %v587 = vsub.s32 %v586, 127
    %v588 = vand.u32 2147483647, %v166
    %v589 = vand.u32 %v588, 8388607
    %v590 = vor.u32 %v589, 8388608
    %v591 = vsub.s32 0, %v590
    %v592 = vadd.s32 %v587, 1
    %vm593 = vcmp.gt.s32.totalorder %v592, 0
    %v594 = vsel %vm593, %v592, 0
    %v595 = vshrl.u32 %v594, 5
    %v596 = vand.u32 %v594, 31
    %v597 = vsub.s32 32, %v596
    %v598 = vshrl.u32 683565275, %v597
    %v599 = vshll.u32 683565275, %v596
    %v600 = vshrl.u32 2475754826, %v597
    %v601 = vor.u32 %v599, %v600
    %v602 = vshll.u32 2475754826, %v596
    %v603 = vshrl.u32 2131351028, %v597
    %v604 = vor.u32 %v602, %v603
    %v605 = vshll.u32 2131351028, %v596
    %v606 = vshrl.u32 2102212464, %v597
    %v607 = vor.u32 %v605, %v606
    %v608 = vshll.u32 2102212464, %v596
    %v609 = vshrl.u32 920167782, %v597
    %v610 = vor.u32 %v608, %v609
    %v611 = vshll.u32 920167782, %v596
    %v612 = vshrl.u32 1326507024, %v597
    %v613 = vor.u32 %v611, %v612
    %vm614 = vcmp.lt.s32.totalorder %v595, 1
    %vm615 = vcmp.lt.s32.totalorder %v595, 2
    %vm616 = vcmp.lt.s32.totalorder %v595, 3
    %vm617 = vcmp.lt.s32.totalorder %v595, 4
    %v618 = vsel %vm614, %v598, %v601
    %v619 = vsel %vm617, %v607, 2102212464
    %v620 = vsel %vm616, %v604, %v619
    %v621 = vsel %vm615, %v618, %v620
    %v622 = vsel %vm614, %v601, %v604
    %v623 = vsel %vm617, %v610, 920167782
    %v624 = vsel %vm616, %v607, %v623
    %v625 = vsel %vm615, %v622, %v624
    %v626 = vsel %vm614, %v604, %v607
    %v627 = vsel %vm617, %v613, 1326507024
    %v628 = vsel %vm616, %v610, %v627
    %v629 = vsel %vm615, %v626, %v628
    %v630 = vshll.u32 %v590, 8
    %v631 = vmul.u32.u64.compose %v630, %v629
    %v632 = vextract.low.u32 %v631
    %v633 = vextract.high.u32 %v631
    %v634 = vmul.u32.u64.compose %v630, %v625
    %v635 = vextract.low.u32 %v634
    %v636 = vextract.high.u32 %v634
    %v637 = vmul.u32 %v630, %v621
    %v638 = vadd.s32 %v633, %v635
    %vm639 = vc.u32 %v633, %v635
    %v640 = vadd.s32 %v636, 1
    %v641 = vsel %vm639, %v640, %v636
    %v642 = vadd.s32 %v637, %v641
    %v643 = vadd.s32 %v642, 536870912
    %v644 = vshrl.u32 %v643, 30
    %v645 = vshll.u32 %v644, 30
    %v646 = vsub.s32 %v642, %v645
    %vm647 = vcmp.lt.s32.totalorder %v646, 0
    %v648 = vsub.s32 0, %v646
    %v649 = vsel %vm647, %v648, %v646
    %v650 = vclz %v649
    %v651 = vsub.s32 %v650, 2
    %vm652 = vcmp.gt.s32.totalorder 0, %v651
    %v653 = vsel %vm652, 0, %v651
    %v654 = vsub.s32 32, %v653
    %v655 = vshll.u32 %v646, %v653
    %v656 = vshrl.u32 %v638, %v654
    %v657 = vor.u32 %v655, %v656
    %v658 = vsub.s32 4294967266, %v653
    %v659 = vadd.s32 %v658, 127
    %v660 = vshll.u32 %v659, 23
    %v661 = vor.u32 4788187, %v660
    %v662 = vand.u32 2147483647, %v661
    %v664 = vcvt.s32.f32 %v657
    %v665 = vmul.f32 %v664, %v662
    %v666 = vxor.u32 %v665, 2147483648
    %v667 = vsel %vm584, %v666, %v665
    %v668 = vsub.s32 4, %v644
    %v669 = vsel %vm584, %v668, %v644
    %v670 = vsel %vm583, %v166, %v667
    %v671 = vsel %vm583, 0, %v669
    %v672 = vcosq.f32.pop %v670
    %v673 = vsinq.f32.pop %v670
    %vm674 = vweird.f32 %v166
    %v675 = vand.u32 %v671, 3
    %vm676 = vcmp.lt.s32.totalorder %v675, 2
    %vm677 = vcmp.eq.s32.totalorder %v675, 0
    %v678 = vxor.u32 %v673, 2147483648
    %v679 = vsel %vm677, %v672, %v678
    %vm680 = vcmp.eq.s32.totalorder %v675, 2
    %v681 = vxor.u32 %v672, 2147483648
    %v682 = vsel %vm680, %v681, %v673
    %v683 = vsel %vm676, %v679, %v682
    %v684 = vsel %vm674, nan, %v683
    %v685 = vand.u32 2147483647, %v167
    %vm686 = vcmp.le.f32.partialorder %v685, 0.7853982
    %vm687 = vcmp.lt.s32.totalorder %v167, 0
    %v688 = vand.u32 %v167, 2139095040
    %v689 = vshrl.u32 %v688, 23
    %v690 = vsub.s32 %v689, 127
    %v691 = vand.u32 2147483647, %v167
    %v692 = vand.u32 %v691, 8388607
    %v693 = vor.u32 %v692, 8388608
    %v694 = vsub.s32 0, %v693
    %v695 = vadd.s32 %v690, 1
    %vm696 = vcmp.gt.s32.totalorder %v695, 0
    %v697 = vsel %vm696, %v695, 0
    %v698 = vshrl.u32 %v697, 5
    %v699 = vand.u32 %v697, 31
    %v700 = vsub.s32 32, %v699
    %v701 = vshrl.u32 683565275, %v700
    %v702 = vshll.u32 683565275, %v699
    %v703 = vshrl.u32 2475754826, %v700
    %v704 = vor.u32 %v702, %v703
    %v705 = vshll.u32 2475754826, %v699
    %v706 = vshrl.u32 2131351028, %v700
    %v707 = vor.u32 %v705, %v706
    %v708 = vshll.u32 2131351028, %v699
    %v709 = vshrl.u32 2102212464, %v700
    %v710 = vor.u32 %v708, %v709
    %v711 = vshll.u32 2102212464, %v699
    %v712 = vshrl.u32 920167782, %v700
    %v713 = vor.u32 %v711, %v712
    %v714 = vshll.u32 920167782, %v699
    %v715 = vshrl.u32 1326507024, %v700
    %v716 = vor.u32 %v714, %v715
    %vm717 = vcmp.lt.s32.totalorder %v698, 1
    %vm718 = vcmp.lt.s32.totalorder %v698, 2
    %vm719 = vcmp.lt.s32.totalorder %v698, 3
    %vm720 = vcmp.lt.s32.totalorder %v698, 4
    %v721 = vsel %vm717, %v701, %v704
    %v722 = vsel %vm720, %v710, 2102212464
    %v723 = vsel %vm719, %v707, %v722
    %v724 = vsel %vm718, %v721, %v723
    %v725 = vsel %vm717, %v704, %v707
    %v726 = vsel %vm720, %v713, 920167782
    %v727 = vsel %vm719, %v710, %v726
    %v728 = vsel %vm718, %v725, %v727
    %v729 = vsel %vm717, %v707, %v710
    %v730 = vsel %vm720, %v716, 1326507024
    %v731 = vsel %vm719, %v713, %v730
    %v732 = vsel %vm718, %v729, %v731
    %v733 = vshll.u32 %v693, 8
    %v734 = vmul.u32.u64.compose %v733, %v732
    %v735 = vextract.low.u32 %v734
    %v736 = vextract.high.u32 %v734
    %v737 = vmul.u32.u64.compose %v733, %v728
    %v738 = vextract.low.u32 %v737
    %v739 = vextract.high.u32 %v737
    %v740 = vmul.u32 %v733, %v724
    %v741 = vadd.s32 %v736, %v738
    %vm742 = vc.u32 %v736, %v738
    %v743 = vadd.s32 %v739, 1
    %v744 = vsel %vm742, %v743, %v739
    %v745 = vadd.s32 %v740, %v744
    %v746 = vadd.s32 %v745, 536870912
    %v747 = vshrl.u32 %v746, 30
    %v748 = vshll.u32 %v747, 30
    %v749 = vsub.s32 %v745, %v748
    %vm750 = vcmp.lt.s32.totalorder %v749, 0
    %v751 = vsub.s32 0, %v749
    %v752 = vsel %vm750, %v751, %v749
    %v753 = vclz %v752
    %v754 = vsub.s32 %v753, 2
    %vm755 = vcmp.gt.s32.totalorder 0, %v754
    %v756 = vsel %vm755, 0, %v754
    %v757 = vsub.s32 32, %v756
    %v758 = vshll.u32 %v749, %v756
    %v759 = vshrl.u32 %v741, %v757
    %v760 = vor.u32 %v758, %v759
    %v761 = vsub.s32 4294967266, %v756
    %v762 = vadd.s32 %v761, 127
    %v763 = vshll.u32 %v762, 23
    %v764 = vor.u32 4788187, %v763
    %v765 = vand.u32 2147483647, %v764
    %v767 = vcvt.s32.f32 %v760
    %v768 = vmul.f32 %v767, %v765
    %v769 = vxor.u32 %v768, 2147483648
    %v770 = vsel %vm687, %v769, %v768
    %v771 = vsub.s32 4, %v747
    %v772 = vsel %vm687, %v771, %v747
    %v773 = vsel %vm686, %v167, %v770
    %v774 = vsel %vm686, 0, %v772
    %v775 = vcosq.f32.pop %v773
    %v776 = vsinq.f32.pop %v773
    %vm777 = vweird.f32 %v167
    %v778 = vand.u32 %v774, 3
    %vm779 = vcmp.lt.s32.totalorder %v778, 2
    %vm780 = vcmp.eq.s32.totalorder %v778, 0
    %v781 = vxor.u32 %v776, 2147483648
    %v782 = vsel %vm780, %v775, %v781
    %vm783 = vcmp.eq.s32.totalorder %v778, 2
    %v784 = vxor.u32 %v775, 2147483648
    %v785 = vsel %vm783, %v784, %v776
    %v786 = vsel %vm779, %v782, %v785
    %v787 = vsel %vm777, nan, %v786
    %v788 = vand.u32 2147483647, %v168
    %vm789 = vcmp.le.f32.partialorder %v788, 0.7853982
    %vm790 = vcmp.lt.s32.totalorder %v168, 0
    %v791 = vand.u32 %v168, 2139095040
    %v792 = vshrl.u32 %v791, 23
    %v793 = vsub.s32 %v792, 127
    %v794 = vand.u32 2147483647, %v168
    %v795 = vand.u32 %v794, 8388607
    %v796 = vor.u32 %v795, 8388608
    %v797 = vsub.s32 0, %v796
    %v798 = vadd.s32 %v793, 1
    %vm799 = vcmp.gt.s32.totalorder %v798, 0
    %v800 = vsel %vm799, %v798, 0
    %v801 = vshrl.u32 %v800, 5
    %v802 = vand.u32 %v800, 31
    %v803 = vsub.s32 32, %v802
    %v804 = vshrl.u32 683565275, %v803
    %v805 = vshll.u32 683565275, %v802
    %v806 = vshrl.u32 2475754826, %v803
    %v807 = vor.u32 %v805, %v806
    %v808 = vshll.u32 2475754826, %v802
    %v809 = vshrl.u32 2131351028, %v803
    %v810 = vor.u32 %v808, %v809
    %v811 = vshll.u32 2131351028, %v802
    %v812 = vshrl.u32 2102212464, %v803
    %v813 = vor.u32 %v811, %v812
    %v814 = vshll.u32 2102212464, %v802
    %v815 = vshrl.u32 920167782, %v803
    %v816 = vor.u32 %v814, %v815
    %v817 = vshll.u32 920167782, %v802
    %v818 = vshrl.u32 1326507024, %v803
    %v819 = vor.u32 %v817, %v818
    %vm820 = vcmp.lt.s32.totalorder %v801, 1
    %vm821 = vcmp.lt.s32.totalorder %v801, 2
    %vm822 = vcmp.lt.s32.totalorder %v801, 3
    %vm823 = vcmp.lt.s32.totalorder %v801, 4
    %v824 = vsel %vm820, %v804, %v807
    %v825 = vsel %vm823, %v813, 2102212464
    %v826 = vsel %vm822, %v810, %v825
    %v827 = vsel %vm821, %v824, %v826
    %v828 = vsel %vm820, %v807, %v810
    %v829 = vsel %vm823, %v816, 920167782
    %v830 = vsel %vm822, %v813, %v829
    %v831 = vsel %vm821, %v828, %v830
    %v832 = vsel %vm820, %v810, %v813
    %v833 = vsel %vm823, %v819, 1326507024
    %v834 = vsel %vm822, %v816, %v833
    %v835 = vsel %vm821, %v832, %v834
    %v836 = vshll.u32 %v796, 8
    %v837 = vmul.u32.u64.compose %v836, %v835
    %v838 = vextract.low.u32 %v837
    %v839 = vextract.high.u32 %v837
    %v840 = vmul.u32.u64.compose %v836, %v831
    %v841 = vextract.low.u32 %v840
    %v842 = vextract.high.u32 %v840
    %v843 = vmul.u32 %v836, %v827
    %v844 = vadd.s32 %v839, %v841
    %vm845 = vc.u32 %v839, %v841
    %v846 = vadd.s32 %v842, 1
    %v847 = vsel %vm845, %v846, %v842
    %v848 = vadd.s32 %v843, %v847
    %v849 = vadd.s32 %v848, 536870912
    %v850 = vshrl.u32 %v849, 30
    %v851 = vshll.u32 %v850, 30
    %v852 = vsub.s32 %v848, %v851
    %vm853 = vcmp.lt.s32.totalorder %v852, 0
    %v854 = vsub.s32 0, %v852
    %v855 = vsel %vm853, %v854, %v852
    %v856 = vclz %v855
    %v857 = vsub.s32 %v856, 2
    %vm858 = vcmp.gt.s32.totalorder 0, %v857
    %v859 = vsel %vm858, 0, %v857
    %v860 = vsub.s32 32, %v859
    %v861 = vshll.u32 %v852, %v859
    %v862 = vshrl.u32 %v844, %v860
    %v863 = vor.u32 %v861, %v862
    %v864 = vsub.s32 4294967266, %v859
    %v865 = vadd.s32 %v864, 127
    %v866 = vshll.u32 %v865, 23
    %v867 = vor.u32 4788187, %v866
    %v868 = vand.u32 2147483647, %v867
    %v870 = vcvt.s32.f32 %v863
    %v871 = vmul.f32 %v870, %v868
    %v872 = vxor.u32 %v871, 2147483648
    %v873 = vsel %vm790, %v872, %v871
    %v874 = vsub.s32 4, %v850
    %v875 = vsel %vm790, %v874, %v850
    %v876 = vsel %vm789, %v168, %v873
    %v877 = vsel %vm789, 0, %v875
    %v878 = vcosq.f32.pop %v876
    %v879 = vsinq.f32.pop %v876
    %vm880 = vweird.f32 %v168
    %v881 = vand.u32 %v877, 3
    %vm882 = vcmp.lt.s32.totalorder %v881, 2
    %vm883 = vcmp.eq.s32.totalorder %v881, 0
    %v884 = vxor.u32 %v879, 2147483648
    %v885 = vsel %vm883, %v878, %v884
    %vm886 = vcmp.eq.s32.totalorder %v881, 2
    %v887 = vxor.u32 %v878, 2147483648
    %v888 = vsel %vm886, %v887, %v879
    %v889 = vsel %vm882, %v885, %v888
    %v890 = vsel %vm880, nan, %v889
    %v891 = vand.u32 2147483647, %v169
    %vm892 = vcmp.le.f32.partialorder %v891, 0.7853982
    %vm893 = vcmp.lt.s32.totalorder %v169, 0
    %v894 = vand.u32 %v169, 2139095040
    %v895 = vshrl.u32 %v894, 23
    %v896 = vsub.s32 %v895, 127
    %v897 = vand.u32 2147483647, %v169
    %v898 = vand.u32 %v897, 8388607
    %v899 = vor.u32 %v898, 8388608
    %v900 = vsub.s32 0, %v899
    %v901 = vadd.s32 %v896, 1
    %vm902 = vcmp.gt.s32.totalorder %v901, 0
    %v903 = vsel %vm902, %v901, 0
    %v904 = vshrl.u32 %v903, 5
    %v905 = vand.u32 %v903, 31
    %v906 = vsub.s32 32, %v905
    %v907 = vshrl.u32 683565275, %v906
    %v908 = vshll.u32 683565275, %v905
    %v909 = vshrl.u32 2475754826, %v906
    %v910 = vor.u32 %v908, %v909
    %v911 = vshll.u32 2475754826, %v905
    %v912 = vshrl.u32 2131351028, %v906
    %v913 = vor.u32 %v911, %v912
    %v914 = vshll.u32 2131351028, %v905
    %v915 = vshrl.u32 2102212464, %v906
    %v916 = vor.u32 %v914, %v915
    %v917 = vshll.u32 2102212464, %v905
    %v918 = vshrl.u32 920167782, %v906
    %v919 = vor.u32 %v917, %v918
    %v920 = vshll.u32 920167782, %v905
    %v921 = vshrl.u32 1326507024, %v906
    %v922 = vor.u32 %v920, %v921
    %vm923 = vcmp.lt.s32.totalorder %v904, 1
    %vm924 = vcmp.lt.s32.totalorder %v904, 2
    %vm925 = vcmp.lt.s32.totalorder %v904, 3
    %vm926 = vcmp.lt.s32.totalorder %v904, 4
    %v927 = vsel %vm923, %v907, %v910
    %v928 = vsel %vm926, %v916, 2102212464
    %v929 = vsel %vm925, %v913, %v928
    %v930 = vsel %vm924, %v927, %v929
    %v931 = vsel %vm923, %v910, %v913
    %v932 = vsel %vm926, %v919, 920167782
    %v933 = vsel %vm925, %v916, %v932
    %v934 = vsel %vm924, %v931, %v933
    %v935 = vsel %vm923, %v913, %v916
    %v936 = vsel %vm926, %v922, 1326507024
    %v937 = vsel %vm925, %v919, %v936
    %v938 = vsel %vm924, %v935, %v937
    %v939 = vshll.u32 %v899, 8
    %v940 = vmul.u32.u64.compose %v939, %v938
    %v941 = vextract.low.u32 %v940
    %v942 = vextract.high.u32 %v940
    %v943 = vmul.u32.u64.compose %v939, %v934
    %v944 = vextract.low.u32 %v943
    %v945 = vextract.high.u32 %v943
    %v946 = vmul.u32 %v939, %v930
    %v947 = vadd.s32 %v942, %v944
    %vm948 = vc.u32 %v942, %v944
    %v949 = vadd.s32 %v945, 1
    %v950 = vsel %vm948, %v949, %v945
    %v951 = vadd.s32 %v946, %v950
    %v952 = vadd.s32 %v951, 536870912
    %v953 = vshrl.u32 %v952, 30
    %v954 = vshll.u32 %v953, 30
    %v955 = vsub.s32 %v951, %v954
    %vm956 = vcmp.lt.s32.totalorder %v955, 0
    %v957 = vsub.s32 0, %v955
    %v958 = vsel %vm956, %v957, %v955
    %v959 = vclz %v958
    %v960 = vsub.s32 %v959, 2
    %vm961 = vcmp.gt.s32.totalorder 0, %v960
    %v962 = vsel %vm961, 0, %v960
    %v963 = vsub.s32 32, %v962
    %v964 = vshll.u32 %v955, %v962
    %v965 = vshrl.u32 %v947, %v963
    %v966 = vor.u32 %v964, %v965
    %v967 = vsub.s32 4294967266, %v962
    %v968 = vadd.s32 %v967, 127
    %v969 = vshll.u32 %v968, 23
    %v970 = vor.u32 4788187, %v969
    %v971 = vand.u32 2147483647, %v970
    %v973 = vcvt.s32.f32 %v966
    %v974 = vmul.f32 %v973, %v971
    %v975 = vxor.u32 %v974, 2147483648
    %v976 = vsel %vm893, %v975, %v974
    %v977 = vsub.s32 4, %v953
    %v978 = vsel %vm893, %v977, %v953
    %v979 = vsel %vm892, %v169, %v976
    %v980 = vsel %vm892, 0, %v978
    %v981 = vcosq.f32.pop %v979
    %v982 = vsinq.f32.pop %v979
    %vm983 = vweird.f32 %v169
    %v984 = vand.u32 %v980, 3
    %vm985 = vcmp.lt.s32.totalorder %v984, 2
    %vm986 = vcmp.eq.s32.totalorder %v984, 0
    %v987 = vxor.u32 %v982, 2147483648
    %v988 = vsel %vm986, %v981, %v987
    %vm989 = vcmp.eq.s32.totalorder %v984, 2
    %v990 = vxor.u32 %v981, 2147483648
    %v991 = vsel %vm989, %v990, %v982
    %v992 = vsel %vm985, %v988, %v991
    %v993 = vsel %vm983, nan, %v992
    %v994 = vand.u32 2147483647, %v162
    %vm995 = vcmp.le.f32.partialorder %v994, 0.7853982
    %vm996 = vcmp.lt.s32.totalorder %v162, 0
    %v997 = vand.u32 %v162, 2139095040
    %v998 = vshrl.u32 %v997, 23
    %v999 = vsub.s32 %v998, 127
    %v1000 = vand.u32 2147483647, %v162
    %v1001 = vand.u32 %v1000, 8388607
    %v1002 = vor.u32 %v1001, 8388608
    %v1003 = vsub.s32 0, %v1002
    %v1004 = vadd.s32 %v999, 1
    %vm1005 = vcmp.gt.s32.totalorder %v1004, 0
    %v1006 = vsel %vm1005, %v1004, 0
    %v1007 = vshrl.u32 %v1006, 5
    %v1008 = vand.u32 %v1006, 31
    %v1009 = vsub.s32 32, %v1008
    %v1010 = vshrl.u32 683565275, %v1009
    %v1011 = vshll.u32 683565275, %v1008
    %v1012 = vshrl.u32 2475754826, %v1009
    %v1013 = vor.u32 %v1011, %v1012
    %v1014 = vshll.u32 2475754826, %v1008
    %v1015 = vshrl.u32 2131351028, %v1009
    %v1016 = vor.u32 %v1014, %v1015
    %v1017 = vshll.u32 2131351028, %v1008
    %v1018 = vshrl.u32 2102212464, %v1009
    %v1019 = vor.u32 %v1017, %v1018
    %v1020 = vshll.u32 2102212464, %v1008
    %v1021 = vshrl.u32 920167782, %v1009
    %v1022 = vor.u32 %v1020, %v1021
    %v1023 = vshll.u32 920167782, %v1008
    %v1024 = vshrl.u32 1326507024, %v1009
    %v1025 = vor.u32 %v1023, %v1024
    %vm1026 = vcmp.lt.s32.totalorder %v1007, 1
    %vm1027 = vcmp.lt.s32.totalorder %v1007, 2
    %vm1028 = vcmp.lt.s32.totalorder %v1007, 3
    %vm1029 = vcmp.lt.s32.totalorder %v1007, 4
    %v1030 = vsel %vm1026, %v1010, %v1013
    %v1031 = vsel %vm1029, %v1019, 2102212464
    %v1032 = vsel %vm1028, %v1016, %v1031
    %v1033 = vsel %vm1027, %v1030, %v1032
    %v1034 = vsel %vm1026, %v1013, %v1016
    %v1035 = vsel %vm1029, %v1022, 920167782
    %v1036 = vsel %vm1028, %v1019, %v1035
    %v1037 = vsel %vm1027, %v1034, %v1036
    %v1038 = vsel %vm1026, %v1016, %v1019
    %v1039 = vsel %vm1029, %v1025, 1326507024
    %v1040 = vsel %vm1028, %v1022, %v1039
    %v1041 = vsel %vm1027, %v1038, %v1040
    %v1042 = vshll.u32 %v1002, 8
    %v1043 = vmul.u32.u64.compose %v1042, %v1041
    %v1044 = vextract.low.u32 %v1043
    %v1045 = vextract.high.u32 %v1043
    %v1046 = vmul.u32.u64.compose %v1042, %v1037
    %v1047 = vextract.low.u32 %v1046
    %v1048 = vextract.high.u32 %v1046
    %v1049 = vmul.u32 %v1042, %v1033
    %v1050 = vadd.s32 %v1045, %v1047
    %vm1051 = vc.u32 %v1045, %v1047
    %v1052 = vadd.s32 %v1048, 1
    %v1053 = vsel %vm1051, %v1052, %v1048
    %v1054 = vadd.s32 %v1049, %v1053
    %v1055 = vadd.s32 %v1054, 536870912
    %v1056 = vshrl.u32 %v1055, 30
    %v1057 = vshll.u32 %v1056, 30
    %v1058 = vsub.s32 %v1054, %v1057
    %vm1059 = vcmp.lt.s32.totalorder %v1058, 0
    %v1060 = vsub.s32 0, %v1058
    %v1061 = vsel %vm1059, %v1060, %v1058
    %v1062 = vclz %v1061
    %v1063 = vsub.s32 %v1062, 2
    %vm1064 = vcmp.gt.s32.totalorder 0, %v1063
    %v1065 = vsel %vm1064, 0, %v1063
    %v1066 = vsub.s32 32, %v1065
    %v1067 = vshll.u32 %v1058, %v1065
    %v1068 = vshrl.u32 %v1050, %v1066
    %v1069 = vor.u32 %v1067, %v1068
    %v1070 = vsub.s32 4294967266, %v1065
    %v1071 = vadd.s32 %v1070, 127
    %v1072 = vshll.u32 %v1071, 23
    %v1073 = vor.u32 4788187, %v1072
    %v1074 = vand.u32 2147483647, %v1073
    %v1076 = vcvt.s32.f32 %v1069
    %v1077 = vmul.f32 %v1076, %v1074
    %v1078 = vxor.u32 %v1077, 2147483648
    %v1079 = vsel %vm996, %v1078, %v1077
    %v1080 = vsub.s32 4, %v1056
    %v1081 = vsel %vm996, %v1080, %v1056
    %v1082 = vsel %vm995, %v162, %v1079
    %v1083 = vsel %vm995, 0, %v1081
    %v1084 = vcosq.f32.pop %v1082
    %v1085 = vsinq.f32.pop %v1082
    %vm1086 = vweird.f32 %v162
    %v1087 = vadd.s32 %v1083, 3
    %v1088 = vand.u32 %v1087, 3
    %vm1089 = vcmp.lt.s32.totalorder %v1088, 2
    %vm1090 = vcmp.eq.s32.totalorder %v1088, 0
    %v1091 = vxor.u32 %v1085, 2147483648
    %v1092 = vsel %vm1090, %v1084, %v1091
    %vm1093 = vcmp.eq.s32.totalorder %v1088, 2
    %v1094 = vxor.u32 %v1084, 2147483648
    %v1095 = vsel %vm1093, %v1094, %v1085
    %v1096 = vsel %vm1089, %v1092, %v1095
    %v1097 = vsel %vm1086, nan, %v1096
    %v1098 = vand.u32 2147483647, %v163
    %vm1099 = vcmp.le.f32.partialorder %v1098, 0.7853982
    %vm1100 = vcmp.lt.s32.totalorder %v163, 0
    %v1101 = vand.u32 %v163, 2139095040
    %v1102 = vshrl.u32 %v1101, 23
    %v1103 = vsub.s32 %v1102, 127
    %v1104 = vand.u32 2147483647, %v163
    %v1105 = vand.u32 %v1104, 8388607
    %v1106 = vor.u32 %v1105, 8388608
    %v1107 = vsub.s32 0, %v1106
    %v1108 = vadd.s32 %v1103, 1
    %vm1109 = vcmp.gt.s32.totalorder %v1108, 0
    %v1110 = vsel %vm1109, %v1108, 0
    %v1111 = vshrl.u32 %v1110, 5
    %v1112 = vand.u32 %v1110, 31
    %v1113 = vsub.s32 32, %v1112
    %v1114 = vshrl.u32 683565275, %v1113
    %v1115 = vshll.u32 683565275, %v1112
    %v1116 = vshrl.u32 2475754826, %v1113
    %v1117 = vor.u32 %v1115, %v1116
    %v1118 = vshll.u32 2475754826, %v1112
    %v1119 = vshrl.u32 2131351028, %v1113
    %v1120 = vor.u32 %v1118, %v1119
    %v1121 = vshll.u32 2131351028, %v1112
    %v1122 = vshrl.u32 2102212464, %v1113
    %v1123 = vor.u32 %v1121, %v1122
    %v1124 = vshll.u32 2102212464, %v1112
    %v1125 = vshrl.u32 920167782, %v1113
    %v1126 = vor.u32 %v1124, %v1125
    %v1127 = vshll.u32 920167782, %v1112
    %v1128 = vshrl.u32 1326507024, %v1113
    %v1129 = vor.u32 %v1127, %v1128
    %vm1130 = vcmp.lt.s32.totalorder %v1111, 1
    %vm1131 = vcmp.lt.s32.totalorder %v1111, 2
    %vm1132 = vcmp.lt.s32.totalorder %v1111, 3
    %vm1133 = vcmp.lt.s32.totalorder %v1111, 4
    %v1134 = vsel %vm1130, %v1114, %v1117
    %v1135 = vsel %vm1133, %v1123, 2102212464
    %v1136 = vsel %vm1132, %v1120, %v1135
    %v1137 = vsel %vm1131, %v1134, %v1136
    %v1138 = vsel %vm1130, %v1117, %v1120
    %v1139 = vsel %vm1133, %v1126, 920167782
    %v1140 = vsel %vm1132, %v1123, %v1139
    %v1141 = vsel %vm1131, %v1138, %v1140
    %v1142 = vsel %vm1130, %v1120, %v1123
    %v1143 = vsel %vm1133, %v1129, 1326507024
    %v1144 = vsel %vm1132, %v1126, %v1143
    %v1145 = vsel %vm1131, %v1142, %v1144
    %v1146 = vshll.u32 %v1106, 8
    %v1147 = vmul.u32.u64.compose %v1146, %v1145
    %v1148 = vextract.low.u32 %v1147
    %v1149 = vextract.high.u32 %v1147
    %v1150 = vmul.u32.u64.compose %v1146, %v1141
    %v1151 = vextract.low.u32 %v1150
    %v1152 = vextract.high.u32 %v1150
    %v1153 = vmul.u32 %v1146, %v1137
    %v1154 = vadd.s32 %v1149, %v1151
    %vm1155 = vc.u32 %v1149, %v1151
    %v1156 = vadd.s32 %v1152, 1
    %v1157 = vsel %vm1155, %v1156, %v1152
    %v1158 = vadd.s32 %v1153, %v1157
    %v1159 = vadd.s32 %v1158, 536870912
    %v1160 = vshrl.u32 %v1159, 30
    %v1161 = vshll.u32 %v1160, 30
    %v1162 = vsub.s32 %v1158, %v1161
    %vm1163 = vcmp.lt.s32.totalorder %v1162, 0
    %v1164 = vsub.s32 0, %v1162
    %v1165 = vsel %vm1163, %v1164, %v1162
    %v1166 = vclz %v1165
    %v1167 = vsub.s32 %v1166, 2
    %vm1168 = vcmp.gt.s32.totalorder 0, %v1167
    %v1169 = vsel %vm1168, 0, %v1167
    %v1170 = vsub.s32 32, %v1169
    %v1171 = vshll.u32 %v1162, %v1169
    %v1172 = vshrl.u32 %v1154, %v1170
    %v1173 = vor.u32 %v1171, %v1172
    %v1174 = vsub.s32 4294967266, %v1169
    %v1175 = vadd.s32 %v1174, 127
    %v1176 = vshll.u32 %v1175, 23
    %v1177 = vor.u32 4788187, %v1176
    %v1178 = vand.u32 2147483647, %v1177
    %v1180 = vcvt.s32.f32 %v1173
    %v1181 = vmul.f32 %v1180, %v1178
    %v1182 = vxor.u32 %v1181, 2147483648
    %v1183 = vsel %vm1100, %v1182, %v1181
    %v1184 = vsub.s32 4, %v1160
    %v1185 = vsel %vm1100, %v1184, %v1160
    %v1186 = vsel %vm1099, %v163, %v1183
    %v1187 = vsel %vm1099, 0, %v1185
    %v1188 = vcosq.f32.pop %v1186
    %v1189 = vsinq.f32.pop %v1186
    %vm1190 = vweird.f32 %v163
    %v1191 = vadd.s32 %v1187, 3
    %v1192 = vand.u32 %v1191, 3
    %vm1193 = vcmp.lt.s32.totalorder %v1192, 2
    %vm1194 = vcmp.eq.s32.totalorder %v1192, 0
    %v1195 = vxor.u32 %v1189, 2147483648
    %v1196 = vsel %vm1194, %v1188, %v1195
    %vm1197 = vcmp.eq.s32.totalorder %v1192, 2
    %v1198 = vxor.u32 %v1188, 2147483648
    %v1199 = vsel %vm1197, %v1198, %v1189
    %v1200 = vsel %vm1193, %v1196, %v1199
    %v1201 = vsel %vm1190, nan, %v1200
    %v1202 = vand.u32 2147483647, %v164
    %vm1203 = vcmp.le.f32.partialorder %v1202, 0.7853982
    %vm1204 = vcmp.lt.s32.totalorder %v164, 0
    %v1205 = vand.u32 %v164, 2139095040
    %v1206 = vshrl.u32 %v1205, 23
    %v1207 = vsub.s32 %v1206, 127
    %v1208 = vand.u32 2147483647, %v164
    %v1209 = vand.u32 %v1208, 8388607
    %v1210 = vor.u32 %v1209, 8388608
    %v1211 = vsub.s32 0, %v1210
    %v1212 = vadd.s32 %v1207, 1
    %vm1213 = vcmp.gt.s32.totalorder %v1212, 0
    %v1214 = vsel %vm1213, %v1212, 0
    %v1215 = vshrl.u32 %v1214, 5
    %v1216 = vand.u32 %v1214, 31
    %v1217 = vsub.s32 32, %v1216
    %v1218 = vshrl.u32 683565275, %v1217
    %v1219 = vshll.u32 683565275, %v1216
    %v1220 = vshrl.u32 2475754826, %v1217
    %v1221 = vor.u32 %v1219, %v1220
    %v1222 = vshll.u32 2475754826, %v1216
    %v1223 = vshrl.u32 2131351028, %v1217
    %v1224 = vor.u32 %v1222, %v1223
    %v1225 = vshll.u32 2131351028, %v1216
    %v1226 = vshrl.u32 2102212464, %v1217
    %v1227 = vor.u32 %v1225, %v1226
    %v1228 = vshll.u32 2102212464, %v1216
    %v1229 = vshrl.u32 920167782, %v1217
    %v1230 = vor.u32 %v1228, %v1229
    %v1231 = vshll.u32 920167782, %v1216
    %v1232 = vshrl.u32 1326507024, %v1217
    %v1233 = vor.u32 %v1231, %v1232
    %vm1234 = vcmp.lt.s32.totalorder %v1215, 1
    %vm1235 = vcmp.lt.s32.totalorder %v1215, 2
    %vm1236 = vcmp.lt.s32.totalorder %v1215, 3
    %vm1237 = vcmp.lt.s32.totalorder %v1215, 4
    %v1238 = vsel %vm1234, %v1218, %v1221
    %v1239 = vsel %vm1237, %v1227, 2102212464
    %v1240 = vsel %vm1236, %v1224, %v1239
    %v1241 = vsel %vm1235, %v1238, %v1240
    %v1242 = vsel %vm1234, %v1221, %v1224
    %v1243 = vsel %vm1237, %v1230, 920167782
    %v1244 = vsel %vm1236, %v1227, %v1243
    %v1245 = vsel %vm1235, %v1242, %v1244
    %v1246 = vsel %vm1234, %v1224, %v1227
    %v1247 = vsel %vm1237, %v1233, 1326507024
    %v1248 = vsel %vm1236, %v1230, %v1247
    %v1249 = vsel %vm1235, %v1246, %v1248
    %v1250 = vshll.u32 %v1210, 8
    %v1251 = vmul.u32.u64.compose %v1250, %v1249
    %v1252 = vextract.low.u32 %v1251
    %v1253 = vextract.high.u32 %v1251
    %v1254 = vmul.u32.u64.compose %v1250, %v1245
    %v1255 = vextract.low.u32 %v1254
    %v1256 = vextract.high.u32 %v1254
    %v1257 = vmul.u32 %v1250, %v1241
    %v1258 = vadd.s32 %v1253, %v1255
    %vm1259 = vc.u32 %v1253, %v1255
    %v1260 = vadd.s32 %v1256, 1
    %v1261 = vsel %vm1259, %v1260, %v1256
    %v1262 = vadd.s32 %v1257, %v1261
    %v1263 = vadd.s32 %v1262, 536870912
    %v1264 = vshrl.u32 %v1263, 30
    %v1265 = vshll.u32 %v1264, 30
    %v1266 = vsub.s32 %v1262, %v1265
    %vm1267 = vcmp.lt.s32.totalorder %v1266, 0
    %v1268 = vsub.s32 0, %v1266
    %v1269 = vsel %vm1267, %v1268, %v1266
    %v1270 = vclz %v1269
    %v1271 = vsub.s32 %v1270, 2
    %vm1272 = vcmp.gt.s32.totalorder 0, %v1271
    %v1273 = vsel %vm1272, 0, %v1271
    %v1274 = vsub.s32 32, %v1273
    %v1275 = vshll.u32 %v1266, %v1273
    %v1276 = vshrl.u32 %v1258, %v1274
    %v1277 = vor.u32 %v1275, %v1276
    %v1278 = vsub.s32 4294967266, %v1273
    %v1279 = vadd.s32 %v1278, 127
    %v1280 = vshll.u32 %v1279, 23
    %v1281 = vor.u32 4788187, %v1280
    %v1282 = vand.u32 2147483647, %v1281
    %v1284 = vcvt.s32.f32 %v1277
    %v1285 = vmul.f32 %v1284, %v1282
    %v1286 = vxor.u32 %v1285, 2147483648
    %v1287 = vsel %vm1204, %v1286, %v1285
    %v1288 = vsub.s32 4, %v1264
    %v1289 = vsel %vm1204, %v1288, %v1264
    %v1290 = vsel %vm1203, %v164, %v1287
    %v1291 = vsel %vm1203, 0, %v1289
    %v1292 = vcosq.f32.pop %v1290
    %v1293 = vsinq.f32.pop %v1290
    %vm1294 = vweird.f32 %v164
    %v1295 = vadd.s32 %v1291, 3
    %v1296 = vand.u32 %v1295, 3
    %vm1297 = vcmp.lt.s32.totalorder %v1296, 2
    %vm1298 = vcmp.eq.s32.totalorder %v1296, 0
    %v1299 = vxor.u32 %v1293, 2147483648
    %v1300 = vsel %vm1298, %v1292, %v1299
    %vm1301 = vcmp.eq.s32.totalorder %v1296, 2
    %v1302 = vxor.u32 %v1292, 2147483648
    %v1303 = vsel %vm1301, %v1302, %v1293
    %v1304 = vsel %vm1297, %v1300, %v1303
    %v1305 = vsel %vm1294, nan, %v1304
    %v1306 = vand.u32 2147483647, %v165
    %vm1307 = vcmp.le.f32.partialorder %v1306, 0.7853982
    %vm1308 = vcmp.lt.s32.totalorder %v165, 0
    %v1309 = vand.u32 %v165, 2139095040
    %v1310 = vshrl.u32 %v1309, 23
    %v1311 = vsub.s32 %v1310, 127
    %v1312 = vand.u32 2147483647, %v165
    %v1313 = vand.u32 %v1312, 8388607
    %v1314 = vor.u32 %v1313, 8388608
    %v1315 = vsub.s32 0, %v1314
    %v1316 = vadd.s32 %v1311, 1
    %vm1317 = vcmp.gt.s32.totalorder %v1316, 0
    %v1318 = vsel %vm1317, %v1316, 0
    %v1319 = vshrl.u32 %v1318, 5
    %v1320 = vand.u32 %v1318, 31
    %v1321 = vsub.s32 32, %v1320
    %v1322 = vshrl.u32 683565275, %v1321
    %v1323 = vshll.u32 683565275, %v1320
    %v1324 = vshrl.u32 2475754826, %v1321
    %v1325 = vor.u32 %v1323, %v1324
    %v1326 = vshll.u32 2475754826, %v1320
    %v1327 = vshrl.u32 2131351028, %v1321
    %v1328 = vor.u32 %v1326, %v1327
    %v1329 = vshll.u32 2131351028, %v1320
    %v1330 = vshrl.u32 2102212464, %v1321
    %v1331 = vor.u32 %v1329, %v1330
    %v1332 = vshll.u32 2102212464, %v1320
    %v1333 = vshrl.u32 920167782, %v1321
    %v1334 = vor.u32 %v1332, %v1333
    %v1335 = vshll.u32 920167782, %v1320
    %v1336 = vshrl.u32 1326507024, %v1321
    %v1337 = vor.u32 %v1335, %v1336
    %vm1338 = vcmp.lt.s32.totalorder %v1319, 1
    %vm1339 = vcmp.lt.s32.totalorder %v1319, 2
    %vm1340 = vcmp.lt.s32.totalorder %v1319, 3
    %vm1341 = vcmp.lt.s32.totalorder %v1319, 4
    %v1342 = vsel %vm1338, %v1322, %v1325
    %v1343 = vsel %vm1341, %v1331, 2102212464
    %v1344 = vsel %vm1340, %v1328, %v1343
    %v1345 = vsel %vm1339, %v1342, %v1344
    %v1346 = vsel %vm1338, %v1325, %v1328
    %v1347 = vsel %vm1341, %v1334, 920167782
    %v1348 = vsel %vm1340, %v1331, %v1347
    %v1349 = vsel %vm1339, %v1346, %v1348
    %v1350 = vsel %vm1338, %v1328, %v1331
    %v1351 = vsel %vm1341, %v1337, 1326507024
    %v1352 = vsel %vm1340, %v1334, %v1351
    %v1353 = vsel %vm1339, %v1350, %v1352
    %v1354 = vshll.u32 %v1314, 8
    %v1355 = vmul.u32.u64.compose %v1354, %v1353
    %v1356 = vextract.low.u32 %v1355
    %v1357 = vextract.high.u32 %v1355
    %v1358 = vmul.u32.u64.compose %v1354, %v1349
    %v1359 = vextract.low.u32 %v1358
    %v1360 = vextract.high.u32 %v1358
    %v1361 = vmul.u32 %v1354, %v1345
    %v1362 = vadd.s32 %v1357, %v1359
    %vm1363 = vc.u32 %v1357, %v1359
    %v1364 = vadd.s32 %v1360, 1
    %v1365 = vsel %vm1363, %v1364, %v1360
    %v1366 = vadd.s32 %v1361, %v1365
    %v1367 = vadd.s32 %v1366, 536870912
    %v1368 = vshrl.u32 %v1367, 30
    %v1369 = vshll.u32 %v1368, 30
    %v1370 = vsub.s32 %v1366, %v1369
    %vm1371 = vcmp.lt.s32.totalorder %v1370, 0
    %v1372 = vsub.s32 0, %v1370
    %v1373 = vsel %vm1371, %v1372, %v1370
    %v1374 = vclz %v1373
    %v1375 = vsub.s32 %v1374, 2
    %vm1376 = vcmp.gt.s32.totalorder 0, %v1375
    %v1377 = vsel %vm1376, 0, %v1375
    %v1378 = vsub.s32 32, %v1377
    %v1379 = vshll.u32 %v1370, %v1377
    %v1380 = vshrl.u32 %v1362, %v1378
    %v1381 = vor.u32 %v1379, %v1380
    %v1382 = vsub.s32 4294967266, %v1377
    %v1383 = vadd.s32 %v1382, 127
    %v1384 = vshll.u32 %v1383, 23
    %v1385 = vor.u32 4788187, %v1384
    %v1386 = vand.u32 2147483647, %v1385
    %v1388 = vcvt.s32.f32 %v1381
    %v1389 = vmul.f32 %v1388, %v1386
    %v1390 = vxor.u32 %v1389, 2147483648
    %v1391 = vsel %vm1308, %v1390, %v1389
    %v1392 = vsub.s32 4, %v1368
    %v1393 = vsel %vm1308, %v1392, %v1368
    %v1394 = vsel %vm1307, %v165, %v1391
    %v1395 = vsel %vm1307, 0, %v1393
    %v1396 = vcosq.f32.pop %v1394
    %v1397 = vsinq.f32.pop %v1394
    %vm1398 = vweird.f32 %v165
    %v1399 = vadd.s32 %v1395, 3
    %v1400 = vand.u32 %v1399, 3
    %vm1401 = vcmp.lt.s32.totalorder %v1400, 2
    %vm1402 = vcmp.eq.s32.totalorder %v1400, 0
    %v1403 = vxor.u32 %v1397, 2147483648
    %v1404 = vsel %vm1402, %v1396, %v1403
    %vm1405 = vcmp.eq.s32.totalorder %v1400, 2
    %v1406 = vxor.u32 %v1396, 2147483648
    %v1407 = vsel %vm1405, %v1406, %v1397
    %v1408 = vsel %vm1401, %v1404, %v1407
    %v1409 = vsel %vm1398, nan, %v1408
    %v1410 = vand.u32 2147483647, %v166
    %vm1411 = vcmp.le.f32.partialorder %v1410, 0.7853982
    %vm1412 = vcmp.lt.s32.totalorder %v166, 0
    %v1413 = vand.u32 %v166, 2139095040
    %v1414 = vshrl.u32 %v1413, 23
    %v1415 = vsub.s32 %v1414, 127
    %v1416 = vand.u32 2147483647, %v166
    %v1417 = vand.u32 %v1416, 8388607
    %v1418 = vor.u32 %v1417, 8388608
    %v1419 = vsub.s32 0, %v1418
    %v1420 = vadd.s32 %v1415, 1
    %vm1421 = vcmp.gt.s32.totalorder %v1420, 0
    %v1422 = vsel %vm1421, %v1420, 0
    %v1423 = vshrl.u32 %v1422, 5
    %v1424 = vand.u32 %v1422, 31
    %v1425 = vsub.s32 32, %v1424
    %v1426 = vshrl.u32 683565275, %v1425
    %v1427 = vshll.u32 683565275, %v1424
    %v1428 = vshrl.u32 2475754826, %v1425
    %v1429 = vor.u32 %v1427, %v1428
    %v1430 = vshll.u32 2475754826, %v1424
    %v1431 = vshrl.u32 2131351028, %v1425
    %v1432 = vor.u32 %v1430, %v1431
    %v1433 = vshll.u32 2131351028, %v1424
    %v1434 = vshrl.u32 2102212464, %v1425
    %v1435 = vor.u32 %v1433, %v1434
    %v1436 = vshll.u32 2102212464, %v1424
    %v1437 = vshrl.u32 920167782, %v1425
    %v1438 = vor.u32 %v1436, %v1437
    %v1439 = vshll.u32 920167782, %v1424
    %v1440 = vshrl.u32 1326507024, %v1425
    %v1441 = vor.u32 %v1439, %v1440
    %vm1442 = vcmp.lt.s32.totalorder %v1423, 1
    %vm1443 = vcmp.lt.s32.totalorder %v1423, 2
    %vm1444 = vcmp.lt.s32.totalorder %v1423, 3
    %vm1445 = vcmp.lt.s32.totalorder %v1423, 4
    %v1446 = vsel %vm1442, %v1426, %v1429
    %v1447 = vsel %vm1445, %v1435, 2102212464
    %v1448 = vsel %vm1444, %v1432, %v1447
    %v1449 = vsel %vm1443, %v1446, %v1448
    %v1450 = vsel %vm1442, %v1429, %v1432
    %v1451 = vsel %vm1445, %v1438, 920167782
    %v1452 = vsel %vm1444, %v1435, %v1451
    %v1453 = vsel %vm1443, %v1450, %v1452
    %v1454 = vsel %vm1442, %v1432, %v1435
    %v1455 = vsel %vm1445, %v1441, 1326507024
    %v1456 = vsel %vm1444, %v1438, %v1455
    %v1457 = vsel %vm1443, %v1454, %v1456
    %v1458 = vshll.u32 %v1418, 8
    %v1459 = vmul.u32.u64.compose %v1458, %v1457
    %v1460 = vextract.low.u32 %v1459
    %v1461 = vextract.high.u32 %v1459
    %v1462 = vmul.u32.u64.compose %v1458, %v1453
    %v1463 = vextract.low.u32 %v1462
    %v1464 = vextract.high.u32 %v1462
    %v1465 = vmul.u32 %v1458, %v1449
    %v1466 = vadd.s32 %v1461, %v1463
    %vm1467 = vc.u32 %v1461, %v1463
    %v1468 = vadd.s32 %v1464, 1
    %v1469 = vsel %vm1467, %v1468, %v1464
    %v1470 = vadd.s32 %v1465, %v1469
    %v1471 = vadd.s32 %v1470, 536870912
    %v1472 = vshrl.u32 %v1471, 30
    %v1473 = vshll.u32 %v1472, 30
    %v1474 = vsub.s32 %v1470, %v1473
    %vm1475 = vcmp.lt.s32.totalorder %v1474, 0
    %v1476 = vsub.s32 0, %v1474
    %v1477 = vsel %vm1475, %v1476, %v1474
    %v1478 = vclz %v1477
    %v1479 = vsub.s32 %v1478, 2
    %vm1480 = vcmp.gt.s32.totalorder 0, %v1479
    %v1481 = vsel %vm1480, 0, %v1479
    %v1482 = vsub.s32 32, %v1481
    %v1483 = vshll.u32 %v1474, %v1481
    %v1484 = vshrl.u32 %v1466, %v1482
    %v1485 = vor.u32 %v1483, %v1484
    %v1486 = vsub.s32 4294967266, %v1481
    %v1487 = vadd.s32 %v1486, 127
    %v1488 = vshll.u32 %v1487, 23
    %v1489 = vor.u32 4788187, %v1488
    %v1490 = vand.u32 2147483647, %v1489
    %v1492 = vcvt.s32.f32 %v1485
    %v1493 = vmul.f32 %v1492, %v1490
    %v1494 = vxor.u32 %v1493, 2147483648
    %v1495 = vsel %vm1412, %v1494, %v1493
    %v1496 = vsub.s32 4, %v1472
    %v1497 = vsel %vm1412, %v1496, %v1472
    %v1498 = vsel %vm1411, %v166, %v1495
    %v1499 = vsel %vm1411, 0, %v1497
    %v1500 = vcosq.f32.pop %v1498
    %v1501 = vsinq.f32.pop %v1498
    %vm1502 = vweird.f32 %v166
    %v1503 = vadd.s32 %v1499, 3
    %v1504 = vand.u32 %v1503, 3
    %vm1505 = vcmp.lt.s32.totalorder %v1504, 2
    %vm1506 = vcmp.eq.s32.totalorder %v1504, 0
    %v1507 = vxor.u32 %v1501, 2147483648
    %v1508 = vsel %vm1506, %v1500, %v1507
    %vm1509 = vcmp.eq.s32.totalorder %v1504, 2
    %v1510 = vxor.u32 %v1500, 2147483648
    %v1511 = vsel %vm1509, %v1510, %v1501
    %v1512 = vsel %vm1505, %v1508, %v1511
    %v1513 = vsel %vm1502, nan, %v1512
    %v1514 = vand.u32 2147483647, %v167
    %vm1515 = vcmp.le.f32.partialorder %v1514, 0.7853982
    %vm1516 = vcmp.lt.s32.totalorder %v167, 0
    %v1517 = vand.u32 %v167, 2139095040
    %v1518 = vshrl.u32 %v1517, 23
    %v1519 = vsub.s32 %v1518, 127
    %v1520 = vand.u32 2147483647, %v167
    %v1521 = vand.u32 %v1520, 8388607
    %v1522 = vor.u32 %v1521, 8388608
    %v1523 = vsub.s32 0, %v1522
    %v1524 = vadd.s32 %v1519, 1
    %vm1525 = vcmp.gt.s32.totalorder %v1524, 0
    %v1526 = vsel %vm1525, %v1524, 0
    %v1527 = vshrl.u32 %v1526, 5
    %v1528 = vand.u32 %v1526, 31
    %v1529 = vsub.s32 32, %v1528
    %v1530 = vshrl.u32 683565275, %v1529
    %v1531 = vshll.u32 683565275, %v1528
    %v1532 = vshrl.u32 2475754826, %v1529
    %v1533 = vor.u32 %v1531, %v1532
    %v1534 = vshll.u32 2475754826, %v1528
    %v1535 = vshrl.u32 2131351028, %v1529
    %v1536 = vor.u32 %v1534, %v1535
    %v1537 = vshll.u32 2131351028, %v1528
    %v1538 = vshrl.u32 2102212464, %v1529
    %v1539 = vor.u32 %v1537, %v1538
    %v1540 = vshll.u32 2102212464, %v1528
    %v1541 = vshrl.u32 920167782, %v1529
    %v1542 = vor.u32 %v1540, %v1541
    %v1543 = vshll.u32 920167782, %v1528
    %v1544 = vshrl.u32 1326507024, %v1529
    %v1545 = vor.u32 %v1543, %v1544
    %vm1546 = vcmp.lt.s32.totalorder %v1527, 1
    %vm1547 = vcmp.lt.s32.totalorder %v1527, 2
    %vm1548 = vcmp.lt.s32.totalorder %v1527, 3
    %vm1549 = vcmp.lt.s32.totalorder %v1527, 4
    %v1550 = vsel %vm1546, %v1530, %v1533
    %v1551 = vsel %vm1549, %v1539, 2102212464
    %v1552 = vsel %vm1548, %v1536, %v1551
    %v1553 = vsel %vm1547, %v1550, %v1552
    %v1554 = vsel %vm1546, %v1533, %v1536
    %v1555 = vsel %vm1549, %v1542, 920167782
    %v1556 = vsel %vm1548, %v1539, %v1555
    %v1557 = vsel %vm1547, %v1554, %v1556
    %v1558 = vsel %vm1546, %v1536, %v1539
    %v1559 = vsel %vm1549, %v1545, 1326507024
    %v1560 = vsel %vm1548, %v1542, %v1559
    %v1561 = vsel %vm1547, %v1558, %v1560
    %v1562 = vshll.u32 %v1522, 8
    %v1563 = vmul.u32.u64.compose %v1562, %v1561
    %v1564 = vextract.low.u32 %v1563
    %v1565 = vextract.high.u32 %v1563
    %v1566 = vmul.u32.u64.compose %v1562, %v1557
    %v1567 = vextract.low.u32 %v1566
    %v1568 = vextract.high.u32 %v1566
    %v1569 = vmul.u32 %v1562, %v1553
    %v1570 = vadd.s32 %v1565, %v1567
    %vm1571 = vc.u32 %v1565, %v1567
    %v1572 = vadd.s32 %v1568, 1
    %v1573 = vsel %vm1571, %v1572, %v1568
    %v1574 = vadd.s32 %v1569, %v1573
    %v1575 = vadd.s32 %v1574, 536870912
    %v1576 = vshrl.u32 %v1575, 30
    %v1577 = vshll.u32 %v1576, 30
    %v1578 = vsub.s32 %v1574, %v1577
    %vm1579 = vcmp.lt.s32.totalorder %v1578, 0
    %v1580 = vsub.s32 0, %v1578
    %v1581 = vsel %vm1579, %v1580, %v1578
    %v1582 = vclz %v1581
    %v1583 = vsub.s32 %v1582, 2
    %vm1584 = vcmp.gt.s32.totalorder 0, %v1583
    %v1585 = vsel %vm1584, 0, %v1583
    %v1586 = vsub.s32 32, %v1585
    %v1587 = vshll.u32 %v1578, %v1585
    %v1588 = vshrl.u32 %v1570, %v1586
    %v1589 = vor.u32 %v1587, %v1588
    %v1590 = vsub.s32 4294967266, %v1585
    %v1591 = vadd.s32 %v1590, 127
    %v1592 = vshll.u32 %v1591, 23
    %v1593 = vor.u32 4788187, %v1592
    %v1594 = vand.u32 2147483647, %v1593
    %v1596 = vcvt.s32.f32 %v1589
    %v1597 = vmul.f32 %v1596, %v1594
    %v1598 = vxor.u32 %v1597, 2147483648
    %v1599 = vsel %vm1516, %v1598, %v1597
    %v1600 = vsub.s32 4, %v1576
    %v1601 = vsel %vm1516, %v1600, %v1576
    %v1602 = vsel %vm1515, %v167, %v1599
    %v1603 = vsel %vm1515, 0, %v1601
    %v1604 = vcosq.f32.pop %v1602
    %v1605 = vsinq.f32.pop %v1602
    %vm1606 = vweird.f32 %v167
    %v1607 = vadd.s32 %v1603, 3
    %v1608 = vand.u32 %v1607, 3
    %vm1609 = vcmp.lt.s32.totalorder %v1608, 2
    %vm1610 = vcmp.eq.s32.totalorder %v1608, 0
    %v1611 = vxor.u32 %v1605, 2147483648
    %v1612 = vsel %vm1610, %v1604, %v1611
    %vm1613 = vcmp.eq.s32.totalorder %v1608, 2
    %v1614 = vxor.u32 %v1604, 2147483648
    %v1615 = vsel %vm1613, %v1614, %v1605
    %v1616 = vsel %vm1609, %v1612, %v1615
    %v1617 = vsel %vm1606, nan, %v1616
    %v1618 = vand.u32 2147483647, %v168
    %vm1619 = vcmp.le.f32.partialorder %v1618, 0.7853982
    %vm1620 = vcmp.lt.s32.totalorder %v168, 0
    %v1621 = vand.u32 %v168, 2139095040
    %v1622 = vshrl.u32 %v1621, 23
    %v1623 = vsub.s32 %v1622, 127
    %v1624 = vand.u32 2147483647, %v168
    %v1625 = vand.u32 %v1624, 8388607
    %v1626 = vor.u32 %v1625, 8388608
    %v1627 = vsub.s32 0, %v1626
    %v1628 = vadd.s32 %v1623, 1
    %vm1629 = vcmp.gt.s32.totalorder %v1628, 0
    %v1630 = vsel %vm1629, %v1628, 0
    %v1631 = vshrl.u32 %v1630, 5
    %v1632 = vand.u32 %v1630, 31
    %v1633 = vsub.s32 32, %v1632
    %v1634 = vshrl.u32 683565275, %v1633
    %v1635 = vshll.u32 683565275, %v1632
    %v1636 = vshrl.u32 2475754826, %v1633
    %v1637 = vor.u32 %v1635, %v1636
    %v1638 = vshll.u32 2475754826, %v1632
    %v1639 = vshrl.u32 2131351028, %v1633
    %v1640 = vor.u32 %v1638, %v1639
    %v1641 = vshll.u32 2131351028, %v1632
    %v1642 = vshrl.u32 2102212464, %v1633
    %v1643 = vor.u32 %v1641, %v1642
    %v1644 = vshll.u32 2102212464, %v1632
    %v1645 = vshrl.u32 920167782, %v1633
    %v1646 = vor.u32 %v1644, %v1645
    %v1647 = vshll.u32 920167782, %v1632
    %v1648 = vshrl.u32 1326507024, %v1633
    %v1649 = vor.u32 %v1647, %v1648
    %vm1650 = vcmp.lt.s32.totalorder %v1631, 1
    %vm1651 = vcmp.lt.s32.totalorder %v1631, 2
    %vm1652 = vcmp.lt.s32.totalorder %v1631, 3
    %vm1653 = vcmp.lt.s32.totalorder %v1631, 4
    %v1654 = vsel %vm1650, %v1634, %v1637
    %v1655 = vsel %vm1653, %v1643, 2102212464
    %v1656 = vsel %vm1652, %v1640, %v1655
    %v1657 = vsel %vm1651, %v1654, %v1656
    %v1658 = vsel %vm1650, %v1637, %v1640
    %v1659 = vsel %vm1653, %v1646, 920167782
    %v1660 = vsel %vm1652, %v1643, %v1659
    %v1661 = vsel %vm1651, %v1658, %v1660
    %v1662 = vsel %vm1650, %v1640, %v1643
    %v1663 = vsel %vm1653, %v1649, 1326507024
    %v1664 = vsel %vm1652, %v1646, %v1663
    %v1665 = vsel %vm1651, %v1662, %v1664
    %v1666 = vshll.u32 %v1626, 8
    %v1667 = vmul.u32.u64.compose %v1666, %v1665
    %v1668 = vextract.low.u32 %v1667
    %v1669 = vextract.high.u32 %v1667
    %v1670 = vmul.u32.u64.compose %v1666, %v1661
    %v1671 = vextract.low.u32 %v1670
    %v1672 = vextract.high.u32 %v1670
    %v1673 = vmul.u32 %v1666, %v1657
    %v1674 = vadd.s32 %v1669, %v1671
    %vm1675 = vc.u32 %v1669, %v1671
    %v1676 = vadd.s32 %v1672, 1
    %v1677 = vsel %vm1675, %v1676, %v1672
    %v1678 = vadd.s32 %v1673, %v1677
    %v1679 = vadd.s32 %v1678, 536870912
    %v1680 = vshrl.u32 %v1679, 30
    %v1681 = vshll.u32 %v1680, 30
    %v1682 = vsub.s32 %v1678, %v1681
    %vm1683 = vcmp.lt.s32.totalorder %v1682, 0
    %v1684 = vsub.s32 0, %v1682
    %v1685 = vsel %vm1683, %v1684, %v1682
    %v1686 = vclz %v1685
    %v1687 = vsub.s32 %v1686, 2
    %vm1688 = vcmp.gt.s32.totalorder 0, %v1687
    %v1689 = vsel %vm1688, 0, %v1687
    %v1690 = vsub.s32 32, %v1689
    %v1691 = vshll.u32 %v1682, %v1689
    %v1692 = vshrl.u32 %v1674, %v1690
    %v1693 = vor.u32 %v1691, %v1692
    %v1694 = vsub.s32 4294967266, %v1689
    %v1695 = vadd.s32 %v1694, 127
    %v1696 = vshll.u32 %v1695, 23
    %v1697 = vor.u32 4788187, %v1696
    %v1698 = vand.u32 2147483647, %v1697
    %v1700 = vcvt.s32.f32 %v1693
    %v1701 = vmul.f32 %v1700, %v1698
    %v1702 = vxor.u32 %v1701, 2147483648
    %v1703 = vsel %vm1620, %v1702, %v1701
    %v1704 = vsub.s32 4, %v1680
    %v1705 = vsel %vm1620, %v1704, %v1680
    %v1706 = vsel %vm1619, %v168, %v1703
    %v1707 = vsel %vm1619, 0, %v1705
    %v1708 = vcosq.f32.pop %v1706
    %v1709 = vsinq.f32.pop %v1706
    %vm1710 = vweird.f32 %v168
    %v1711 = vadd.s32 %v1707, 3
    %v1712 = vand.u32 %v1711, 3
    %vm1713 = vcmp.lt.s32.totalorder %v1712, 2
    %vm1714 = vcmp.eq.s32.totalorder %v1712, 0
    %v1715 = vxor.u32 %v1709, 2147483648
    %v1716 = vsel %vm1714, %v1708, %v1715
    %vm1717 = vcmp.eq.s32.totalorder %v1712, 2
    %v1718 = vxor.u32 %v1708, 2147483648
    %v1719 = vsel %vm1717, %v1718, %v1709
    %v1720 = vsel %vm1713, %v1716, %v1719
    %v1721 = vsel %vm1710, nan, %v1720
    %v1722 = vand.u32 2147483647, %v169
    %vm1723 = vcmp.le.f32.partialorder %v1722, 0.7853982
    %vm1724 = vcmp.lt.s32.totalorder %v169, 0
    %v1725 = vand.u32 %v169, 2139095040
    %v1726 = vshrl.u32 %v1725, 23
    %v1727 = vsub.s32 %v1726, 127
    %v1728 = vand.u32 2147483647, %v169
    %v1729 = vand.u32 %v1728, 8388607
    %v1730 = vor.u32 %v1729, 8388608
    %v1731 = vsub.s32 0, %v1730
    %v1732 = vadd.s32 %v1727, 1
    %vm1733 = vcmp.gt.s32.totalorder %v1732, 0
    %v1734 = vsel %vm1733, %v1732, 0
    %v1735 = vshrl.u32 %v1734, 5
    %v1736 = vand.u32 %v1734, 31
    %v1737 = vsub.s32 32, %v1736
    %v1738 = vshrl.u32 683565275, %v1737
    %v1739 = vshll.u32 683565275, %v1736
    %v1740 = vshrl.u32 2475754826, %v1737
    %v1741 = vor.u32 %v1739, %v1740
    %v1742 = vshll.u32 2475754826, %v1736
    %v1743 = vshrl.u32 2131351028, %v1737
    %v1744 = vor.u32 %v1742, %v1743
    %v1745 = vshll.u32 2131351028, %v1736
    %v1746 = vshrl.u32 2102212464, %v1737
    %v1747 = vor.u32 %v1745, %v1746
    %v1748 = vshll.u32 2102212464, %v1736
    %v1749 = vshrl.u32 920167782, %v1737
    %v1750 = vor.u32 %v1748, %v1749
    %v1751 = vshll.u32 920167782, %v1736
    %v1752 = vshrl.u32 1326507024, %v1737
    %v1753 = vor.u32 %v1751, %v1752
    %vm1754 = vcmp.lt.s32.totalorder %v1735, 1
    %vm1755 = vcmp.lt.s32.totalorder %v1735, 2
    %vm1756 = vcmp.lt.s32.totalorder %v1735, 3
    %vm1757 = vcmp.lt.s32.totalorder %v1735, 4
    %v1758 = vsel %vm1754, %v1738, %v1741
    %v1759 = vsel %vm1757, %v1747, 2102212464
    %v1760 = vsel %vm1756, %v1744, %v1759
    %v1761 = vsel %vm1755, %v1758, %v1760
    %v1762 = vsel %vm1754, %v1741, %v1744
    %v1763 = vsel %vm1757, %v1750, 920167782
    %v1764 = vsel %vm1756, %v1747, %v1763
    %v1765 = vsel %vm1755, %v1762, %v1764
    %v1766 = vsel %vm1754, %v1744, %v1747
    %v1767 = vsel %vm1757, %v1753, 1326507024
    %v1768 = vsel %vm1756, %v1750, %v1767
    %v1769 = vsel %vm1755, %v1766, %v1768
    %v1770 = vshll.u32 %v1730, 8
    %v1771 = vmul.u32.u64.compose %v1770, %v1769
    %v1772 = vextract.low.u32 %v1771
    %v1773 = vextract.high.u32 %v1771
    %v1774 = vmul.u32.u64.compose %v1770, %v1765
    %v1775 = vextract.low.u32 %v1774
    %v1776 = vextract.high.u32 %v1774
    %v1777 = vmul.u32 %v1770, %v1761
    %v1778 = vadd.s32 %v1773, %v1775
    %vm1779 = vc.u32 %v1773, %v1775
    %v1780 = vadd.s32 %v1776, 1
    %v1781 = vsel %vm1779, %v1780, %v1776
    %v1782 = vadd.s32 %v1777, %v1781
    %v1783 = vadd.s32 %v1782, 536870912
    %v1784 = vshrl.u32 %v1783, 30
    %v1785 = vshll.u32 %v1784, 30
    %v1786 = vsub.s32 %v1782, %v1785
    %vm1787 = vcmp.lt.s32.totalorder %v1786, 0
    %v1788 = vsub.s32 0, %v1786
    %v1789 = vsel %vm1787, %v1788, %v1786
    %v1790 = vclz %v1789
    %v1791 = vsub.s32 %v1790, 2
    %vm1792 = vcmp.gt.s32.totalorder 0, %v1791
    %v1793 = vsel %vm1792, 0, %v1791
    %v1794 = vsub.s32 32, %v1793
    %v1795 = vshll.u32 %v1786, %v1793
    %v1796 = vshrl.u32 %v1778, %v1794
    %v1797 = vor.u32 %v1795, %v1796
    %v1798 = vsub.s32 4294967266, %v1793
    %v1799 = vadd.s32 %v1798, 127
    %v1800 = vshll.u32 %v1799, 23
    %v1801 = vor.u32 4788187, %v1800
    %v1802 = vand.u32 2147483647, %v1801
    %v1804 = vcvt.s32.f32 %v1797
    %v1805 = vmul.f32 %v1804, %v1802
    %v1806 = vxor.u32 %v1805, 2147483648
    %v1807 = vsel %vm1724, %v1806, %v1805
    %v1808 = vsub.s32 4, %v1784
    %v1809 = vsel %vm1724, %v1808, %v1784
    %v1810 = vsel %vm1723, %v169, %v1807
    %v1811 = vsel %vm1723, 0, %v1809
    %v1812 = vcosq.f32.pop %v1810
    %v1813 = vsinq.f32.pop %v1810
    %vm1814 = vweird.f32 %v169
    %v1815 = vadd.s32 %v1811, 3
    %v1816 = vand.u32 %v1815, 3
    %vm1817 = vcmp.lt.s32.totalorder %v1816, 2
    %vm1818 = vcmp.eq.s32.totalorder %v1816, 0
    %v1819 = vxor.u32 %v1813, 2147483648
    %v1820 = vsel %vm1818, %v1812, %v1819
    %vm1821 = vcmp.eq.s32.totalorder %v1816, 2
    %v1822 = vxor.u32 %v1812, 2147483648
    %v1823 = vsel %vm1821, %v1822, %v1813
    %v1824 = vsel %vm1817, %v1820, %v1823
    %v1825 = vsel %vm1814, nan, %v1824
    %v1826 = vld [vmem:[#allocation2] sm:$0xff]
    %v1827 = vld [vmem:[#allocation2 + $0x8] sm:$0xff]
    %v1828 = vld [vmem:[#allocation2 + $0x10] sm:$0xff]
    %v1829 = vld [vmem:[#allocation2 + $0x18] sm:$0xff]
    %v1830 = vld [vmem:[#allocation2 + $0x20] sm:$0xff]
    %v1831 = vld [vmem:[#allocation2 + $0x28] sm:$0xff]
    %v1832 = vld [vmem:[#allocation2 + $0x30] sm:$0xff]
    %v1833 = vld [vmem:[#allocation2 + $0x38] sm:$0xff]
    %v1834 = vld [vmem:[#allocation2 + $0x40] sm:$0xff]
    %v1835 = vld [vmem:[#allocation2 + $0x48] sm:$0xff]
    %v1836 = vld [vmem:[#allocation2 + $0x50] sm:$0xff]
    %v1837 = vld [vmem:[#allocation2 + $0x58] sm:$0xff]
    %v1838 = vld [vmem:[#allocation2 + $0x60] sm:$0xff]
    %v1839 = vld [vmem:[#allocation2 + $0x68] sm:$0xff]
    %v1840 = vld [vmem:[#allocation2 + $0x70] sm:$0xff]
    %v1841 = vld [vmem:[#allocation2 + $0x78] sm:$0xff]
    %v1842 = vld [vmem:[#allocation2 + $0x80] sm:$0xff]
    %v1843 = vld [vmem:[#allocation2 + $0x88] sm:$0xff]
    %v1844 = vld [vmem:[#allocation2 + $0x90] sm:$0xff]
    %v1845 = vld [vmem:[#allocation2 + $0x98] sm:$0xff]
    %v1846 = vld [vmem:[#allocation2 + $0xa0] sm:$0xff]
    %v1847 = vld [vmem:[#allocation2 + $0xa8] sm:$0xff]
    %v1848 = vld [vmem:[#allocation2 + $0xb0] sm:$0xff]
    %v1849 = vld [vmem:[#allocation2 + $0xb8] sm:$0xff]
    %v1850 = vld [vmem:[#allocation2 + $0xc0] sm:$0xff]
    %v1851 = vld [vmem:[#allocation2 + $0xc8] sm:$0xff]
    %v1852 = vld [vmem:[#allocation2 + $0xd0] sm:$0xff]
    %v1853 = vld [vmem:[#allocation2 + $0xd8] sm:$0xff]
    %v1854 = vld [vmem:[#allocation2 + $0xe0] sm:$0xff]
    %v1855 = vld [vmem:[#allocation2 + $0xe8] sm:$0xff]
    %v1856 = vld [vmem:[#allocation2 + $0xf0] sm:$0xff]
    %v1857 = vld [vmem:[#allocation2 + $0xf8] sm:$0xff]
    %v1858 = vld [vmem:[#allocation2 + $0x100] sm:$0xff]
    %v1859 = vld [vmem:[#allocation2 + $0x108] sm:$0xff]
    %v1860 = vld [vmem:[#allocation2 + $0x110] sm:$0xff]
    %v1861 = vld [vmem:[#allocation2 + $0x118] sm:$0xff]
    %v1862 = vld [vmem:[#allocation2 + $0x120] sm:$0xff]
    %v1863 = vld [vmem:[#allocation2 + $0x128] sm:$0xff]
    %v1864 = vld [vmem:[#allocation2 + $0x130] sm:$0xff]
    %v1865 = vld [vmem:[#allocation2 + $0x138] sm:$0xff]
    %v1866 = vld [vmem:[#allocation2 + $0x140] sm:$0xff]
    %v1867 = vld [vmem:[#allocation2 + $0x148] sm:$0xff]
    %v1868 = vld [vmem:[#allocation2 + $0x150] sm:$0xff]
    %v1869 = vld [vmem:[#allocation2 + $0x158] sm:$0xff]
    %v1870 = vld [vmem:[#allocation2 + $0x160] sm:$0xff]
    %v1871 = vld [vmem:[#allocation2 + $0x168] sm:$0xff]
    %v1872 = vld [vmem:[#allocation2 + $0x170] sm:$0xff]
    %v1873 = vld [vmem:[#allocation2 + $0x178] sm:$0xff]
    %v1874 = vld [vmem:[#allocation2 + $0x180] sm:$0xff]
    %v1875 = vld [vmem:[#allocation2 + $0x188] sm:$0xff]
    %v1876 = vld [vmem:[#allocation2 + $0x190] sm:$0xff]
    %v1877 = vld [vmem:[#allocation2 + $0x198] sm:$0xff]
    %v1878 = vld [vmem:[#allocation2 + $0x1a0] sm:$0xff]
    %v1879 = vld [vmem:[#allocation2 + $0x1a8] sm:$0xff]
    %v1880 = vld [vmem:[#allocation2 + $0x1b0] sm:$0xff]
    %v1881 = vld [vmem:[#allocation2 + $0x1b8] sm:$0xff]
    %v1882 = vld [vmem:[#allocation2 + $0x1c0] sm:$0xff]
    %v1883 = vld [vmem:[#allocation2 + $0x1c8] sm:$0xff]
    %v1884 = vld [vmem:[#allocation2 + $0x1d0] sm:$0xff]
    %v1885 = vld [vmem:[#allocation2 + $0x1d8] sm:$0xff]
    %v1886 = vld [vmem:[#allocation2 + $0x1e0] sm:$0xff]
    %v1887 = vld [vmem:[#allocation2 + $0x1e8] sm:$0xff]
    %v1888 = vld [vmem:[#allocation2 + $0x1f0] sm:$0xff]
    %v1889 = vld [vmem:[#allocation2 + $0x1f8] sm:$0xff]
    %v1890 = vld [vmem:[#allocation2 + $0x200] sm:$0xff]
    %v1891 = vld [vmem:[#allocation2 + $0x208] sm:$0xff]
    %v1892 = vld [vmem:[#allocation2 + $0x210] sm:$0xff]
    %v1893 = vld [vmem:[#allocation2 + $0x218] sm:$0xff]
    %v1894 = vld [vmem:[#allocation2 + $0x220] sm:$0xff]
    %v1895 = vld [vmem:[#allocation2 + $0x228] sm:$0xff]
    %v1896 = vld [vmem:[#allocation2 + $0x230] sm:$0xff]
    %v1897 = vld [vmem:[#allocation2 + $0x238] sm:$0xff]
    %v1898 = vld [vmem:[#allocation2 + $0x240] sm:$0xff]
    %v1899 = vld [vmem:[#allocation2 + $0x248] sm:$0xff]
    %v1900 = vld [vmem:[#allocation2 + $0x250] sm:$0xff]
    %v1901 = vld [vmem:[#allocation2 + $0x258] sm:$0xff]
    %v1902 = vld [vmem:[#allocation2 + $0x260] sm:$0xff]
    %v1903 = vld [vmem:[#allocation2 + $0x268] sm:$0xff]
    %v1904 = vld [vmem:[#allocation2 + $0x270] sm:$0xff]
    %v1905 = vld [vmem:[#allocation2 + $0x278] sm:$0xff]
    %v1906 = vld [vmem:[#allocation2 + $0x280] sm:$0xff]
    %v1907 = vld [vmem:[#allocation2 + $0x288] sm:$0xff]
    %v1908 = vld [vmem:[#allocation2 + $0x290] sm:$0xff]
    %v1909 = vld [vmem:[#allocation2 + $0x298] sm:$0xff]
    %v1910 = vld [vmem:[#allocation2 + $0x2a0] sm:$0xff]
    %v1911 = vld [vmem:[#allocation2 + $0x2a8] sm:$0xff]
    %v1912 = vld [vmem:[#allocation2 + $0x2b0] sm:$0xff]
    %v1913 = vld [vmem:[#allocation2 + $0x2b8] sm:$0xff]
    %v1914 = vld [vmem:[#allocation2 + $0x2c0] sm:$0xff]
    %v1915 = vld [vmem:[#allocation2 + $0x2c8] sm:$0xff]
    %v1916 = vld [vmem:[#allocation2 + $0x2d0] sm:$0xff]
    %v1917 = vld [vmem:[#allocation2 + $0x2d8] sm:$0xff]
    %v1918 = vld [vmem:[#allocation2 + $0x2e0] sm:$0xff]
    %v1919 = vld [vmem:[#allocation2 + $0x2e8] sm:$0xff]
    %v1920 = vld [vmem:[#allocation2 + $0x2f0] sm:$0xff]
    %v1921 = vld [vmem:[#allocation2 + $0x2f8] sm:$0xff]
    %v1922 = vld [vmem:[#allocation2 + $0x300] sm:$0xff]
    %v1923 = vld [vmem:[#allocation2 + $0x308] sm:$0xff]
    %v1924 = vld [vmem:[#allocation2 + $0x310] sm:$0xff]
    %v1925 = vld [vmem:[#allocation2 + $0x318] sm:$0xff]
    %v1926 = vld [vmem:[#allocation2 + $0x320] sm:$0xff]
    %v1927 = vld [vmem:[#allocation2 + $0x328] sm:$0xff]
    %v1928 = vld [vmem:[#allocation2 + $0x330] sm:$0xff]
    %v1929 = vld [vmem:[#allocation2 + $0x338] sm:$0xff]
    %v1930 = vld [vmem:[#allocation2 + $0x340] sm:$0xff]
    %v1931 = vld [vmem:[#allocation2 + $0x348] sm:$0xff]
    %v1932 = vld [vmem:[#allocation2 + $0x350] sm:$0xff]
    %v1933 = vld [vmem:[#allocation2 + $0x358] sm:$0xff]
    %v1934 = vld [vmem:[#allocation2 + $0x360] sm:$0xff]
    %v1935 = vld [vmem:[#allocation2 + $0x368] sm:$0xff]
    %v1936 = vld [vmem:[#allocation2 + $0x370] sm:$0xff]
    %v1937 = vld [vmem:[#allocation2 + $0x378] sm:$0xff]
    %v1938 = vld [vmem:[#allocation2 + $0x380] sm:$0xff]
    %v1939 = vld [vmem:[#allocation2 + $0x388] sm:$0xff]
    %v1940 = vld [vmem:[#allocation2 + $0x390] sm:$0xff]
    %v1941 = vld [vmem:[#allocation2 + $0x398] sm:$0xff]
    %v1942 = vld [vmem:[#allocation2 + $0x3a0] sm:$0xff]
    %v1943 = vld [vmem:[#allocation2 + $0x3a8] sm:$0xff]
    %v1944 = vld [vmem:[#allocation2 + $0x3b0] sm:$0xff]
    %v1945 = vld [vmem:[#allocation2 + $0x3b8] sm:$0xff]
    %v1946 = vld [vmem:[#allocation2 + $0x3c0] sm:$0xff]
    %v1947 = vld [vmem:[#allocation2 + $0x3c8] sm:$0xff]
    %v1948 = vld [vmem:[#allocation2 + $0x3d0] sm:$0xff]
    %v1949 = vld [vmem:[#allocation2 + $0x3d8] sm:$0xff]
    %v1950 = vld [vmem:[#allocation2 + $0x3e0] sm:$0xff]
    %v1951 = vld [vmem:[#allocation2 + $0x3e8] sm:$0xff]
    %v1952 = vld [vmem:[#allocation2 + $0x3f0] sm:$0xff]
    %v1953 = vld [vmem:[#allocation2 + $0x3f8] sm:$0xff]
    %1954 = vmatprep.subr.mxu0 %v1891
    %1955 = vmatpush1.msra.mxu0 %v1890
    %1956 = vmatprep.subr.mxu0 %v1895
    %1957 = vmatpush1.msra.mxu0 %v1894
    %1958 = vmatprep.subr.mxu0 %v1899
    %1959 = vmatpush1.msra.mxu0 %v1898
    %1960 = vmatprep.subr.mxu0 %v1903
    %1961 = vmatpush1.msra.mxu0 %v1902
    %1962 = vmatprep.subr.mxu0 %v1907
    %1963 = vmatpush1.msra.mxu0 %v1906
    %1964 = vmatprep.subr.mxu0 %v1911
    %1965 = vmatpush1.msra.mxu0 %v1910
    %1966 = vmatprep.subr.mxu0 %v1915
    %1967 = vmatpush1.msra.mxu0 %v1914
    %1968 = vmatprep.subr.mxu0 %v1919
    %1969 = vmatpush1.msra.mxu0 %v1918
    %1970 = vmatprep.subr.mxu0 %v1923
    %1971 = vmatpush1.msra.mxu0 %v1922
    %1972 = vmatprep.subr.mxu0 %v1927
    %1973 = vmatpush1.msra.mxu0 %v1926
    %1974 = vmatprep.subr.mxu0 %v1931
    %1975 = vmatpush1.msra.mxu0 %v1930
    %1976 = vmatprep.subr.mxu0 %v1935
    %1977 = vmatpush1.msra.mxu0 %v1934
    %1978 = vmatprep.subr.mxu0 %v1939
    %1979 = vmatpush1.msra.mxu0 %v1938
    %1980 = vmatprep.subr.mxu0 %v1943
    %1981 = vmatpush1.msra.mxu0 %v1942
    %1982 = vmatprep.subr.mxu0 %v1947
    %1983 = vmatpush1.msra.mxu0 %v1946
    %1984 = vmatprep.subr.mxu0 %v1951
    %1985 = vmatpush1.msra.mxu0 %v1950
    %1986 = vmatprep.subr.mxu0 0.0
    %1987 = vmatpush1.msra.mxu0 0.0
    %1988 = vmatprep.subr.mxu0 0.0
    %1989 = vmatpush1.msra.mxu0 0.0
    %1990 = vmatprep.subr.mxu0 0.0
    %1991 = vmatpush1.msra.mxu0 0.0
    %1992 = vmatprep.subr.mxu0 0.0
    %1993 = vmatpush1.msra.mxu0 0.0
    %1994 = vmatprep.subr.mxu0 0.0
    %1995 = vmatpush1.msra.mxu0 0.0
    %1996 = vmatprep.subr.mxu0 0.0
    %1997 = vmatpush1.msra.mxu0 0.0
    %1998 = vmatprep.subr.mxu0 0.0
    %1999 = vmatpush1.msra.mxu0 0.0
    %2000 = vmatprep.subr.mxu0 0.0
    %2001 = vmatpush1.msra.mxu0 0.0
    %2002 = vmatprep.subr.mxu0 0.0
    %2003 = vmatpush1.msra.mxu0 0.0
    %2004 = vmatprep.subr.mxu0 0.0
    %2005 = vmatpush1.msra.mxu0 0.0
    %2006 = vmatprep.subr.mxu0 0.0
    %2007 = vmatpush1.msra.mxu0 0.0
    %2008 = vmatprep.subr.mxu0 0.0
    %2009 = vmatpush1.msra.mxu0 0.0
    %2010 = vmatprep.subr.mxu0 0.0
    %2011 = vmatpush1.msra.mxu0 0.0
    %2012 = vmatprep.subr.mxu0 0.0
    %2013 = vmatpush1.msra.mxu0 0.0
    %2014 = vmatprep.subr.mxu0 0.0
    %2015 = vmatpush1.msra.mxu0 0.0
    %2016 = vmatprep.subr.mxu0 0.0
    %2017 = vmatpush1.msra.mxu0 0.0
    %2018 = vmatprep.mubr.f32.mxu0 0.0
    %2019 = vmatmul.mubr.f32.gmra.mrb[0].mxu0 %v1097
    %v2020 = vpop.f32.mrb[0].mxu0
    %v2021 = vadd.f32 0.0, %v2020
    %v2022 = vpop.f32.mrb[0].mxu0
    %v2023 = vadd.f32 0.0, %v2022
    %2024 = vmatprep.mubr.f32.mxu0 0.0
    %2025 = vmatmul.mubr.f32.gmra.mrb[0].mxu0 %v1201
    %v2026 = vpop.f32.mrb[0].mxu0
    %v2027 = vadd.f32 0.0, %v2026
    %v2028 = vpop.f32.mrb[0].mxu0
    %v2029 = vadd.f32 0.0, %v2028
    %2030 = vmatprep.mubr.f32.mxu0 0.0
    %2031 = vmatmul.mubr.f32.gmra.mrb[0].mxu0 %v1305
    %v2032 = vpop.f32.mrb[0].mxu0
    %v2033 = vadd.f32 0.0, %v2032
    %v2034 = vpop.f32.mrb[0].mxu0
    %v2035 = vadd.f32 0.0, %v2034
    %2036 = vmatprep.mubr.f32.mxu0 0.0
    %2037 = vmatmul.mubr.f32.gmra.mrb[0].mxu0 %v1409
    %v2038 = vpop.f32.mrb[0].mxu0
    %v2039 = vadd.f32 0.0, %v2038
    %v2040 = vpop.f32.mrb[0].mxu0
    %v2041 = vadd.f32 0.0, %v2040
    %2042 = vmatprep.mubr.f32.mxu0 0.0
    %2043 = vmatmul.mubr.f32.gmra.mrb[0].mxu0 %v1513
    %v2044 = vpop.f32.mrb[0].mxu0
    %v2045 = vadd.f32 0.0, %v2044
    %v2046 = vpop.f32.mrb[0].mxu0
    %v2047 = vadd.f32 0.0, %v2046
    %2048 = vmatprep.mubr.f32.mxu0 0.0
    %2049 = vmatmul.mubr.f32.gmra.mrb[0].mxu0 %v1617
    %v2050 = vpop.f32.mrb[0].mxu0
    %v2051 = vadd.f32 0.0, %v2050
    %v2052 = vpop.f32.mrb[0].mxu0
    %v2053 = vadd.f32 0.0, %v2052
    %2054 = vmatprep.mubr.f32.mxu0 0.0
    %2055 = vmatmul.mubr.f32.gmra.mrb[0].mxu0 %v1721
    %v2056 = vpop.f32.mrb[0].mxu0
    %v2057 = vadd.f32 0.0, %v2056
    %v2058 = vpop.f32.mrb[0].mxu0
    %v2059 = vadd.f32 0.0, %v2058
    %2060 = vmatprep.mubr.f32.mxu0 0.0
    %2061 = vmatmul.mubr.f32.gmra.mrb[0].mxu0 %v1825
    %v2062 = vpop.f32.mrb[0].mxu0
    %v2063 = vadd.f32 0.0, %v2062
    %v2064 = vpop.f32.mrb[0].mxu0
    %v2065 = vadd.f32 0.0, %v2064
    %2066 = vdwg.mxu0
    %2067 = vmatprep.subr.mxu0 %v1893
    %2068 = vmatpush1.msra.mxu0 %v1892
    %2069 = vmatprep.subr.mxu0 %v1897
    %2070 = vmatpush1.msra.mxu0 %v1896
    %2071 = vmatprep.subr.mxu0 %v1901
    %2072 = vmatpush1.msra.mxu0 %v1900
    %2073 = vmatprep.subr.mxu0 %v1905
    %2074 = vmatpush1.msra.mxu0 %v1904
    %2075 = vmatprep.subr.mxu0 %v1909
    %2076 = vmatpush1.msra.mxu0 %v1908
    %2077 = vmatprep.subr.mxu0 %v1913
    %2078 = vmatpush1.msra.mxu0 %v1912
    %2079 = vmatprep.subr.mxu0 %v1917
    %2080 = vmatpush1.msra.mxu0 %v1916
    %2081 = vmatprep.subr.mxu0 %v1921
    %2082 = vmatpush1.msra.mxu0 %v1920
    %2083 = vmatprep.subr.mxu0 %v1925
    %2084 = vmatpush1.msra.mxu0 %v1924
    %2085 = vmatprep.subr.mxu0 %v1929
    %2086 = vmatpush1.msra.mxu0 %v1928
    %2087 = vmatprep.subr.mxu0 %v1933
    %2088 = vmatpush1.msra.mxu0 %v1932
    %2089 = vmatprep.subr.mxu0 %v1937
    %2090 = vmatpush1.msra.mxu0 %v1936
    %2091 = vmatprep.subr.mxu0 %v1941
    %2092 = vmatpush1.msra.mxu0 %v1940
    %2093 = vmatprep.subr.mxu0 %v1945
    %2094 = vmatpush1.msra.mxu0 %v1944
    %2095 = vmatprep.subr.mxu0 %v1949
    %2096 = vmatpush1.msra.mxu0 %v1948
    %2097 = vmatprep.subr.mxu0 %v1953
    %2098 = vmatpush1.msra.mxu0 %v1952
    %2099 = vmatprep.subr.mxu0 0.0
    %2100 = vmatpush1.msra.mxu0 0.0
    %2101 = vmatprep.subr.mxu0 0.0
    %2102 = vmatpush1.msra.mxu0 0.0
    %2103 = vmatprep.subr.mxu0 0.0
    %2104 = vmatpush1.msra.mxu0 0.0
    %2105 = vmatprep.subr.mxu0 0.0
    %2106 = vmatpush1.msra.mxu0 0.0
    %2107 = vmatprep.subr.mxu0 0.0
    %2108 = vmatpush1.msra.mxu0 0.0
    %2109 = vmatprep.subr.mxu0 0.0
    %2110 = vmatpush1.msra.mxu0 0.0
    %2111 = vmatprep.subr.mxu0 0.0
    %2112 = vmatpush1.msra.mxu0 0.0
    %2113 = vmatprep.subr.mxu0 0.0
    %2114 = vmatpush1.msra.mxu0 0.0
    %2115 = vmatprep.subr.mxu0 0.0
    %2116 = vmatpush1.msra.mxu0 0.0
    %2117 = vmatprep.subr.mxu0 0.0
    %2118 = vmatpush1.msra.mxu0 0.0
    %2119 = vmatprep.subr.mxu0 0.0
    %2120 = vmatpush1.msra.mxu0 0.0
    %2121 = vmatprep.subr.mxu0 0.0
    %2122 = vmatpush1.msra.mxu0 0.0
    %2123 = vmatprep.subr.mxu0 0.0
    %2124 = vmatpush1.msra.mxu0 0.0
    %2125 = vmatprep.subr.mxu0 0.0
    %2126 = vmatpush1.msra.mxu0 0.0
    %2127 = vmatprep.subr.mxu0 0.0
    %2128 = vmatpush1.msra.mxu0 0.0
    %2129 = vmatprep.subr.mxu0 0.0
    %2130 = vmatpush1.msra.mxu0 0.0
    %2131 = vmatprep.mubr.f32.mxu0 0.0
    %2132 = vmatmul.mubr.f32.gmra.mrb[0].mxu0 %v1097
    %v2133 = vpop.f32.mrb[0].mxu0
    %v2134 = vadd.f32 0.0, %v2133
    %v2135 = vpop.f32.mrb[0].mxu0
    %v2136 = vadd.f32 0.0, %v2135
    %2137 = vmatprep.mubr.f32.mxu0 0.0
    %2138 = vmatmul.mubr.f32.gmra.mrb[0].mxu0 %v1201
    %v2139 = vpop.f32.mrb[0].mxu0
    %v2140 = vadd.f32 0.0, %v2139
    %v2141 = vpop.f32.mrb[0].mxu0
    %v2142 = vadd.f32 0.0, %v2141
    %2143 = vmatprep.mubr.f32.mxu0 0.0
    %2144 = vmatmul.mubr.f32.gmra.mrb[0].mxu0 %v1305
    %v2145 = vpop.f32.mrb[0].mxu0
    %v2146 = vadd.f32 0.0, %v2145
    %v2147 = vpop.f32.mrb[0].mxu0
    %v2148 = vadd.f32 0.0, %v2147
    %2149 = vmatprep.mubr.f32.mxu0 0.0
    %2150 = vmatmul.mubr.f32.gmra.mrb[0].mxu0 %v1409
    %v2151 = vpop.f32.mrb[0].mxu0
    %v2152 = vadd.f32 0.0, %v2151
    %v2153 = vpop.f32.mrb[0].mxu0
    %v2154 = vadd.f32 0.0, %v2153
    %2155 = vmatprep.mubr.f32.mxu0 0.0
    %2156 = vmatmul.mubr.f32.gmra.mrb[0].mxu0 %v1513
    %v2157 = vpop.f32.mrb[0].mxu0
    %v2158 = vadd.f32 0.0, %v2157
    %v2159 = vpop.f32.mrb[0].mxu0
    %v2160 = vadd.f32 0.0, %v2159
    %2161 = vmatprep.mubr.f32.mxu0 0.0
    %2162 = vmatmul.mubr.f32.gmra.mrb[0].mxu0 %v1617
    %v2163 = vpop.f32.mrb[0].mxu0
    %v2164 = vadd.f32 0.0, %v2163
    %v2165 = vpop.f32.mrb[0].mxu0
    %v2166 = vadd.f32 0.0, %v2165
    %2167 = vmatprep.mubr.f32.mxu0 0.0
    %2168 = vmatmul.mubr.f32.gmra.mrb[0].mxu0 %v1721
    %v2169 = vpop.f32.mrb[0].mxu0
    %v2170 = vadd.f32 0.0, %v2169
    %v2171 = vpop.f32.mrb[0].mxu0
    %v2172 = vadd.f32 0.0, %v2171
    %2173 = vmatprep.mubr.f32.mxu0 0.0
    %2174 = vmatmul.mubr.f32.gmra.mrb[0].mxu0 %v1825
    %v2175 = vpop.f32.mrb[0].mxu0
    %v2176 = vadd.f32 0.0, %v2175
    %v2177 = vpop.f32.mrb[0].mxu0
    %v2178 = vadd.f32 0.0, %v2177
    %2179 = vdwg.mxu0
    %2180 = vmatprep.subr.mxu0 %v1827
    %2181 = vmatpush1.msra.mxu0 %v1826
    %2182 = vmatprep.subr.mxu0 %v1831
    %2183 = vmatpush1.msra.mxu0 %v1830
    %2184 = vmatprep.subr.mxu0 %v1835
    %2185 = vmatpush1.msra.mxu0 %v1834
    %2186 = vmatprep.subr.mxu0 %v1839
    %2187 = vmatpush1.msra.mxu0 %v1838
    %2188 = vmatprep.subr.mxu0 %v1843
    %2189 = vmatpush1.msra.mxu0 %v1842
    %2190 = vmatprep.subr.mxu0 %v1847
    %2191 = vmatpush1.msra.mxu0 %v1846
    %2192 = vmatprep.subr.mxu0 %v1851
    %2193 = vmatpush1.msra.mxu0 %v1850
    %2194 = vmatprep.subr.mxu0 %v1855
    %2195 = vmatpush1.msra.mxu0 %v1854
    %2196 = vmatprep.subr.mxu0 %v1859
    %2197 = vmatpush1.msra.mxu0 %v1858
    %2198 = vmatprep.subr.mxu0 %v1863
    %2199 = vmatpush1.msra.mxu0 %v1862
    %2200 = vmatprep.subr.mxu0 %v1867
    %2201 = vmatpush1.msra.mxu0 %v1866
    %2202 = vmatprep.subr.mxu0 %v1871
    %2203 = vmatpush1.msra.mxu0 %v1870
    %2204 = vmatprep.subr.mxu0 %v1875
    %2205 = vmatpush1.msra.mxu0 %v1874
    %2206 = vmatprep.subr.mxu0 %v1879
    %2207 = vmatpush1.msra.mxu0 %v1878
    %2208 = vmatprep.subr.mxu0 %v1883
    %2209 = vmatpush1.msra.mxu0 %v1882
    %2210 = vmatprep.subr.mxu0 %v1887
    %2211 = vmatpush1.msra.mxu0 %v1886
    %2212 = vmatprep.subr.mxu0 0.0
    %2213 = vmatpush1.msra.mxu0 0.0
    %2214 = vmatprep.subr.mxu0 0.0
    %2215 = vmatpush1.msra.mxu0 0.0
    %2216 = vmatprep.subr.mxu0 0.0
    %2217 = vmatpush1.msra.mxu0 0.0
    %2218 = vmatprep.subr.mxu0 0.0
    %2219 = vmatpush1.msra.mxu0 0.0
    %2220 = vmatprep.subr.mxu0 0.0
    %2221 = vmatpush1.msra.mxu0 0.0
    %2222 = vmatprep.subr.mxu0 0.0
    %2223 = vmatpush1.msra.mxu0 0.0
    %2224 = vmatprep.subr.mxu0 0.0
    %2225 = vmatpush1.msra.mxu0 0.0
    %2226 = vmatprep.subr.mxu0 0.0
    %2227 = vmatpush1.msra.mxu0 0.0
    %2228 = vmatprep.subr.mxu0 0.0
    %2229 = vmatpush1.msra.mxu0 0.0
    %2230 = vmatprep.subr.mxu0 0.0
    %2231 = vmatpush1.msra.mxu0 0.0
    %2232 = vmatprep.subr.mxu0 0.0
    %2233 = vmatpush1.msra.mxu0 0.0
    %2234 = vmatprep.subr.mxu0 0.0
    %2235 = vmatpush1.msra.mxu0 0.0
    %2236 = vmatprep.subr.mxu0 0.0
    %2237 = vmatpush1.msra.mxu0 0.0
    %2238 = vmatprep.subr.mxu0 0.0
    %2239 = vmatpush1.msra.mxu0 0.0
    %2240 = vmatprep.subr.mxu0 0.0
    %2241 = vmatpush1.msra.mxu0 0.0
    %2242 = vmatprep.subr.mxu0 0.0
    %2243 = vmatpush1.msra.mxu0 0.0
    %2244 = vmatprep.mubr.f32.mxu0 0.0
    %2245 = vmatmul.mubr.f32.gmra.mrb[0].mxu0 %v272
    %v2246 = vpop.f32.mrb[0].mxu0
    %v2247 = vadd.f32 %v2021, %v2246
    %v2248 = vpop.f32.mrb[0].mxu0
    %v2249 = vadd.f32 %v2023, %v2248
    %2250 = vmatprep.mubr.f32.mxu0 0.0
    %2251 = vmatmul.mubr.f32.gmra.mrb[0].mxu0 %v375
    %v2252 = vpop.f32.mrb[0].mxu0
    %v2253 = vadd.f32 %v2027, %v2252
    %v2254 = vpop.f32.mrb[0].mxu0
    %v2255 = vadd.f32 %v2029, %v2254
    %2256 = vmatprep.mubr.f32.mxu0 0.0
    %2257 = vmatmul.mubr.f32.gmra.mrb[0].mxu0 %v478
    %v2258 = vpop.f32.mrb[0].mxu0
    %v2259 = vadd.f32 %v2033, %v2258
    %v2260 = vpop.f32.mrb[0].mxu0
    %v2261 = vadd.f32 %v2035, %v2260
    %2262 = vmatprep.mubr.f32.mxu0 0.0
    %2263 = vmatmul.mubr.f32.gmra.mrb[0].mxu0 %v581
    %v2264 = vpop.f32.mrb[0].mxu0
    %v2265 = vadd.f32 %v2039, %v2264
    %v2266 = vpop.f32.mrb[0].mxu0
    %v2267 = vadd.f32 %v2041, %v2266
    %2268 = vmatprep.mubr.f32.mxu0 0.0
    %2269 = vmatmul.mubr.f32.gmra.mrb[0].mxu0 %v684
    %v2270 = vpop.f32.mrb[0].mxu0
    %v2271 = vadd.f32 %v2045, %v2270
    %v2272 = vpop.f32.mrb[0].mxu0
    %v2273 = vadd.f32 %v2047, %v2272
    %2274 = vmatprep.mubr.f32.mxu0 0.0
    %2275 = vmatmul.mubr.f32.gmra.mrb[0].mxu0 %v787
    %v2276 = vpop.f32.mrb[0].mxu0
    %v2277 = vadd.f32 %v2051, %v2276
    %v2278 = vpop.f32.mrb[0].mxu0
    %v2279 = vadd.f32 %v2053, %v2278
    %2280 = vmatprep.mubr.f32.mxu0 0.0
    %2281 = vmatmul.mubr.f32.gmra.mrb[0].mxu0 %v890
    %v2282 = vpop.f32.mrb[0].mxu0
    %v2283 = vadd.f32 %v2057, %v2282
    %v2284 = vpop.f32.mrb[0].mxu0
    %v2285 = vadd.f32 %v2059, %v2284
    %2286 = vmatprep.mubr.f32.mxu0 0.0
    %2287 = vmatmul.mubr.f32.gmra.mrb[0].mxu0 %v993
    %v2288 = vpop.f32.mrb[0].mxu0
    %v2289 = vadd.f32 %v2063, %v2288
    %v2290 = vpop.f32.mrb[0].mxu0
    %v2291 = vadd.f32 %v2065, %v2290
    %2292 = vdwg.mxu0
    %2293 = vmatprep.subr.mxu0 %v1829
    %2294 = vmatpush1.msra.mxu0 %v1828
    %2295 = vmatprep.subr.mxu0 %v1833
    %2296 = vmatpush1.msra.mxu0 %v1832
    %2297 = vmatprep.subr.mxu0 %v1837
    %2298 = vmatpush1.msra.mxu0 %v1836
    %2299 = vmatprep.subr.mxu0 %v1841
    %2300 = vmatpush1.msra.mxu0 %v1840
    %2301 = vmatprep.subr.mxu0 %v1845
    %2302 = vmatpush1.msra.mxu0 %v1844
    %2303 = vmatprep.subr.mxu0 %v1849
    %2304 = vmatpush1.msra.mxu0 %v1848
    %2305 = vmatprep.subr.mxu0 %v1853
    %2306 = vmatpush1.msra.mxu0 %v1852
    %2307 = vmatprep.subr.mxu0 %v1857
    %2308 = vmatpush1.msra.mxu0 %v1856
    %2309 = vmatprep.subr.mxu0 %v1861
    %2310 = vmatpush1.msra.mxu0 %v1860
    %2311 = vmatprep.subr.mxu0 %v1865
    %2312 = vmatpush1.msra.mxu0 %v1864
    %2313 = vmatprep.subr.mxu0 %v1869
    %2314 = vmatpush1.msra.mxu0 %v1868
    %2315 = vmatprep.subr.mxu0 %v1873
    %2316 = vmatpush1.msra.mxu0 %v1872
    %2317 = vmatprep.subr.mxu0 %v1877
    %2318 = vmatpush1.msra.mxu0 %v1876
    %2319 = vmatprep.subr.mxu0 %v1881
    %2320 = vmatpush1.msra.mxu0 %v1880
    %2321 = vmatprep.subr.mxu0 %v1885
    %2322 = vmatpush1.msra.mxu0 %v1884
    %2323 = vmatprep.subr.mxu0 %v1889
    %2324 = vmatpush1.msra.mxu0 %v1888
    %2325 = vmatprep.subr.mxu0 0.0
    %2326 = vmatpush1.msra.mxu0 0.0
    %2327 = vmatprep.subr.mxu0 0.0
    %2328 = vmatpush1.msra.mxu0 0.0
    %2329 = vmatprep.subr.mxu0 0.0
    %2330 = vmatpush1.msra.mxu0 0.0
    %2331 = vmatprep.subr.mxu0 0.0
    %2332 = vmatpush1.msra.mxu0 0.0
    %2333 = vmatprep.subr.mxu0 0.0
    %2334 = vmatpush1.msra.mxu0 0.0
    %2335 = vmatprep.subr.mxu0 0.0
    %2336 = vmatpush1.msra.mxu0 0.0
    %2337 = vmatprep.subr.mxu0 0.0
    %2338 = vmatpush1.msra.mxu0 0.0
    %2339 = vmatprep.subr.mxu0 0.0
    %2340 = vmatpush1.msra.mxu0 0.0
    %2341 = vmatprep.subr.mxu0 0.0
    %2342 = vmatpush1.msra.mxu0 0.0
    %2343 = vmatprep.subr.mxu0 0.0
    %2344 = vmatpush1.msra.mxu0 0.0
    %2345 = vmatprep.subr.mxu0 0.0
    %2346 = vmatpush1.msra.mxu0 0.0
    %2347 = vmatprep.subr.mxu0 0.0
    %2348 = vmatpush1.msra.mxu0 0.0
    %2349 = vmatprep.subr.mxu0 0.0
    %2350 = vmatpush1.msra.mxu0 0.0
    %2351 = vmatprep.subr.mxu0 0.0
    %2352 = vmatpush1.msra.mxu0 0.0
    %2353 = vmatprep.subr.mxu0 0.0
    %2354 = vmatpush1.msra.mxu0 0.0
    %2355 = vmatprep.subr.mxu0 0.0
    %2356 = vmatpush1.msra.mxu0 0.0
    %2357 = vmatprep.mubr.f32.mxu0 0.0
    %2358 = vmatmul.mubr.f32.gmra.mrb[0].mxu0 %v272
    %v2359 = vpop.f32.mrb[0].mxu0
    %v2360 = vadd.f32 %v2134, %v2359
    %v2361 = vpop.f32.mrb[0].mxu0
    %v2362 = vadd.f32 %v2136, %v2361
    %2363 = vmatprep.mubr.f32.mxu0 0.0
    %2364 = vmatmul.mubr.f32.gmra.mrb[0].mxu0 %v375
    %v2365 = vpop.f32.mrb[0].mxu0
    %v2366 = vadd.f32 %v2140, %v2365
    %v2367 = vpop.f32.mrb[0].mxu0
    %v2368 = vadd.f32 %v2142, %v2367
    %2369 = vmatprep.mubr.f32.mxu0 0.0
    %2370 = vmatmul.mubr.f32.gmra.mrb[0].mxu0 %v478
    %v2371 = vpop.f32.mrb[0].mxu0
    %v2372 = vadd.f32 %v2146, %v2371
    %v2373 = vpop.f32.mrb[0].mxu0
    %v2374 = vadd.f32 %v2148, %v2373
    %2375 = vmatprep.mubr.f32.mxu0 0.0
    %2376 = vmatmul.mubr.f32.gmra.mrb[0].mxu0 %v581
    %v2377 = vpop.f32.mrb[0].mxu0
    %v2378 = vadd.f32 %v2152, %v2377
    %v2379 = vpop.f32.mrb[0].mxu0
    %v2380 = vadd.f32 %v2154, %v2379
    %2381 = vmatprep.mubr.f32.mxu0 0.0
    %2382 = vmatmul.mubr.f32.gmra.mrb[0].mxu0 %v684
    %v2383 = vpop.f32.mrb[0].mxu0
    %v2384 = vadd.f32 %v2158, %v2383
    %v2385 = vpop.f32.mrb[0].mxu0
    %v2386 = vadd.f32 %v2160, %v2385
    %2387 = vmatprep.mubr.f32.mxu0 0.0
    %2388 = vmatmul.mubr.f32.gmra.mrb[0].mxu0 %v787
    %v2389 = vpop.f32.mrb[0].mxu0
    %v2390 = vadd.f32 %v2164, %v2389
    %v2391 = vpop.f32.mrb[0].mxu0
    %v2392 = vadd.f32 %v2166, %v2391
    %2393 = vmatprep.mubr.f32.mxu0 0.0
    %2394 = vmatmul.mubr.f32.gmra.mrb[0].mxu0 %v890
    %v2395 = vpop.f32.mrb[0].mxu0
    %v2396 = vadd.f32 %v2170, %v2395
    %v2397 = vpop.f32.mrb[0].mxu0
    %v2398 = vadd.f32 %v2172, %v2397
    %2399 = vmatprep.mubr.f32.mxu0 0.0
    %2400 = vmatmul.mubr.f32.gmra.mrb[0].mxu0 %v993
    %v2401 = vpop.f32.mrb[0].mxu0
    %v2402 = vadd.f32 %v2176, %v2401
    %v2403 = vpop.f32.mrb[0].mxu0
    %v2404 = vadd.f32 %v2178, %v2403
    %2405 = vdwg.mxu0
    %v2406 = vld [vmem:[%s3] sm:$0xf]
    %v2408 = vlaneseq
    %v2409 = vshrl.u32 %v2408, 7
    %v2410 = vsub.s32 0, %v2409
    %v2411 = vrot.slane %v2406, %v2410
    %v2412 = vlaneseq
    %v2413 = vshrl.u32 %v2412, 7
    %v2414 = vsub.s32 1, %v2413
    %v2415 = vrot.slane %v2406, %v2414
    %v2416 = vlaneseq
    %v2417 = vshrl.u32 %v2416, 7
    %v2418 = vsub.s32 2, %v2417
    %v2419 = vrot.slane %v2406, %v2418
    %v2420 = vlaneseq
    %v2421 = vshrl.u32 %v2420, 7
    %v2422 = vsub.s32 3, %v2421
    %v2423 = vrot.slane %v2406, %v2422
    %v2428 = vadd.f32 %v2247, %v2411
    %v2429 = vadd.f32 %v2249, %v2415
    %v2430 = vadd.f32 %v2360, %v2419
    %v2431 = vadd.f32 %v2362, %v2423
    %v2432 = vadd.f32 %v2253, %v2411
    %v2433 = vadd.f32 %v2255, %v2415
    %v2434 = vadd.f32 %v2366, %v2419
    %v2435 = vadd.f32 %v2368, %v2423
    %v2436 = vadd.f32 %v2259, %v2411
    %v2437 = vadd.f32 %v2261, %v2415
    %v2438 = vadd.f32 %v2372, %v2419
    %v2439 = vadd.f32 %v2374, %v2423
    %v2440 = vadd.f32 %v2265, %v2411
    %v2441 = vadd.f32 %v2267, %v2415
    %v2442 = vadd.f32 %v2378, %v2419
    %v2443 = vadd.f32 %v2380, %v2423
    %v2444 = vadd.f32 %v2271, %v2411
    %v2445 = vadd.f32 %v2273, %v2415
    %v2446 = vadd.f32 %v2384, %v2419
    %v2447 = vadd.f32 %v2386, %v2423
    %v2448 = vadd.f32 %v2277, %v2411
    %v2449 = vadd.f32 %v2279, %v2415
    %v2450 = vadd.f32 %v2390, %v2419
    %v2451 = vadd.f32 %v2392, %v2423
    %v2452 = vadd.f32 %v2283, %v2411
    %v2453 = vadd.f32 %v2285, %v2415
    %v2454 = vadd.f32 %v2396, %v2419
    %v2455 = vadd.f32 %v2398, %v2423
    %v2456 = vadd.f32 %v2289, %v2411
    %v2457 = vadd.f32 %v2291, %v2415
    %v2458 = vadd.f32 %v2402, %v2419
    %v2459 = vadd.f32 %v2404, %v2423
    %v2460 = vtanh.pop %v2428
    %v2461 = vtanh.pop %v2432
    %v2462 = vtanh.pop %v2436
    %v2463 = vtanh.pop %v2440
    %v2464 = vtanh.pop %v2444
    %v2465 = vtanh.pop %v2448
    %v2466 = vtanh.pop %v2452
    %v2467 = vtanh.pop %v2456
    %v2468 = vmul.f32 %v2429, 0.5
    %v2469 = vmul.f32 %v2433, 0.5
    %v2470 = vmul.f32 %v2437, 0.5
    %v2471 = vmul.f32 %v2441, 0.5
    %v2472 = vmul.f32 %v2445, 0.5
    %v2473 = vmul.f32 %v2449, 0.5
    %v2474 = vmul.f32 %v2453, 0.5
    %v2475 = vmul.f32 %v2457, 0.5
    %v2476 = vtanh.pop %v2468
    %v2477 = vtanh.pop %v2469
    %v2478 = vtanh.pop %v2470
    %v2479 = vtanh.pop %v2471
    %v2480 = vtanh.pop %v2472
    %v2481 = vtanh.pop %v2473
    %v2482 = vtanh.pop %v2474
    %v2483 = vtanh.pop %v2475
    %v2484 = vadd.f32 %v2476, 1.0
    %v2485 = vadd.f32 %v2477, 1.0
    %v2486 = vadd.f32 %v2478, 1.0
    %v2487 = vadd.f32 %v2479, 1.0
    %v2488 = vadd.f32 %v2480, 1.0
    %v2489 = vadd.f32 %v2481, 1.0
    %v2490 = vadd.f32 %v2482, 1.0
    %v2491 = vadd.f32 %v2483, 1.0
    %v2492 = vmul.f32 %v2484, 0.5
    %v2493 = vmul.f32 %v2485, 0.5
    %v2494 = vmul.f32 %v2486, 0.5
    %v2495 = vmul.f32 %v2487, 0.5
    %v2496 = vmul.f32 %v2488, 0.5
    %v2497 = vmul.f32 %v2489, 0.5
    %v2498 = vmul.f32 %v2490, 0.5
    %v2499 = vmul.f32 %v2491, 0.5
    %v2500 = vand.u32 2147483647, %v2430
    %vm2501 = vcmp.le.f32.partialorder %v2500, 0.7853982
    %vm2502 = vcmp.lt.s32.totalorder %v2430, 0
    %v2503 = vand.u32 %v2430, 2139095040
    %v2504 = vshrl.u32 %v2503, 23
    %v2505 = vsub.s32 %v2504, 127
    %v2506 = vand.u32 2147483647, %v2430
    %v2507 = vand.u32 %v2506, 8388607
    %v2508 = vor.u32 %v2507, 8388608
    %v2509 = vsub.s32 0, %v2508
    %v2510 = vadd.s32 %v2505, 1
    %vm2511 = vcmp.gt.s32.totalorder %v2510, 0
    %v2512 = vsel %vm2511, %v2510, 0
    %v2513 = vshrl.u32 %v2512, 5
    %v2514 = vand.u32 %v2512, 31
    %v2515 = vsub.s32 32, %v2514
    %v2516 = vshrl.u32 683565275, %v2515
    %v2517 = vshll.u32 683565275, %v2514
    %v2518 = vshrl.u32 2475754826, %v2515
    %v2519 = vor.u32 %v2517, %v2518
    %v2520 = vshll.u32 2475754826, %v2514
    %v2521 = vshrl.u32 2131351028, %v2515
    %v2522 = vor.u32 %v2520, %v2521
    %v2523 = vshll.u32 2131351028, %v2514
    %v2524 = vshrl.u32 2102212464, %v2515
    %v2525 = vor.u32 %v2523, %v2524
    %v2526 = vshll.u32 2102212464, %v2514
    %v2527 = vshrl.u32 920167782, %v2515
    %v2528 = vor.u32 %v2526, %v2527
    %v2529 = vshll.u32 920167782, %v2514
    %v2530 = vshrl.u32 1326507024, %v2515
    %v2531 = vor.u32 %v2529, %v2530
    %vm2532 = vcmp.lt.s32.totalorder %v2513, 1
    %vm2533 = vcmp.lt.s32.totalorder %v2513, 2
    %vm2534 = vcmp.lt.s32.totalorder %v2513, 3
    %vm2535 = vcmp.lt.s32.totalorder %v2513, 4
    %v2536 = vsel %vm2532, %v2516, %v2519
    %v2537 = vsel %vm2535, %v2525, 2102212464
    %v2538 = vsel %vm2534, %v2522, %v2537
    %v2539 = vsel %vm2533, %v2536, %v2538
    %v2540 = vsel %vm2532, %v2519, %v2522
    %v2541 = vsel %vm2535, %v2528, 920167782
    %v2542 = vsel %vm2534, %v2525, %v2541
    %v2543 = vsel %vm2533, %v2540, %v2542
    %v2544 = vsel %vm2532, %v2522, %v2525
    %v2545 = vsel %vm2535, %v2531, 1326507024
    %v2546 = vsel %vm2534, %v2528, %v2545
    %v2547 = vsel %vm2533, %v2544, %v2546
    %v2548 = vshll.u32 %v2508, 8
    %v2549 = vmul.u32.u64.compose %v2548, %v2547
    %v2550 = vextract.low.u32 %v2549
    %v2551 = vextract.high.u32 %v2549
    %v2552 = vmul.u32.u64.compose %v2548, %v2543
    %v2553 = vextract.low.u32 %v2552
    %v2554 = vextract.high.u32 %v2552
    %v2555 = vmul.u32 %v2548, %v2539
    %v2556 = vadd.s32 %v2551, %v2553
    %vm2557 = vc.u32 %v2551, %v2553
    %v2558 = vadd.s32 %v2554, 1
    %v2559 = vsel %vm2557, %v2558, %v2554
    %v2560 = vadd.s32 %v2555, %v2559
    %v2561 = vadd.s32 %v2560, 536870912
    %v2562 = vshrl.u32 %v2561, 30
    %v2563 = vshll.u32 %v2562, 30
    %v2564 = vsub.s32 %v2560, %v2563
    %vm2565 = vcmp.lt.s32.totalorder %v2564, 0
    %v2566 = vsub.s32 0, %v2564
    %v2567 = vsel %vm2565, %v2566, %v2564
    %v2568 = vclz %v2567
    %v2569 = vsub.s32 %v2568, 2
    %vm2570 = vcmp.gt.s32.totalorder 0, %v2569
    %v2571 = vsel %vm2570, 0, %v2569
    %v2572 = vsub.s32 32, %v2571
    %v2573 = vshll.u32 %v2564, %v2571
    %v2574 = vshrl.u32 %v2556, %v2572
    %v2575 = vor.u32 %v2573, %v2574
    %v2576 = vsub.s32 4294967266, %v2571
    %v2577 = vadd.s32 %v2576, 127
    %v2578 = vshll.u32 %v2577, 23
    %v2579 = vor.u32 4788187, %v2578
    %v2580 = vand.u32 2147483647, %v2579
    %v2582 = vcvt.s32.f32 %v2575
    %v2583 = vmul.f32 %v2582, %v2580
    %v2584 = vxor.u32 %v2583, 2147483648
    %v2585 = vsel %vm2502, %v2584, %v2583
    %v2586 = vsub.s32 4, %v2562
    %v2587 = vsel %vm2502, %v2586, %v2562
    %v2588 = vsel %vm2501, %v2430, %v2585
    %v2589 = vsel %vm2501, 0, %v2587
    %v2590 = vcosq.f32.pop %v2588
    %v2591 = vsinq.f32.pop %v2588
    %vm2592 = vweird.f32 %v2430
    %v2593 = vadd.s32 %v2589, 3
    %v2594 = vand.u32 %v2593, 3
    %vm2595 = vcmp.lt.s32.totalorder %v2594, 2
    %vm2596 = vcmp.eq.s32.totalorder %v2594, 0
    %v2597 = vxor.u32 %v2591, 2147483648
    %v2598 = vsel %vm2596, %v2590, %v2597
    %vm2599 = vcmp.eq.s32.totalorder %v2594, 2
    %v2600 = vxor.u32 %v2590, 2147483648
    %v2601 = vsel %vm2599, %v2600, %v2591
    %v2602 = vsel %vm2595, %v2598, %v2601
    %v2603 = vsel %vm2592, nan, %v2602
    %v2604 = vand.u32 2147483647, %v2434
    %vm2605 = vcmp.le.f32.partialorder %v2604, 0.7853982
    %vm2606 = vcmp.lt.s32.totalorder %v2434, 0
    %v2607 = vand.u32 %v2434, 2139095040
    %v2608 = vshrl.u32 %v2607, 23
    %v2609 = vsub.s32 %v2608, 127
    %v2610 = vand.u32 2147483647, %v2434
    %v2611 = vand.u32 %v2610, 8388607
    %v2612 = vor.u32 %v2611, 8388608
    %v2613 = vsub.s32 0, %v2612
    %v2614 = vadd.s32 %v2609, 1
    %vm2615 = vcmp.gt.s32.totalorder %v2614, 0
    %v2616 = vsel %vm2615, %v2614, 0
    %v2617 = vshrl.u32 %v2616, 5
    %v2618 = vand.u32 %v2616, 31
    %v2619 = vsub.s32 32, %v2618
    %v2620 = vshrl.u32 683565275, %v2619
    %v2621 = vshll.u32 683565275, %v2618
    %v2622 = vshrl.u32 2475754826, %v2619
    %v2623 = vor.u32 %v2621, %v2622
    %v2624 = vshll.u32 2475754826, %v2618
    %v2625 = vshrl.u32 2131351028, %v2619
    %v2626 = vor.u32 %v2624, %v2625
    %v2627 = vshll.u32 2131351028, %v2618
    %v2628 = vshrl.u32 2102212464, %v2619
    %v2629 = vor.u32 %v2627, %v2628
    %v2630 = vshll.u32 2102212464, %v2618
    %v2631 = vshrl.u32 920167782, %v2619
    %v2632 = vor.u32 %v2630, %v2631
    %v2633 = vshll.u32 920167782, %v2618
    %v2634 = vshrl.u32 1326507024, %v2619
    %v2635 = vor.u32 %v2633, %v2634
    %vm2636 = vcmp.lt.s32.totalorder %v2617, 1
    %vm2637 = vcmp.lt.s32.totalorder %v2617, 2
    %vm2638 = vcmp.lt.s32.totalorder %v2617, 3
    %vm2639 = vcmp.lt.s32.totalorder %v2617, 4
    %v2640 = vsel %vm2636, %v2620, %v2623
    %v2641 = vsel %vm2639, %v2629, 2102212464
    %v2642 = vsel %vm2638, %v2626, %v2641
    %v2643 = vsel %vm2637, %v2640, %v2642
    %v2644 = vsel %vm2636, %v2623, %v2626
    %v2645 = vsel %vm2639, %v2632, 920167782
    %v2646 = vsel %vm2638, %v2629, %v2645
    %v2647 = vsel %vm2637, %v2644, %v2646
    %v2648 = vsel %vm2636, %v2626, %v2629
    %v2649 = vsel %vm2639, %v2635, 1326507024
    %v2650 = vsel %vm2638, %v2632, %v2649
    %v2651 = vsel %vm2637, %v2648, %v2650
    %v2652 = vshll.u32 %v2612, 8
    %v2653 = vmul.u32.u64.compose %v2652, %v2651
    %v2654 = vextract.low.u32 %v2653
    %v2655 = vextract.high.u32 %v2653
    %v2656 = vmul.u32.u64.compose %v2652, %v2647
    %v2657 = vextract.low.u32 %v2656
    %v2658 = vextract.high.u32 %v2656
    %v2659 = vmul.u32 %v2652, %v2643
    %v2660 = vadd.s32 %v2655, %v2657
    %vm2661 = vc.u32 %v2655, %v2657
    %v2662 = vadd.s32 %v2658, 1
    %v2663 = vsel %vm2661, %v2662, %v2658
    %v2664 = vadd.s32 %v2659, %v2663
    %v2665 = vadd.s32 %v2664, 536870912
    %v2666 = vshrl.u32 %v2665, 30
    %v2667 = vshll.u32 %v2666, 30
    %v2668 = vsub.s32 %v2664, %v2667
    %vm2669 = vcmp.lt.s32.totalorder %v2668, 0
    %v2670 = vsub.s32 0, %v2668
    %v2671 = vsel %vm2669, %v2670, %v2668
    %v2672 = vclz %v2671
    %v2673 = vsub.s32 %v2672, 2
    %vm2674 = vcmp.gt.s32.totalorder 0, %v2673
    %v2675 = vsel %vm2674, 0, %v2673
    %v2676 = vsub.s32 32, %v2675
    %v2677 = vshll.u32 %v2668, %v2675
    %v2678 = vshrl.u32 %v2660, %v2676
    %v2679 = vor.u32 %v2677, %v2678
    %v2680 = vsub.s32 4294967266, %v2675
    %v2681 = vadd.s32 %v2680, 127
    %v2682 = vshll.u32 %v2681, 23
    %v2683 = vor.u32 4788187, %v2682
    %v2684 = vand.u32 2147483647, %v2683
    %v2686 = vcvt.s32.f32 %v2679
    %v2687 = vmul.f32 %v2686, %v2684
    %v2688 = vxor.u32 %v2687, 2147483648
    %v2689 = vsel %vm2606, %v2688, %v2687
    %v2690 = vsub.s32 4, %v2666
    %v2691 = vsel %vm2606, %v2690, %v2666
    %v2692 = vsel %vm2605, %v2434, %v2689
    %v2693 = vsel %vm2605, 0, %v2691
    %v2694 = vcosq.f32.pop %v2692
    %v2695 = vsinq.f32.pop %v2692
    %vm2696 = vweird.f32 %v2434
    %v2697 = vadd.s32 %v2693, 3
    %v2698 = vand.u32 %v2697, 3
    %vm2699 = vcmp.lt.s32.totalorder %v2698, 2
    %vm2700 = vcmp.eq.s32.totalorder %v2698, 0
    %v2701 = vxor.u32 %v2695, 2147483648
    %v2702 = vsel %vm2700, %v2694, %v2701
    %vm2703 = vcmp.eq.s32.totalorder %v2698, 2
    %v2704 = vxor.u32 %v2694, 2147483648
    %v2705 = vsel %vm2703, %v2704, %v2695
    %v2706 = vsel %vm2699, %v2702, %v2705
    %v2707 = vsel %vm2696, nan, %v2706
    %v2708 = vand.u32 2147483647, %v2438
    %vm2709 = vcmp.le.f32.partialorder %v2708, 0.7853982
    %vm2710 = vcmp.lt.s32.totalorder %v2438, 0
    %v2711 = vand.u32 %v2438, 2139095040
    %v2712 = vshrl.u32 %v2711, 23
    %v2713 = vsub.s32 %v2712, 127
    %v2714 = vand.u32 2147483647, %v2438
    %v2715 = vand.u32 %v2714, 8388607
    %v2716 = vor.u32 %v2715, 8388608
    %v2717 = vsub.s32 0, %v2716
    %v2718 = vadd.s32 %v2713, 1
    %vm2719 = vcmp.gt.s32.totalorder %v2718, 0
    %v2720 = vsel %vm2719, %v2718, 0
    %v2721 = vshrl.u32 %v2720, 5
    %v2722 = vand.u32 %v2720, 31
    %v2723 = vsub.s32 32, %v2722
    %v2724 = vshrl.u32 683565275, %v2723
    %v2725 = vshll.u32 683565275, %v2722
    %v2726 = vshrl.u32 2475754826, %v2723
    %v2727 = vor.u32 %v2725, %v2726
    %v2728 = vshll.u32 2475754826, %v2722
    %v2729 = vshrl.u32 2131351028, %v2723
    %v2730 = vor.u32 %v2728, %v2729
    %v2731 = vshll.u32 2131351028, %v2722
    %v2732 = vshrl.u32 2102212464, %v2723
    %v2733 = vor.u32 %v2731, %v2732
    %v2734 = vshll.u32 2102212464, %v2722
    %v2735 = vshrl.u32 920167782, %v2723
    %v2736 = vor.u32 %v2734, %v2735
    %v2737 = vshll.u32 920167782, %v2722
    %v2738 = vshrl.u32 1326507024, %v2723
    %v2739 = vor.u32 %v2737, %v2738
    %vm2740 = vcmp.lt.s32.totalorder %v2721, 1
    %vm2741 = vcmp.lt.s32.totalorder %v2721, 2
    %vm2742 = vcmp.lt.s32.totalorder %v2721, 3
    %vm2743 = vcmp.lt.s32.totalorder %v2721, 4
    %v2744 = vsel %vm2740, %v2724, %v2727
    %v2745 = vsel %vm2743, %v2733, 2102212464
    %v2746 = vsel %vm2742, %v2730, %v2745
    %v2747 = vsel %vm2741, %v2744, %v2746
    %v2748 = vsel %vm2740, %v2727, %v2730
    %v2749 = vsel %vm2743, %v2736, 920167782
    %v2750 = vsel %vm2742, %v2733, %v2749
    %v2751 = vsel %vm2741, %v2748, %v2750
    %v2752 = vsel %vm2740, %v2730, %v2733
    %v2753 = vsel %vm2743, %v2739, 1326507024
    %v2754 = vsel %vm2742, %v2736, %v2753
    %v2755 = vsel %vm2741, %v2752, %v2754
    %v2756 = vshll.u32 %v2716, 8
    %v2757 = vmul.u32.u64.compose %v2756, %v2755
    %v2758 = vextract.low.u32 %v2757
    %v2759 = vextract.high.u32 %v2757
    %v2760 = vmul.u32.u64.compose %v2756, %v2751
    %v2761 = vextract.low.u32 %v2760
    %v2762 = vextract.high.u32 %v2760
    %v2763 = vmul.u32 %v2756, %v2747
    %v2764 = vadd.s32 %v2759, %v2761
    %vm2765 = vc.u32 %v2759, %v2761
    %v2766 = vadd.s32 %v2762, 1
    %v2767 = vsel %vm2765, %v2766, %v2762
    %v2768 = vadd.s32 %v2763, %v2767
    %v2769 = vadd.s32 %v2768, 536870912
    %v2770 = vshrl.u32 %v2769, 30
    %v2771 = vshll.u32 %v2770, 30
    %v2772 = vsub.s32 %v2768, %v2771
    %vm2773 = vcmp.lt.s32.totalorder %v2772, 0
    %v2774 = vsub.s32 0, %v2772
    %v2775 = vsel %vm2773, %v2774, %v2772
    %v2776 = vclz %v2775
    %v2777 = vsub.s32 %v2776, 2
    %vm2778 = vcmp.gt.s32.totalorder 0, %v2777
    %v2779 = vsel %vm2778, 0, %v2777
    %v2780 = vsub.s32 32, %v2779
    %v2781 = vshll.u32 %v2772, %v2779
    %v2782 = vshrl.u32 %v2764, %v2780
    %v2783 = vor.u32 %v2781, %v2782
    %v2784 = vsub.s32 4294967266, %v2779
    %v2785 = vadd.s32 %v2784, 127
    %v2786 = vshll.u32 %v2785, 23
    %v2787 = vor.u32 4788187, %v2786
    %v2788 = vand.u32 2147483647, %v2787
    %v2790 = vcvt.s32.f32 %v2783
    %v2791 = vmul.f32 %v2790, %v2788
    %v2792 = vxor.u32 %v2791, 2147483648
    %v2793 = vsel %vm2710, %v2792, %v2791
    %v2794 = vsub.s32 4, %v2770
    %v2795 = vsel %vm2710, %v2794, %v2770
    %v2796 = vsel %vm2709, %v2438, %v2793
    %v2797 = vsel %vm2709, 0, %v2795
    %v2798 = vcosq.f32.pop %v2796
    %v2799 = vsinq.f32.pop %v2796
    %vm2800 = vweird.f32 %v2438
    %v2801 = vadd.s32 %v2797, 3
    %v2802 = vand.u32 %v2801, 3
    %vm2803 = vcmp.lt.s32.totalorder %v2802, 2
    %vm2804 = vcmp.eq.s32.totalorder %v2802, 0
    %v2805 = vxor.u32 %v2799, 2147483648
    %v2806 = vsel %vm2804, %v2798, %v2805
    %vm2807 = vcmp.eq.s32.totalorder %v2802, 2
    %v2808 = vxor.u32 %v2798, 2147483648
    %v2809 = vsel %vm2807, %v2808, %v2799
    %v2810 = vsel %vm2803, %v2806, %v2809
    %v2811 = vsel %vm2800, nan, %v2810
    %v2812 = vand.u32 2147483647, %v2442
    %vm2813 = vcmp.le.f32.partialorder %v2812, 0.7853982
    %vm2814 = vcmp.lt.s32.totalorder %v2442, 0
    %v2815 = vand.u32 %v2442, 2139095040
    %v2816 = vshrl.u32 %v2815, 23
    %v2817 = vsub.s32 %v2816, 127
    %v2818 = vand.u32 2147483647, %v2442
    %v2819 = vand.u32 %v2818, 8388607
    %v2820 = vor.u32 %v2819, 8388608
    %v2821 = vsub.s32 0, %v2820
    %v2822 = vadd.s32 %v2817, 1
    %vm2823 = vcmp.gt.s32.totalorder %v2822, 0
    %v2824 = vsel %vm2823, %v2822, 0
    %v2825 = vshrl.u32 %v2824, 5
    %v2826 = vand.u32 %v2824, 31
    %v2827 = vsub.s32 32, %v2826
    %v2828 = vshrl.u32 683565275, %v2827
    %v2829 = vshll.u32 683565275, %v2826
    %v2830 = vshrl.u32 2475754826, %v2827
    %v2831 = vor.u32 %v2829, %v2830
    %v2832 = vshll.u32 2475754826, %v2826
    %v2833 = vshrl.u32 2131351028, %v2827
    %v2834 = vor.u32 %v2832, %v2833
    %v2835 = vshll.u32 2131351028, %v2826
    %v2836 = vshrl.u32 2102212464, %v2827
    %v2837 = vor.u32 %v2835, %v2836
    %v2838 = vshll.u32 2102212464, %v2826
    %v2839 = vshrl.u32 920167782, %v2827
    %v2840 = vor.u32 %v2838, %v2839
    %v2841 = vshll.u32 920167782, %v2826
    %v2842 = vshrl.u32 1326507024, %v2827
    %v2843 = vor.u32 %v2841, %v2842
    %vm2844 = vcmp.lt.s32.totalorder %v2825, 1
    %vm2845 = vcmp.lt.s32.totalorder %v2825, 2
    %vm2846 = vcmp.lt.s32.totalorder %v2825, 3
    %vm2847 = vcmp.lt.s32.totalorder %v2825, 4
    %v2848 = vsel %vm2844, %v2828, %v2831
    %v2849 = vsel %vm2847, %v2837, 2102212464
    %v2850 = vsel %vm2846, %v2834, %v2849
    %v2851 = vsel %vm2845, %v2848, %v2850
    %v2852 = vsel %vm2844, %v2831, %v2834
    %v2853 = vsel %vm2847, %v2840, 920167782
    %v2854 = vsel %vm2846, %v2837, %v2853
    %v2855 = vsel %vm2845, %v2852, %v2854
    %v2856 = vsel %vm2844, %v2834, %v2837
    %v2857 = vsel %vm2847, %v2843, 1326507024
    %v2858 = vsel %vm2846, %v2840, %v2857
    %v2859 = vsel %vm2845, %v2856, %v2858
    %v2860 = vshll.u32 %v2820, 8
    %v2861 = vmul.u32.u64.compose %v2860, %v2859
    %v2862 = vextract.low.u32 %v2861
    %v2863 = vextract.high.u32 %v2861
    %v2864 = vmul.u32.u64.compose %v2860, %v2855
    %v2865 = vextract.low.u32 %v2864
    %v2866 = vextract.high.u32 %v2864
    %v2867 = vmul.u32 %v2860, %v2851
    %v2868 = vadd.s32 %v2863, %v2865
    %vm2869 = vc.u32 %v2863, %v2865
    %v2870 = vadd.s32 %v2866, 1
    %v2871 = vsel %vm2869, %v2870, %v2866
    %v2872 = vadd.s32 %v2867, %v2871
    %v2873 = vadd.s32 %v2872, 536870912
    %v2874 = vshrl.u32 %v2873, 30
    %v2875 = vshll.u32 %v2874, 30
    %v2876 = vsub.s32 %v2872, %v2875
    %vm2877 = vcmp.lt.s32.totalorder %v2876, 0
    %v2878 = vsub.s32 0, %v2876
    %v2879 = vsel %vm2877, %v2878, %v2876
    %v2880 = vclz %v2879
    %v2881 = vsub.s32 %v2880, 2
    %vm2882 = vcmp.gt.s32.totalorder 0, %v2881
    %v2883 = vsel %vm2882, 0, %v2881
    %v2884 = vsub.s32 32, %v2883
    %v2885 = vshll.u32 %v2876, %v2883
    %v2886 = vshrl.u32 %v2868, %v2884
    %v2887 = vor.u32 %v2885, %v2886
    %v2888 = vsub.s32 4294967266, %v2883
    %v2889 = vadd.s32 %v2888, 127
    %v2890 = vshll.u32 %v2889, 23
    %v2891 = vor.u32 4788187, %v2890
    %v2892 = vand.u32 2147483647, %v2891
    %v2894 = vcvt.s32.f32 %v2887
    %v2895 = vmul.f32 %v2894, %v2892
    %v2896 = vxor.u32 %v2895, 2147483648
    %v2897 = vsel %vm2814, %v2896, %v2895
    %v2898 = vsub.s32 4, %v2874
    %v2899 = vsel %vm2814, %v2898, %v2874
    %v2900 = vsel %vm2813, %v2442, %v2897
    %v2901 = vsel %vm2813, 0, %v2899
    %v2902 = vcosq.f32.pop %v2900
    %v2903 = vsinq.f32.pop %v2900
    %vm2904 = vweird.f32 %v2442
    %v2905 = vadd.s32 %v2901, 3
    %v2906 = vand.u32 %v2905, 3
    %vm2907 = vcmp.lt.s32.totalorder %v2906, 2
    %vm2908 = vcmp.eq.s32.totalorder %v2906, 0
    %v2909 = vxor.u32 %v2903, 2147483648
    %v2910 = vsel %vm2908, %v2902, %v2909
    %vm2911 = vcmp.eq.s32.totalorder %v2906, 2
    %v2912 = vxor.u32 %v2902, 2147483648
    %v2913 = vsel %vm2911, %v2912, %v2903
    %v2914 = vsel %vm2907, %v2910, %v2913
    %v2915 = vsel %vm2904, nan, %v2914
    %v2916 = vand.u32 2147483647, %v2446
    %vm2917 = vcmp.le.f32.partialorder %v2916, 0.7853982
    %vm2918 = vcmp.lt.s32.totalorder %v2446, 0
    %v2919 = vand.u32 %v2446, 2139095040
    %v2920 = vshrl.u32 %v2919, 23
    %v2921 = vsub.s32 %v2920, 127
    %v2922 = vand.u32 2147483647, %v2446
    %v2923 = vand.u32 %v2922, 8388607
    %v2924 = vor.u32 %v2923, 8388608
    %v2925 = vsub.s32 0, %v2924
    %v2926 = vadd.s32 %v2921, 1
    %vm2927 = vcmp.gt.s32.totalorder %v2926, 0
    %v2928 = vsel %vm2927, %v2926, 0
    %v2929 = vshrl.u32 %v2928, 5
    %v2930 = vand.u32 %v2928, 31
    %v2931 = vsub.s32 32, %v2930
    %v2932 = vshrl.u32 683565275, %v2931
    %v2933 = vshll.u32 683565275, %v2930
    %v2934 = vshrl.u32 2475754826, %v2931
    %v2935 = vor.u32 %v2933, %v2934
    %v2936 = vshll.u32 2475754826, %v2930
    %v2937 = vshrl.u32 2131351028, %v2931
    %v2938 = vor.u32 %v2936, %v2937
    %v2939 = vshll.u32 2131351028, %v2930
    %v2940 = vshrl.u32 2102212464, %v2931
    %v2941 = vor.u32 %v2939, %v2940
    %v2942 = vshll.u32 2102212464, %v2930
    %v2943 = vshrl.u32 920167782, %v2931
    %v2944 = vor.u32 %v2942, %v2943
    %v2945 = vshll.u32 920167782, %v2930
    %v2946 = vshrl.u32 1326507024, %v2931
    %v2947 = vor.u32 %v2945, %v2946
    %vm2948 = vcmp.lt.s32.totalorder %v2929, 1
    %vm2949 = vcmp.lt.s32.totalorder %v2929, 2
    %vm2950 = vcmp.lt.s32.totalorder %v2929, 3
    %vm2951 = vcmp.lt.s32.totalorder %v2929, 4
    %v2952 = vsel %vm2948, %v2932, %v2935
    %v2953 = vsel %vm2951, %v2941, 2102212464
    %v2954 = vsel %vm2950, %v2938, %v2953
    %v2955 = vsel %vm2949, %v2952, %v2954
    %v2956 = vsel %vm2948, %v2935, %v2938
    %v2957 = vsel %vm2951, %v2944, 920167782
    %v2958 = vsel %vm2950, %v2941, %v2957
    %v2959 = vsel %vm2949, %v2956, %v2958
    %v2960 = vsel %vm2948, %v2938, %v2941
    %v2961 = vsel %vm2951, %v2947, 1326507024
    %v2962 = vsel %vm2950, %v2944, %v2961
    %v2963 = vsel %vm2949, %v2960, %v2962
    %v2964 = vshll.u32 %v2924, 8
    %v2965 = vmul.u32.u64.compose %v2964, %v2963
    %v2966 = vextract.low.u32 %v2965
    %v2967 = vextract.high.u32 %v2965
    %v2968 = vmul.u32.u64.compose %v2964, %v2959
    %v2969 = vextract.low.u32 %v2968
    %v2970 = vextract.high.u32 %v2968
    %v2971 = vmul.u32 %v2964, %v2955
    %v2972 = vadd.s32 %v2967, %v2969
    %vm2973 = vc.u32 %v2967, %v2969
    %v2974 = vadd.s32 %v2970, 1
    %v2975 = vsel %vm2973, %v2974, %v2970
    %v2976 = vadd.s32 %v2971, %v2975
    %v2977 = vadd.s32 %v2976, 536870912
    %v2978 = vshrl.u32 %v2977, 30
    %v2979 = vshll.u32 %v2978, 30
    %v2980 = vsub.s32 %v2976, %v2979
    %vm2981 = vcmp.lt.s32.totalorder %v2980, 0
    %v2982 = vsub.s32 0, %v2980
    %v2983 = vsel %vm2981, %v2982, %v2980
    %v2984 = vclz %v2983
    %v2985 = vsub.s32 %v2984, 2
    %vm2986 = vcmp.gt.s32.totalorder 0, %v2985
    %v2987 = vsel %vm2986, 0, %v2985
    %v2988 = vsub.s32 32, %v2987
    %v2989 = vshll.u32 %v2980, %v2987
    %v2990 = vshrl.u32 %v2972, %v2988
    %v2991 = vor.u32 %v2989, %v2990
    %v2992 = vsub.s32 4294967266, %v2987
    %v2993 = vadd.s32 %v2992, 127
    %v2994 = vshll.u32 %v2993, 23
    %v2995 = vor.u32 4788187, %v2994
    %v2996 = vand.u32 2147483647, %v2995
    %v2998 = vcvt.s32.f32 %v2991
    %v2999 = vmul.f32 %v2998, %v2996
    %v3000 = vxor.u32 %v2999, 2147483648
    %v3001 = vsel %vm2918, %v3000, %v2999
    %v3002 = vsub.s32 4, %v2978
    %v3003 = vsel %vm2918, %v3002, %v2978
    %v3004 = vsel %vm2917, %v2446, %v3001
    %v3005 = vsel %vm2917, 0, %v3003
    %v3006 = vcosq.f32.pop %v3004
    %v3007 = vsinq.f32.pop %v3004
    %vm3008 = vweird.f32 %v2446
    %v3009 = vadd.s32 %v3005, 3
    %v3010 = vand.u32 %v3009, 3
    %vm3011 = vcmp.lt.s32.totalorder %v3010, 2
    %vm3012 = vcmp.eq.s32.totalorder %v3010, 0
    %v3013 = vxor.u32 %v3007, 2147483648
    %v3014 = vsel %vm3012, %v3006, %v3013
    %vm3015 = vcmp.eq.s32.totalorder %v3010, 2
    %v3016 = vxor.u32 %v3006, 2147483648
    %v3017 = vsel %vm3015, %v3016, %v3007
    %v3018 = vsel %vm3011, %v3014, %v3017
    %v3019 = vsel %vm3008, nan, %v3018
    %v3020 = vand.u32 2147483647, %v2450
    %vm3021 = vcmp.le.f32.partialorder %v3020, 0.7853982
    %vm3022 = vcmp.lt.s32.totalorder %v2450, 0
    %v3023 = vand.u32 %v2450, 2139095040
    %v3024 = vshrl.u32 %v3023, 23
    %v3025 = vsub.s32 %v3024, 127
    %v3026 = vand.u32 2147483647, %v2450
    %v3027 = vand.u32 %v3026, 8388607
    %v3028 = vor.u32 %v3027, 8388608
    %v3029 = vsub.s32 0, %v3028
    %v3030 = vadd.s32 %v3025, 1
    %vm3031 = vcmp.gt.s32.totalorder %v3030, 0
    %v3032 = vsel %vm3031, %v3030, 0
    %v3033 = vshrl.u32 %v3032, 5
    %v3034 = vand.u32 %v3032, 31
    %v3035 = vsub.s32 32, %v3034
    %v3036 = vshrl.u32 683565275, %v3035
    %v3037 = vshll.u32 683565275, %v3034
    %v3038 = vshrl.u32 2475754826, %v3035
    %v3039 = vor.u32 %v3037, %v3038
    %v3040 = vshll.u32 2475754826, %v3034
    %v3041 = vshrl.u32 2131351028, %v3035
    %v3042 = vor.u32 %v3040, %v3041
    %v3043 = vshll.u32 2131351028, %v3034
    %v3044 = vshrl.u32 2102212464, %v3035
    %v3045 = vor.u32 %v3043, %v3044
    %v3046 = vshll.u32 2102212464, %v3034
    %v3047 = vshrl.u32 920167782, %v3035
    %v3048 = vor.u32 %v3046, %v3047
    %v3049 = vshll.u32 920167782, %v3034
    %v3050 = vshrl.u32 1326507024, %v3035
    %v3051 = vor.u32 %v3049, %v3050
    %vm3052 = vcmp.lt.s32.totalorder %v3033, 1
    %vm3053 = vcmp.lt.s32.totalorder %v3033, 2
    %vm3054 = vcmp.lt.s32.totalorder %v3033, 3
    %vm3055 = vcmp.lt.s32.totalorder %v3033, 4
    %v3056 = vsel %vm3052, %v3036, %v3039
    %v3057 = vsel %vm3055, %v3045, 2102212464
    %v3058 = vsel %vm3054, %v3042, %v3057
    %v3059 = vsel %vm3053, %v3056, %v3058
    %v3060 = vsel %vm3052, %v3039, %v3042
    %v3061 = vsel %vm3055, %v3048, 920167782
    %v3062 = vsel %vm3054, %v3045, %v3061
    %v3063 = vsel %vm3053, %v3060, %v3062
    %v3064 = vsel %vm3052, %v3042, %v3045
    %v3065 = vsel %vm3055, %v3051, 1326507024
    %v3066 = vsel %vm3054, %v3048, %v3065
    %v3067 = vsel %vm3053, %v3064, %v3066
    %v3068 = vshll.u32 %v3028, 8
    %v3069 = vmul.u32.u64.compose %v3068, %v3067
    %v3070 = vextract.low.u32 %v3069
    %v3071 = vextract.high.u32 %v3069
    %v3072 = vmul.u32.u64.compose %v3068, %v3063
    %v3073 = vextract.low.u32 %v3072
    %v3074 = vextract.high.u32 %v3072
    %v3075 = vmul.u32 %v3068, %v3059
    %v3076 = vadd.s32 %v3071, %v3073
    %vm3077 = vc.u32 %v3071, %v3073
    %v3078 = vadd.s32 %v3074, 1
    %v3079 = vsel %vm3077, %v3078, %v3074
    %v3080 = vadd.s32 %v3075, %v3079
    %v3081 = vadd.s32 %v3080, 536870912
    %v3082 = vshrl.u32 %v3081, 30
    %v3083 = vshll.u32 %v3082, 30
    %v3084 = vsub.s32 %v3080, %v3083
    %vm3085 = vcmp.lt.s32.totalorder %v3084, 0
    %v3086 = vsub.s32 0, %v3084
    %v3087 = vsel %vm3085, %v3086, %v3084
    %v3088 = vclz %v3087
    %v3089 = vsub.s32 %v3088, 2
    %vm3090 = vcmp.gt.s32.totalorder 0, %v3089
    %v3091 = vsel %vm3090, 0, %v3089
    %v3092 = vsub.s32 32, %v3091
    %v3093 = vshll.u32 %v3084, %v3091
    %v3094 = vshrl.u32 %v3076, %v3092
    %v3095 = vor.u32 %v3093, %v3094
    %v3096 = vsub.s32 4294967266, %v3091
    %v3097 = vadd.s32 %v3096, 127
    %v3098 = vshll.u32 %v3097, 23
    %v3099 = vor.u32 4788187, %v3098
    %v3100 = vand.u32 2147483647, %v3099
    %v3102 = vcvt.s32.f32 %v3095
    %v3103 = vmul.f32 %v3102, %v3100
    %v3104 = vxor.u32 %v3103, 2147483648
    %v3105 = vsel %vm3022, %v3104, %v3103
    %v3106 = vsub.s32 4, %v3082
    %v3107 = vsel %vm3022, %v3106, %v3082
    %v3108 = vsel %vm3021, %v2450, %v3105
    %v3109 = vsel %vm3021, 0, %v3107
    %v3110 = vcosq.f32.pop %v3108
    %v3111 = vsinq.f32.pop %v3108
    %vm3112 = vweird.f32 %v2450
    %v3113 = vadd.s32 %v3109, 3
    %v3114 = vand.u32 %v3113, 3
    %vm3115 = vcmp.lt.s32.totalorder %v3114, 2
    %vm3116 = vcmp.eq.s32.totalorder %v3114, 0
    %v3117 = vxor.u32 %v3111, 2147483648
    %v3118 = vsel %vm3116, %v3110, %v3117
    %vm3119 = vcmp.eq.s32.totalorder %v3114, 2
    %v3120 = vxor.u32 %v3110, 2147483648
    %v3121 = vsel %vm3119, %v3120, %v3111
    %v3122 = vsel %vm3115, %v3118, %v3121
    %v3123 = vsel %vm3112, nan, %v3122
    %v3124 = vand.u32 2147483647, %v2454
    %vm3125 = vcmp.le.f32.partialorder %v3124, 0.7853982
    %vm3126 = vcmp.lt.s32.totalorder %v2454, 0
    %v3127 = vand.u32 %v2454, 2139095040
    %v3128 = vshrl.u32 %v3127, 23
    %v3129 = vsub.s32 %v3128, 127
    %v3130 = vand.u32 2147483647, %v2454
    %v3131 = vand.u32 %v3130, 8388607
    %v3132 = vor.u32 %v3131, 8388608
    %v3133 = vsub.s32 0, %v3132
    %v3134 = vadd.s32 %v3129, 1
    %vm3135 = vcmp.gt.s32.totalorder %v3134, 0
    %v3136 = vsel %vm3135, %v3134, 0
    %v3137 = vshrl.u32 %v3136, 5
    %v3138 = vand.u32 %v3136, 31
    %v3139 = vsub.s32 32, %v3138
    %v3140 = vshrl.u32 683565275, %v3139
    %v3141 = vshll.u32 683565275, %v3138
    %v3142 = vshrl.u32 2475754826, %v3139
    %v3143 = vor.u32 %v3141, %v3142
    %v3144 = vshll.u32 2475754826, %v3138
    %v3145 = vshrl.u32 2131351028, %v3139
    %v3146 = vor.u32 %v3144, %v3145
    %v3147 = vshll.u32 2131351028, %v3138
    %v3148 = vshrl.u32 2102212464, %v3139
    %v3149 = vor.u32 %v3147, %v3148
    %v3150 = vshll.u32 2102212464, %v3138
    %v3151 = vshrl.u32 920167782, %v3139
    %v3152 = vor.u32 %v3150, %v3151
    %v3153 = vshll.u32 920167782, %v3138
    %v3154 = vshrl.u32 1326507024, %v3139
    %v3155 = vor.u32 %v3153, %v3154
    %vm3156 = vcmp.lt.s32.totalorder %v3137, 1
    %vm3157 = vcmp.lt.s32.totalorder %v3137, 2
    %vm3158 = vcmp.lt.s32.totalorder %v3137, 3
    %vm3159 = vcmp.lt.s32.totalorder %v3137, 4
    %v3160 = vsel %vm3156, %v3140, %v3143
    %v3161 = vsel %vm3159, %v3149, 2102212464
    %v3162 = vsel %vm3158, %v3146, %v3161
    %v3163 = vsel %vm3157, %v3160, %v3162
    %v3164 = vsel %vm3156, %v3143, %v3146
    %v3165 = vsel %vm3159, %v3152, 920167782
    %v3166 = vsel %vm3158, %v3149, %v3165
    %v3167 = vsel %vm3157, %v3164, %v3166
    %v3168 = vsel %vm3156, %v3146, %v3149
    %v3169 = vsel %vm3159, %v3155, 1326507024
    %v3170 = vsel %vm3158, %v3152, %v3169
    %v3171 = vsel %vm3157, %v3168, %v3170
    %v3172 = vshll.u32 %v3132, 8
    %v3173 = vmul.u32.u64.compose %v3172, %v3171
    %v3174 = vextract.low.u32 %v3173
    %v3175 = vextract.high.u32 %v3173
    %v3176 = vmul.u32.u64.compose %v3172, %v3167
    %v3177 = vextract.low.u32 %v3176
    %v3178 = vextract.high.u32 %v3176
    %v3179 = vmul.u32 %v3172, %v3163
    %v3180 = vadd.s32 %v3175, %v3177
    %vm3181 = vc.u32 %v3175, %v3177
    %v3182 = vadd.s32 %v3178, 1
    %v3183 = vsel %vm3181, %v3182, %v3178
    %v3184 = vadd.s32 %v3179, %v3183
    %v3185 = vadd.s32 %v3184, 536870912
    %v3186 = vshrl.u32 %v3185, 30
    %v3187 = vshll.u32 %v3186, 30
    %v3188 = vsub.s32 %v3184, %v3187
    %vm3189 = vcmp.lt.s32.totalorder %v3188, 0
    %v3190 = vsub.s32 0, %v3188
    %v3191 = vsel %vm3189, %v3190, %v3188
    %v3192 = vclz %v3191
    %v3193 = vsub.s32 %v3192, 2
    %vm3194 = vcmp.gt.s32.totalorder 0, %v3193
    %v3195 = vsel %vm3194, 0, %v3193
    %v3196 = vsub.s32 32, %v3195
    %v3197 = vshll.u32 %v3188, %v3195
    %v3198 = vshrl.u32 %v3180, %v3196
    %v3199 = vor.u32 %v3197, %v3198
    %v3200 = vsub.s32 4294967266, %v3195
    %v3201 = vadd.s32 %v3200, 127
    %v3202 = vshll.u32 %v3201, 23
    %v3203 = vor.u32 4788187, %v3202
    %v3204 = vand.u32 2147483647, %v3203
    %v3206 = vcvt.s32.f32 %v3199
    %v3207 = vmul.f32 %v3206, %v3204
    %v3208 = vxor.u32 %v3207, 2147483648
    %v3209 = vsel %vm3126, %v3208, %v3207
    %v3210 = vsub.s32 4, %v3186
    %v3211 = vsel %vm3126, %v3210, %v3186
    %v3212 = vsel %vm3125, %v2454, %v3209
    %v3213 = vsel %vm3125, 0, %v3211
    %v3214 = vcosq.f32.pop %v3212
    %v3215 = vsinq.f32.pop %v3212
    %vm3216 = vweird.f32 %v2454
    %v3217 = vadd.s32 %v3213, 3
    %v3218 = vand.u32 %v3217, 3
    %vm3219 = vcmp.lt.s32.totalorder %v3218, 2
    %vm3220 = vcmp.eq.s32.totalorder %v3218, 0
    %v3221 = vxor.u32 %v3215, 2147483648
    %v3222 = vsel %vm3220, %v3214, %v3221
    %vm3223 = vcmp.eq.s32.totalorder %v3218, 2
    %v3224 = vxor.u32 %v3214, 2147483648
    %v3225 = vsel %vm3223, %v3224, %v3215
    %v3226 = vsel %vm3219, %v3222, %v3225
    %v3227 = vsel %vm3216, nan, %v3226
    %v3228 = vand.u32 2147483647, %v2458
    %vm3229 = vcmp.le.f32.partialorder %v3228, 0.7853982
    %vm3230 = vcmp.lt.s32.totalorder %v2458, 0
    %v3231 = vand.u32 %v2458, 2139095040
    %v3232 = vshrl.u32 %v3231, 23
    %v3233 = vsub.s32 %v3232, 127
    %v3234 = vand.u32 2147483647, %v2458
    %v3235 = vand.u32 %v3234, 8388607
    %v3236 = vor.u32 %v3235, 8388608
    %v3237 = vsub.s32 0, %v3236
    %v3238 = vadd.s32 %v3233, 1
    %vm3239 = vcmp.gt.s32.totalorder %v3238, 0
    %v3240 = vsel %vm3239, %v3238, 0
    %v3241 = vshrl.u32 %v3240, 5
    %v3242 = vand.u32 %v3240, 31
    %v3243 = vsub.s32 32, %v3242
    %v3244 = vshrl.u32 683565275, %v3243
    %v3245 = vshll.u32 683565275, %v3242
    %v3246 = vshrl.u32 2475754826, %v3243
    %v3247 = vor.u32 %v3245, %v3246
    %v3248 = vshll.u32 2475754826, %v3242
    %v3249 = vshrl.u32 2131351028, %v3243
    %v3250 = vor.u32 %v3248, %v3249
    %v3251 = vshll.u32 2131351028, %v3242
    %v3252 = vshrl.u32 2102212464, %v3243
    %v3253 = vor.u32 %v3251, %v3252
    %v3254 = vshll.u32 2102212464, %v3242
    %v3255 = vshrl.u32 920167782, %v3243
    %v3256 = vor.u32 %v3254, %v3255
    %v3257 = vshll.u32 920167782, %v3242
    %v3258 = vshrl.u32 1326507024, %v3243
    %v3259 = vor.u32 %v3257, %v3258
    %vm3260 = vcmp.lt.s32.totalorder %v3241, 1
    %vm3261 = vcmp.lt.s32.totalorder %v3241, 2
    %vm3262 = vcmp.lt.s32.totalorder %v3241, 3
    %vm3263 = vcmp.lt.s32.totalorder %v3241, 4
    %v3264 = vsel %vm3260, %v3244, %v3247
    %v3265 = vsel %vm3263, %v3253, 2102212464
    %v3266 = vsel %vm3262, %v3250, %v3265
    %v3267 = vsel %vm3261, %v3264, %v3266
    %v3268 = vsel %vm3260, %v3247, %v3250
    %v3269 = vsel %vm3263, %v3256, 920167782
    %v3270 = vsel %vm3262, %v3253, %v3269
    %v3271 = vsel %vm3261, %v3268, %v3270
    %v3272 = vsel %vm3260, %v3250, %v3253
    %v3273 = vsel %vm3263, %v3259, 1326507024
    %v3274 = vsel %vm3262, %v3256, %v3273
    %v3275 = vsel %vm3261, %v3272, %v3274
    %v3276 = vshll.u32 %v3236, 8
    %v3277 = vmul.u32.u64.compose %v3276, %v3275
    %v3278 = vextract.low.u32 %v3277
    %v3279 = vextract.high.u32 %v3277
    %v3280 = vmul.u32.u64.compose %v3276, %v3271
    %v3281 = vextract.low.u32 %v3280
    %v3282 = vextract.high.u32 %v3280
    %v3283 = vmul.u32 %v3276, %v3267
    %v3284 = vadd.s32 %v3279, %v3281
    %vm3285 = vc.u32 %v3279, %v3281
    %v3286 = vadd.s32 %v3282, 1
    %v3287 = vsel %vm3285, %v3286, %v3282
    %v3288 = vadd.s32 %v3283, %v3287
    %v3289 = vadd.s32 %v3288, 536870912
    %v3290 = vshrl.u32 %v3289, 30
    %v3291 = vshll.u32 %v3290, 30
    %v3292 = vsub.s32 %v3288, %v3291
    %vm3293 = vcmp.lt.s32.totalorder %v3292, 0
    %v3294 = vsub.s32 0, %v3292
    %v3295 = vsel %vm3293, %v3294, %v3292
    %v3296 = vclz %v3295
    %v3297 = vsub.s32 %v3296, 2
    %vm3298 = vcmp.gt.s32.totalorder 0, %v3297
    %v3299 = vsel %vm3298, 0, %v3297
    %v3300 = vsub.s32 32, %v3299
    %v3301 = vshll.u32 %v3292, %v3299
    %v3302 = vshrl.u32 %v3284, %v3300
    %v3303 = vor.u32 %v3301, %v3302
    %v3304 = vsub.s32 4294967266, %v3299
    %v3305 = vadd.s32 %v3304, 127
    %v3306 = vshll.u32 %v3305, 23
    %v3307 = vor.u32 4788187, %v3306
    %v3308 = vand.u32 2147483647, %v3307
    %v3310 = vcvt.s32.f32 %v3303
    %v3311 = vmul.f32 %v3310, %v3308
    %v3312 = vxor.u32 %v3311, 2147483648
    %v3313 = vsel %vm3230, %v3312, %v3311
    %v3314 = vsub.s32 4, %v3290
    %v3315 = vsel %vm3230, %v3314, %v3290
    %v3316 = vsel %vm3229, %v2458, %v3313
    %v3317 = vsel %vm3229, 0, %v3315
    %v3318 = vcosq.f32.pop %v3316
    %v3319 = vsinq.f32.pop %v3316
    %vm3320 = vweird.f32 %v2458
    %v3321 = vadd.s32 %v3317, 3
    %v3322 = vand.u32 %v3321, 3
    %vm3323 = vcmp.lt.s32.totalorder %v3322, 2
    %vm3324 = vcmp.eq.s32.totalorder %v3322, 0
    %v3325 = vxor.u32 %v3319, 2147483648
    %v3326 = vsel %vm3324, %v3318, %v3325
    %vm3327 = vcmp.eq.s32.totalorder %v3322, 2
    %v3328 = vxor.u32 %v3318, 2147483648
    %v3329 = vsel %vm3327, %v3328, %v3319
    %v3330 = vsel %vm3323, %v3326, %v3329
    %v3331 = vsel %vm3320, nan, %v3330
    %v3332 = vand.u32 2147483647, %v2431
    %vm3333 = vcmp.le.f32.partialorder %v3332, 0.7853982
    %vm3334 = vcmp.lt.s32.totalorder %v2431, 0
    %v3335 = vand.u32 %v2431, 2139095040
    %v3336 = vshrl.u32 %v3335, 23
    %v3337 = vsub.s32 %v3336, 127
    %v3338 = vand.u32 2147483647, %v2431
    %v3339 = vand.u32 %v3338, 8388607
    %v3340 = vor.u32 %v3339, 8388608
    %v3341 = vsub.s32 0, %v3340
    %v3342 = vadd.s32 %v3337, 1
    %vm3343 = vcmp.gt.s32.totalorder %v3342, 0
    %v3344 = vsel %vm3343, %v3342, 0
    %v3345 = vshrl.u32 %v3344, 5
    %v3346 = vand.u32 %v3344, 31
    %v3347 = vsub.s32 32, %v3346
    %v3348 = vshrl.u32 683565275, %v3347
    %v3349 = vshll.u32 683565275, %v3346
    %v3350 = vshrl.u32 2475754826, %v3347
    %v3351 = vor.u32 %v3349, %v3350
    %v3352 = vshll.u32 2475754826, %v3346
    %v3353 = vshrl.u32 2131351028, %v3347
    %v3354 = vor.u32 %v3352, %v3353
    %v3355 = vshll.u32 2131351028, %v3346
    %v3356 = vshrl.u32 2102212464, %v3347
    %v3357 = vor.u32 %v3355, %v3356
    %v3358 = vshll.u32 2102212464, %v3346
    %v3359 = vshrl.u32 920167782, %v3347
    %v3360 = vor.u32 %v3358, %v3359
    %v3361 = vshll.u32 920167782, %v3346
    %v3362 = vshrl.u32 1326507024, %v3347
    %v3363 = vor.u32 %v3361, %v3362
    %vm3364 = vcmp.lt.s32.totalorder %v3345, 1
    %vm3365 = vcmp.lt.s32.totalorder %v3345, 2
    %vm3366 = vcmp.lt.s32.totalorder %v3345, 3
    %vm3367 = vcmp.lt.s32.totalorder %v3345, 4
    %v3368 = vsel %vm3364, %v3348, %v3351
    %v3369 = vsel %vm3367, %v3357, 2102212464
    %v3370 = vsel %vm3366, %v3354, %v3369
    %v3371 = vsel %vm3365, %v3368, %v3370
    %v3372 = vsel %vm3364, %v3351, %v3354
    %v3373 = vsel %vm3367, %v3360, 920167782
    %v3374 = vsel %vm3366, %v3357, %v3373
    %v3375 = vsel %vm3365, %v3372, %v3374
    %v3376 = vsel %vm3364, %v3354, %v3357
    %v3377 = vsel %vm3367, %v3363, 1326507024
    %v3378 = vsel %vm3366, %v3360, %v3377
    %v3379 = vsel %vm3365, %v3376, %v3378
    %v3380 = vshll.u32 %v3340, 8
    %v3381 = vmul.u32.u64.compose %v3380, %v3379
    %v3382 = vextract.low.u32 %v3381
    %v3383 = vextract.high.u32 %v3381
    %v3384 = vmul.u32.u64.compose %v3380, %v3375
    %v3385 = vextract.low.u32 %v3384
    %v3386 = vextract.high.u32 %v3384
    %v3387 = vmul.u32 %v3380, %v3371
    %v3388 = vadd.s32 %v3383, %v3385
    %vm3389 = vc.u32 %v3383, %v3385
    %v3390 = vadd.s32 %v3386, 1
    %v3391 = vsel %vm3389, %v3390, %v3386
    %v3392 = vadd.s32 %v3387, %v3391
    %v3393 = vadd.s32 %v3392, 536870912
    %v3394 = vshrl.u32 %v3393, 30
    %v3395 = vshll.u32 %v3394, 30
    %v3396 = vsub.s32 %v3392, %v3395
    %vm3397 = vcmp.lt.s32.totalorder %v3396, 0
    %v3398 = vsub.s32 0, %v3396
    %v3399 = vsel %vm3397, %v3398, %v3396
    %v3400 = vclz %v3399
    %v3401 = vsub.s32 %v3400, 2
    %vm3402 = vcmp.gt.s32.totalorder 0, %v3401
    %v3403 = vsel %vm3402, 0, %v3401
    %v3404 = vsub.s32 32, %v3403
    %v3405 = vshll.u32 %v3396, %v3403
    %v3406 = vshrl.u32 %v3388, %v3404
    %v3407 = vor.u32 %v3405, %v3406
    %v3408 = vsub.s32 4294967266, %v3403
    %v3409 = vadd.s32 %v3408, 127
    %v3410 = vshll.u32 %v3409, 23
    %v3411 = vor.u32 4788187, %v3410
    %v3412 = vand.u32 2147483647, %v3411
    %v3414 = vcvt.s32.f32 %v3407
    %v3415 = vmul.f32 %v3414, %v3412
    %v3416 = vxor.u32 %v3415, 2147483648
    %v3417 = vsel %vm3334, %v3416, %v3415
    %v3418 = vsub.s32 4, %v3394
    %v3419 = vsel %vm3334, %v3418, %v3394
    %v3420 = vsel %vm3333, %v2431, %v3417
    %v3421 = vsel %vm3333, 0, %v3419
    %v3422 = vcosq.f32.pop %v3420
    %v3423 = vsinq.f32.pop %v3420
    %vm3424 = vweird.f32 %v2431
    %v3425 = vand.u32 %v3421, 3
    %vm3426 = vcmp.lt.s32.totalorder %v3425, 2
    %vm3427 = vcmp.eq.s32.totalorder %v3425, 0
    %v3428 = vxor.u32 %v3423, 2147483648
    %v3429 = vsel %vm3427, %v3422, %v3428
    %vm3430 = vcmp.eq.s32.totalorder %v3425, 2
    %v3431 = vxor.u32 %v3422, 2147483648
    %v3432 = vsel %vm3430, %v3431, %v3423
    %v3433 = vsel %vm3426, %v3429, %v3432
    %v3434 = vsel %vm3424, nan, %v3433
    %v3435 = vand.u32 2147483647, %v2435
    %vm3436 = vcmp.le.f32.partialorder %v3435, 0.7853982
    %vm3437 = vcmp.lt.s32.totalorder %v2435, 0
    %v3438 = vand.u32 %v2435, 2139095040
    %v3439 = vshrl.u32 %v3438, 23
    %v3440 = vsub.s32 %v3439, 127
    %v3441 = vand.u32 2147483647, %v2435
    %v3442 = vand.u32 %v3441, 8388607
    %v3443 = vor.u32 %v3442, 8388608
    %v3444 = vsub.s32 0, %v3443
    %v3445 = vadd.s32 %v3440, 1
    %vm3446 = vcmp.gt.s32.totalorder %v3445, 0
    %v3447 = vsel %vm3446, %v3445, 0
    %v3448 = vshrl.u32 %v3447, 5
    %v3449 = vand.u32 %v3447, 31
    %v3450 = vsub.s32 32, %v3449
    %v3451 = vshrl.u32 683565275, %v3450
    %v3452 = vshll.u32 683565275, %v3449
    %v3453 = vshrl.u32 2475754826, %v3450
    %v3454 = vor.u32 %v3452, %v3453
    %v3455 = vshll.u32 2475754826, %v3449
    %v3456 = vshrl.u32 2131351028, %v3450
    %v3457 = vor.u32 %v3455, %v3456
    %v3458 = vshll.u32 2131351028, %v3449
    %v3459 = vshrl.u32 2102212464, %v3450
    %v3460 = vor.u32 %v3458, %v3459
    %v3461 = vshll.u32 2102212464, %v3449
    %v3462 = vshrl.u32 920167782, %v3450
    %v3463 = vor.u32 %v3461, %v3462
    %v3464 = vshll.u32 920167782, %v3449
    %v3465 = vshrl.u32 1326507024, %v3450
    %v3466 = vor.u32 %v3464, %v3465
    %vm3467 = vcmp.lt.s32.totalorder %v3448, 1
    %vm3468 = vcmp.lt.s32.totalorder %v3448, 2
    %vm3469 = vcmp.lt.s32.totalorder %v3448, 3
    %vm3470 = vcmp.lt.s32.totalorder %v3448, 4
    %v3471 = vsel %vm3467, %v3451, %v3454
    %v3472 = vsel %vm3470, %v3460, 2102212464
    %v3473 = vsel %vm3469, %v3457, %v3472
    %v3474 = vsel %vm3468, %v3471, %v3473
    %v3475 = vsel %vm3467, %v3454, %v3457
    %v3476 = vsel %vm3470, %v3463, 920167782
    %v3477 = vsel %vm3469, %v3460, %v3476
    %v3478 = vsel %vm3468, %v3475, %v3477
    %v3479 = vsel %vm3467, %v3457, %v3460
    %v3480 = vsel %vm3470, %v3466, 1326507024
    %v3481 = vsel %vm3469, %v3463, %v3480
    %v3482 = vsel %vm3468, %v3479, %v3481
    %v3483 = vshll.u32 %v3443, 8
    %v3484 = vmul.u32.u64.compose %v3483, %v3482
    %v3485 = vextract.low.u32 %v3484
    %v3486 = vextract.high.u32 %v3484
    %v3487 = vmul.u32.u64.compose %v3483, %v3478
    %v3488 = vextract.low.u32 %v3487
    %v3489 = vextract.high.u32 %v3487
    %v3490 = vmul.u32 %v3483, %v3474
    %v3491 = vadd.s32 %v3486, %v3488
    %vm3492 = vc.u32 %v3486, %v3488
    %v3493 = vadd.s32 %v3489, 1
    %v3494 = vsel %vm3492, %v3493, %v3489
    %v3495 = vadd.s32 %v3490, %v3494
    %v3496 = vadd.s32 %v3495, 536870912
    %v3497 = vshrl.u32 %v3496, 30
    %v3498 = vshll.u32 %v3497, 30
    %v3499 = vsub.s32 %v3495, %v3498
    %vm3500 = vcmp.lt.s32.totalorder %v3499, 0
    %v3501 = vsub.s32 0, %v3499
    %v3502 = vsel %vm3500, %v3501, %v3499
    %v3503 = vclz %v3502
    %v3504 = vsub.s32 %v3503, 2
    %vm3505 = vcmp.gt.s32.totalorder 0, %v3504
    %v3506 = vsel %vm3505, 0, %v3504
    %v3507 = vsub.s32 32, %v3506
    %v3508 = vshll.u32 %v3499, %v3506
    %v3509 = vshrl.u32 %v3491, %v3507
    %v3510 = vor.u32 %v3508, %v3509
    %v3511 = vsub.s32 4294967266, %v3506
    %v3512 = vadd.s32 %v3511, 127
    %v3513 = vshll.u32 %v3512, 23
    %v3514 = vor.u32 4788187, %v3513
    %v3515 = vand.u32 2147483647, %v3514
    %v3517 = vcvt.s32.f32 %v3510
    %v3518 = vmul.f32 %v3517, %v3515
    %v3519 = vxor.u32 %v3518, 2147483648
    %v3520 = vsel %vm3437, %v3519, %v3518
    %v3521 = vsub.s32 4, %v3497
    %v3522 = vsel %vm3437, %v3521, %v3497
    %v3523 = vsel %vm3436, %v2435, %v3520
    %v3524 = vsel %vm3436, 0, %v3522
    %v3525 = vcosq.f32.pop %v3523
    %v3526 = vsinq.f32.pop %v3523
    %vm3527 = vweird.f32 %v2435
    %v3528 = vand.u32 %v3524, 3
    %vm3529 = vcmp.lt.s32.totalorder %v3528, 2
    %vm3530 = vcmp.eq.s32.totalorder %v3528, 0
    %v3531 = vxor.u32 %v3526, 2147483648
    %v3532 = vsel %vm3530, %v3525, %v3531
    %vm3533 = vcmp.eq.s32.totalorder %v3528, 2
    %v3534 = vxor.u32 %v3525, 2147483648
    %v3535 = vsel %vm3533, %v3534, %v3526
    %v3536 = vsel %vm3529, %v3532, %v3535
    %v3537 = vsel %vm3527, nan, %v3536
    %v3538 = vand.u32 2147483647, %v2439
    %vm3539 = vcmp.le.f32.partialorder %v3538, 0.7853982
    %vm3540 = vcmp.lt.s32.totalorder %v2439, 0
    %v3541 = vand.u32 %v2439, 2139095040
    %v3542 = vshrl.u32 %v3541, 23
    %v3543 = vsub.s32 %v3542, 127
    %v3544 = vand.u32 2147483647, %v2439
    %v3545 = vand.u32 %v3544, 8388607
    %v3546 = vor.u32 %v3545, 8388608
    %v3547 = vsub.s32 0, %v3546
    %v3548 = vadd.s32 %v3543, 1
    %vm3549 = vcmp.gt.s32.totalorder %v3548, 0
    %v3550 = vsel %vm3549, %v3548, 0
    %v3551 = vshrl.u32 %v3550, 5
    %v3552 = vand.u32 %v3550, 31
    %v3553 = vsub.s32 32, %v3552
    %v3554 = vshrl.u32 683565275, %v3553
    %v3555 = vshll.u32 683565275, %v3552
    %v3556 = vshrl.u32 2475754826, %v3553
    %v3557 = vor.u32 %v3555, %v3556
    %v3558 = vshll.u32 2475754826, %v3552
    %v3559 = vshrl.u32 2131351028, %v3553
    %v3560 = vor.u32 %v3558, %v3559
    %v3561 = vshll.u32 2131351028, %v3552
    %v3562 = vshrl.u32 2102212464, %v3553
    %v3563 = vor.u32 %v3561, %v3562
    %v3564 = vshll.u32 2102212464, %v3552
    %v3565 = vshrl.u32 920167782, %v3553
    %v3566 = vor.u32 %v3564, %v3565
    %v3567 = vshll.u32 920167782, %v3552
    %v3568 = vshrl.u32 1326507024, %v3553
    %v3569 = vor.u32 %v3567, %v3568
    %vm3570 = vcmp.lt.s32.totalorder %v3551, 1
    %vm3571 = vcmp.lt.s32.totalorder %v3551, 2
    %vm3572 = vcmp.lt.s32.totalorder %v3551, 3
    %vm3573 = vcmp.lt.s32.totalorder %v3551, 4
    %v3574 = vsel %vm3570, %v3554, %v3557
    %v3575 = vsel %vm3573, %v3563, 2102212464
    %v3576 = vsel %vm3572, %v3560, %v3575
    %v3577 = vsel %vm3571, %v3574, %v3576
    %v3578 = vsel %vm3570, %v3557, %v3560
    %v3579 = vsel %vm3573, %v3566, 920167782
    %v3580 = vsel %vm3572, %v3563, %v3579
    %v3581 = vsel %vm3571, %v3578, %v3580
    %v3582 = vsel %vm3570, %v3560, %v3563
    %v3583 = vsel %vm3573, %v3569, 1326507024
    %v3584 = vsel %vm3572, %v3566, %v3583
    %v3585 = vsel %vm3571, %v3582, %v3584
    %v3586 = vshll.u32 %v3546, 8
    %v3587 = vmul.u32.u64.compose %v3586, %v3585
    %v3588 = vextract.low.u32 %v3587
    %v3589 = vextract.high.u32 %v3587
    %v3590 = vmul.u32.u64.compose %v3586, %v3581
    %v3591 = vextract.low.u32 %v3590
    %v3592 = vextract.high.u32 %v3590
    %v3593 = vmul.u32 %v3586, %v3577
    %v3594 = vadd.s32 %v3589, %v3591
    %vm3595 = vc.u32 %v3589, %v3591
    %v3596 = vadd.s32 %v3592, 1
    %v3597 = vsel %vm3595, %v3596, %v3592
    %v3598 = vadd.s32 %v3593, %v3597
    %v3599 = vadd.s32 %v3598, 536870912
    %v3600 = vshrl.u32 %v3599, 30
    %v3601 = vshll.u32 %v3600, 30
    %v3602 = vsub.s32 %v3598, %v3601
    %vm3603 = vcmp.lt.s32.totalorder %v3602, 0
    %v3604 = vsub.s32 0, %v3602
    %v3605 = vsel %vm3603, %v3604, %v3602
    %v3606 = vclz %v3605
    %v3607 = vsub.s32 %v3606, 2
    %vm3608 = vcmp.gt.s32.totalorder 0, %v3607
    %v3609 = vsel %vm3608, 0, %v3607
    %v3610 = vsub.s32 32, %v3609
    %v3611 = vshll.u32 %v3602, %v3609
    %v3612 = vshrl.u32 %v3594, %v3610
    %v3613 = vor.u32 %v3611, %v3612
    %v3614 = vsub.s32 4294967266, %v3609
    %v3615 = vadd.s32 %v3614, 127
    %v3616 = vshll.u32 %v3615, 23
    %v3617 = vor.u32 4788187, %v3616
    %v3618 = vand.u32 2147483647, %v3617
    %v3620 = vcvt.s32.f32 %v3613
    %v3621 = vmul.f32 %v3620, %v3618
    %v3622 = vxor.u32 %v3621, 2147483648
    %v3623 = vsel %vm3540, %v3622, %v3621
    %v3624 = vsub.s32 4, %v3600
    %v3625 = vsel %vm3540, %v3624, %v3600
    %v3626 = vsel %vm3539, %v2439, %v3623
    %v3627 = vsel %vm3539, 0, %v3625
    %v3628 = vcosq.f32.pop %v3626
    %v3629 = vsinq.f32.pop %v3626
    %vm3630 = vweird.f32 %v2439
    %v3631 = vand.u32 %v3627, 3
    %vm3632 = vcmp.lt.s32.totalorder %v3631, 2
    %vm3633 = vcmp.eq.s32.totalorder %v3631, 0
    %v3634 = vxor.u32 %v3629, 2147483648
    %v3635 = vsel %vm3633, %v3628, %v3634
    %vm3636 = vcmp.eq.s32.totalorder %v3631, 2
    %v3637 = vxor.u32 %v3628, 2147483648
    %v3638 = vsel %vm3636, %v3637, %v3629
    %v3639 = vsel %vm3632, %v3635, %v3638
    %v3640 = vsel %vm3630, nan, %v3639
    %v3641 = vand.u32 2147483647, %v2443
    %vm3642 = vcmp.le.f32.partialorder %v3641, 0.7853982
    %vm3643 = vcmp.lt.s32.totalorder %v2443, 0
    %v3644 = vand.u32 %v2443, 2139095040
    %v3645 = vshrl.u32 %v3644, 23
    %v3646 = vsub.s32 %v3645, 127
    %v3647 = vand.u32 2147483647, %v2443
    %v3648 = vand.u32 %v3647, 8388607
    %v3649 = vor.u32 %v3648, 8388608
    %v3650 = vsub.s32 0, %v3649
    %v3651 = vadd.s32 %v3646, 1
    %vm3652 = vcmp.gt.s32.totalorder %v3651, 0
    %v3653 = vsel %vm3652, %v3651, 0
    %v3654 = vshrl.u32 %v3653, 5
    %v3655 = vand.u32 %v3653, 31
    %v3656 = vsub.s32 32, %v3655
    %v3657 = vshrl.u32 683565275, %v3656
    %v3658 = vshll.u32 683565275, %v3655
    %v3659 = vshrl.u32 2475754826, %v3656
    %v3660 = vor.u32 %v3658, %v3659
    %v3661 = vshll.u32 2475754826, %v3655
    %v3662 = vshrl.u32 2131351028, %v3656
    %v3663 = vor.u32 %v3661, %v3662
    %v3664 = vshll.u32 2131351028, %v3655
    %v3665 = vshrl.u32 2102212464, %v3656
    %v3666 = vor.u32 %v3664, %v3665
    %v3667 = vshll.u32 2102212464, %v3655
    %v3668 = vshrl.u32 920167782, %v3656
    %v3669 = vor.u32 %v3667, %v3668
    %v3670 = vshll.u32 920167782, %v3655
    %v3671 = vshrl.u32 1326507024, %v3656
    %v3672 = vor.u32 %v3670, %v3671
    %vm3673 = vcmp.lt.s32.totalorder %v3654, 1
    %vm3674 = vcmp.lt.s32.totalorder %v3654, 2
    %vm3675 = vcmp.lt.s32.totalorder %v3654, 3
    %vm3676 = vcmp.lt.s32.totalorder %v3654, 4
    %v3677 = vsel %vm3673, %v3657, %v3660
    %v3678 = vsel %vm3676, %v3666, 2102212464
    %v3679 = vsel %vm3675, %v3663, %v3678
    %v3680 = vsel %vm3674, %v3677, %v3679
    %v3681 = vsel %vm3673, %v3660, %v3663
    %v3682 = vsel %vm3676, %v3669, 920167782
    %v3683 = vsel %vm3675, %v3666, %v3682
    %v3684 = vsel %vm3674, %v3681, %v3683
    %v3685 = vsel %vm3673, %v3663, %v3666
    %v3686 = vsel %vm3676, %v3672, 1326507024
    %v3687 = vsel %vm3675, %v3669, %v3686
    %v3688 = vsel %vm3674, %v3685, %v3687
    %v3689 = vshll.u32 %v3649, 8
    %v3690 = vmul.u32.u64.compose %v3689, %v3688
    %v3691 = vextract.low.u32 %v3690
    %v3692 = vextract.high.u32 %v3690
    %v3693 = vmul.u32.u64.compose %v3689, %v3684
    %v3694 = vextract.low.u32 %v3693
    %v3695 = vextract.high.u32 %v3693
    %v3696 = vmul.u32 %v3689, %v3680
    %v3697 = vadd.s32 %v3692, %v3694
    %vm3698 = vc.u32 %v3692, %v3694
    %v3699 = vadd.s32 %v3695, 1
    %v3700 = vsel %vm3698, %v3699, %v3695
    %v3701 = vadd.s32 %v3696, %v3700
    %v3702 = vadd.s32 %v3701, 536870912
    %v3703 = vshrl.u32 %v3702, 30
    %v3704 = vshll.u32 %v3703, 30
    %v3705 = vsub.s32 %v3701, %v3704
    %vm3706 = vcmp.lt.s32.totalorder %v3705, 0
    %v3707 = vsub.s32 0, %v3705
    %v3708 = vsel %vm3706, %v3707, %v3705
    %v3709 = vclz %v3708
    %v3710 = vsub.s32 %v3709, 2
    %vm3711 = vcmp.gt.s32.totalorder 0, %v3710
    %v3712 = vsel %vm3711, 0, %v3710
    %v3713 = vsub.s32 32, %v3712
    %v3714 = vshll.u32 %v3705, %v3712
    %v3715 = vshrl.u32 %v3697, %v3713
    %v3716 = vor.u32 %v3714, %v3715
    %v3717 = vsub.s32 4294967266, %v3712
    %v3718 = vadd.s32 %v3717, 127
    %v3719 = vshll.u32 %v3718, 23
    %v3720 = vor.u32 4788187, %v3719
    %v3721 = vand.u32 2147483647, %v3720
    %v3723 = vcvt.s32.f32 %v3716
    %v3724 = vmul.f32 %v3723, %v3721
    %v3725 = vxor.u32 %v3724, 2147483648
    %v3726 = vsel %vm3643, %v3725, %v3724
    %v3727 = vsub.s32 4, %v3703
    %v3728 = vsel %vm3643, %v3727, %v3703
    %v3729 = vsel %vm3642, %v2443, %v3726
    %v3730 = vsel %vm3642, 0, %v3728
    %v3731 = vcosq.f32.pop %v3729
    %v3732 = vsinq.f32.pop %v3729
    %vm3733 = vweird.f32 %v2443
    %v3734 = vand.u32 %v3730, 3
    %vm3735 = vcmp.lt.s32.totalorder %v3734, 2
    %vm3736 = vcmp.eq.s32.totalorder %v3734, 0
    %v3737 = vxor.u32 %v3732, 2147483648
    %v3738 = vsel %vm3736, %v3731, %v3737
    %vm3739 = vcmp.eq.s32.totalorder %v3734, 2
    %v3740 = vxor.u32 %v3731, 2147483648
    %v3741 = vsel %vm3739, %v3740, %v3732
    %v3742 = vsel %vm3735, %v3738, %v3741
    %v3743 = vsel %vm3733, nan, %v3742
    %v3744 = vand.u32 2147483647, %v2447
    %vm3745 = vcmp.le.f32.partialorder %v3744, 0.7853982
    %vm3746 = vcmp.lt.s32.totalorder %v2447, 0
    %v3747 = vand.u32 %v2447, 2139095040
    %v3748 = vshrl.u32 %v3747, 23
    %v3749 = vsub.s32 %v3748, 127
    %v3750 = vand.u32 2147483647, %v2447
    %v3751 = vand.u32 %v3750, 8388607
    %v3752 = vor.u32 %v3751, 8388608
    %v3753 = vsub.s32 0, %v3752
    %v3754 = vadd.s32 %v3749, 1
    %vm3755 = vcmp.gt.s32.totalorder %v3754, 0
    %v3756 = vsel %vm3755, %v3754, 0
    %v3757 = vshrl.u32 %v3756, 5
    %v3758 = vand.u32 %v3756, 31
    %v3759 = vsub.s32 32, %v3758
    %v3760 = vshrl.u32 683565275, %v3759
    %v3761 = vshll.u32 683565275, %v3758
    %v3762 = vshrl.u32 2475754826, %v3759
    %v3763 = vor.u32 %v3761, %v3762
    %v3764 = vshll.u32 2475754826, %v3758
    %v3765 = vshrl.u32 2131351028, %v3759
    %v3766 = vor.u32 %v3764, %v3765
    %v3767 = vshll.u32 2131351028, %v3758
    %v3768 = vshrl.u32 2102212464, %v3759
    %v3769 = vor.u32 %v3767, %v3768
    %v3770 = vshll.u32 2102212464, %v3758
    %v3771 = vshrl.u32 920167782, %v3759
    %v3772 = vor.u32 %v3770, %v3771
    %v3773 = vshll.u32 920167782, %v3758
    %v3774 = vshrl.u32 1326507024, %v3759
    %v3775 = vor.u32 %v3773, %v3774
    %vm3776 = vcmp.lt.s32.totalorder %v3757, 1
    %vm3777 = vcmp.lt.s32.totalorder %v3757, 2
    %vm3778 = vcmp.lt.s32.totalorder %v3757, 3
    %vm3779 = vcmp.lt.s32.totalorder %v3757, 4
    %v3780 = vsel %vm3776, %v3760, %v3763
    %v3781 = vsel %vm3779, %v3769, 2102212464
    %v3782 = vsel %vm3778, %v3766, %v3781
    %v3783 = vsel %vm3777, %v3780, %v3782
    %v3784 = vsel %vm3776, %v3763, %v3766
    %v3785 = vsel %vm3779, %v3772, 920167782
    %v3786 = vsel %vm3778, %v3769, %v3785
    %v3787 = vsel %vm3777, %v3784, %v3786
    %v3788 = vsel %vm3776, %v3766, %v3769
    %v3789 = vsel %vm3779, %v3775, 1326507024
    %v3790 = vsel %vm3778, %v3772, %v3789
    %v3791 = vsel %vm3777, %v3788, %v3790
    %v3792 = vshll.u32 %v3752, 8
    %v3793 = vmul.u32.u64.compose %v3792, %v3791
    %v3794 = vextract.low.u32 %v3793
    %v3795 = vextract.high.u32 %v3793
    %v3796 = vmul.u32.u64.compose %v3792, %v3787
    %v3797 = vextract.low.u32 %v3796
    %v3798 = vextract.high.u32 %v3796
    %v3799 = vmul.u32 %v3792, %v3783
    %v3800 = vadd.s32 %v3795, %v3797
    %vm3801 = vc.u32 %v3795, %v3797
    %v3802 = vadd.s32 %v3798, 1
    %v3803 = vsel %vm3801, %v3802, %v3798
    %v3804 = vadd.s32 %v3799, %v3803
    %v3805 = vadd.s32 %v3804, 536870912
    %v3806 = vshrl.u32 %v3805, 30
    %v3807 = vshll.u32 %v3806, 30
    %v3808 = vsub.s32 %v3804, %v3807
    %vm3809 = vcmp.lt.s32.totalorder %v3808, 0
    %v3810 = vsub.s32 0, %v3808
    %v3811 = vsel %vm3809, %v3810, %v3808
    %v3812 = vclz %v3811
    %v3813 = vsub.s32 %v3812, 2
    %vm3814 = vcmp.gt.s32.totalorder 0, %v3813
    %v3815 = vsel %vm3814, 0, %v3813
    %v3816 = vsub.s32 32, %v3815
    %v3817 = vshll.u32 %v3808, %v3815
    %v3818 = vshrl.u32 %v3800, %v3816
    %v3819 = vor.u32 %v3817, %v3818
    %v3820 = vsub.s32 4294967266, %v3815
    %v3821 = vadd.s32 %v3820, 127
    %v3822 = vshll.u32 %v3821, 23
    %v3823 = vor.u32 4788187, %v3822
    %v3824 = vand.u32 2147483647, %v3823
    %v3826 = vcvt.s32.f32 %v3819
    %v3827 = vmul.f32 %v3826, %v3824
    %v3828 = vxor.u32 %v3827, 2147483648
    %v3829 = vsel %vm3746, %v3828, %v3827
    %v3830 = vsub.s32 4, %v3806
    %v3831 = vsel %vm3746, %v3830, %v3806
    %v3832 = vsel %vm3745, %v2447, %v3829
    %v3833 = vsel %vm3745, 0, %v3831
    %v3834 = vcosq.f32.pop %v3832
    %v3835 = vsinq.f32.pop %v3832
    %vm3836 = vweird.f32 %v2447
    %v3837 = vand.u32 %v3833, 3
    %vm3838 = vcmp.lt.s32.totalorder %v3837, 2
    %vm3839 = vcmp.eq.s32.totalorder %v3837, 0
    %v3840 = vxor.u32 %v3835, 2147483648
    %v3841 = vsel %vm3839, %v3834, %v3840
    %vm3842 = vcmp.eq.s32.totalorder %v3837, 2
    %v3843 = vxor.u32 %v3834, 2147483648
    %v3844 = vsel %vm3842, %v3843, %v3835
    %v3845 = vsel %vm3838, %v3841, %v3844
    %v3846 = vsel %vm3836, nan, %v3845
    %v3847 = vand.u32 2147483647, %v2451
    %vm3848 = vcmp.le.f32.partialorder %v3847, 0.7853982
    %vm3849 = vcmp.lt.s32.totalorder %v2451, 0
    %v3850 = vand.u32 %v2451, 2139095040
    %v3851 = vshrl.u32 %v3850, 23
    %v3852 = vsub.s32 %v3851, 127
    %v3853 = vand.u32 2147483647, %v2451
    %v3854 = vand.u32 %v3853, 8388607
    %v3855 = vor.u32 %v3854, 8388608
    %v3856 = vsub.s32 0, %v3855
    %v3857 = vadd.s32 %v3852, 1
    %vm3858 = vcmp.gt.s32.totalorder %v3857, 0
    %v3859 = vsel %vm3858, %v3857, 0
    %v3860 = vshrl.u32 %v3859, 5
    %v3861 = vand.u32 %v3859, 31
    %v3862 = vsub.s32 32, %v3861
    %v3863 = vshrl.u32 683565275, %v3862
    %v3864 = vshll.u32 683565275, %v3861
    %v3865 = vshrl.u32 2475754826, %v3862
    %v3866 = vor.u32 %v3864, %v3865
    %v3867 = vshll.u32 2475754826, %v3861
    %v3868 = vshrl.u32 2131351028, %v3862
    %v3869 = vor.u32 %v3867, %v3868
    %v3870 = vshll.u32 2131351028, %v3861
    %v3871 = vshrl.u32 2102212464, %v3862
    %v3872 = vor.u32 %v3870, %v3871
    %v3873 = vshll.u32 2102212464, %v3861
    %v3874 = vshrl.u32 920167782, %v3862
    %v3875 = vor.u32 %v3873, %v3874
    %v3876 = vshll.u32 920167782, %v3861
    %v3877 = vshrl.u32 1326507024, %v3862
    %v3878 = vor.u32 %v3876, %v3877
    %vm3879 = vcmp.lt.s32.totalorder %v3860, 1
    %vm3880 = vcmp.lt.s32.totalorder %v3860, 2
    %vm3881 = vcmp.lt.s32.totalorder %v3860, 3
    %vm3882 = vcmp.lt.s32.totalorder %v3860, 4
    %v3883 = vsel %vm3879, %v3863, %v3866
    %v3884 = vsel %vm3882, %v3872, 2102212464
    %v3885 = vsel %vm3881, %v3869, %v3884
    %v3886 = vsel %vm3880, %v3883, %v3885
    %v3887 = vsel %vm3879, %v3866, %v3869
    %v3888 = vsel %vm3882, %v3875, 920167782
    %v3889 = vsel %vm3881, %v3872, %v3888
    %v3890 = vsel %vm3880, %v3887, %v3889
    %v3891 = vsel %vm3879, %v3869, %v3872
    %v3892 = vsel %vm3882, %v3878, 1326507024
    %v3893 = vsel %vm3881, %v3875, %v3892
    %v3894 = vsel %vm3880, %v3891, %v3893
    %v3895 = vshll.u32 %v3855, 8
    %v3896 = vmul.u32.u64.compose %v3895, %v3894
    %v3897 = vextract.low.u32 %v3896
    %v3898 = vextract.high.u32 %v3896
    %v3899 = vmul.u32.u64.compose %v3895, %v3890
    %v3900 = vextract.low.u32 %v3899
    %v3901 = vextract.high.u32 %v3899
    %v3902 = vmul.u32 %v3895, %v3886
    %v3903 = vadd.s32 %v3898, %v3900
    %vm3904 = vc.u32 %v3898, %v3900
    %v3905 = vadd.s32 %v3901, 1
    %v3906 = vsel %vm3904, %v3905, %v3901
    %v3907 = vadd.s32 %v3902, %v3906
    %v3908 = vadd.s32 %v3907, 536870912
    %v3909 = vshrl.u32 %v3908, 30
    %v3910 = vshll.u32 %v3909, 30
    %v3911 = vsub.s32 %v3907, %v3910
    %vm3912 = vcmp.lt.s32.totalorder %v3911, 0
    %v3913 = vsub.s32 0, %v3911
    %v3914 = vsel %vm3912, %v3913, %v3911
    %v3915 = vclz %v3914
    %v3916 = vsub.s32 %v3915, 2
    %vm3917 = vcmp.gt.s32.totalorder 0, %v3916
    %v3918 = vsel %vm3917, 0, %v3916
    %v3919 = vsub.s32 32, %v3918
    %v3920 = vshll.u32 %v3911, %v3918
    %v3921 = vshrl.u32 %v3903, %v3919
    %v3922 = vor.u32 %v3920, %v3921
    %v3923 = vsub.s32 4294967266, %v3918
    %v3924 = vadd.s32 %v3923, 127
    %v3925 = vshll.u32 %v3924, 23
    %v3926 = vor.u32 4788187, %v3925
    %v3927 = vand.u32 2147483647, %v3926
    %v3929 = vcvt.s32.f32 %v3922
    %v3930 = vmul.f32 %v3929, %v3927
    %v3931 = vxor.u32 %v3930, 2147483648
    %v3932 = vsel %vm3849, %v3931, %v3930
    %v3933 = vsub.s32 4, %v3909
    %v3934 = vsel %vm3849, %v3933, %v3909
    %v3935 = vsel %vm3848, %v2451, %v3932
    %v3936 = vsel %vm3848, 0, %v3934
    %v3937 = vcosq.f32.pop %v3935
    %v3938 = vsinq.f32.pop %v3935
    %vm3939 = vweird.f32 %v2451
    %v3940 = vand.u32 %v3936, 3
    %vm3941 = vcmp.lt.s32.totalorder %v3940, 2
    %vm3942 = vcmp.eq.s32.totalorder %v3940, 0
    %v3943 = vxor.u32 %v3938, 2147483648
    %v3944 = vsel %vm3942, %v3937, %v3943
    %vm3945 = vcmp.eq.s32.totalorder %v3940, 2
    %v3946 = vxor.u32 %v3937, 2147483648
    %v3947 = vsel %vm3945, %v3946, %v3938
    %v3948 = vsel %vm3941, %v3944, %v3947
    %v3949 = vsel %vm3939, nan, %v3948
    %v3950 = vand.u32 2147483647, %v2455
    %vm3951 = vcmp.le.f32.partialorder %v3950, 0.7853982
    %vm3952 = vcmp.lt.s32.totalorder %v2455, 0
    %v3953 = vand.u32 %v2455, 2139095040
    %v3954 = vshrl.u32 %v3953, 23
    %v3955 = vsub.s32 %v3954, 127
    %v3956 = vand.u32 2147483647, %v2455
    %v3957 = vand.u32 %v3956, 8388607
    %v3958 = vor.u32 %v3957, 8388608
    %v3959 = vsub.s32 0, %v3958
    %v3960 = vadd.s32 %v3955, 1
    %vm3961 = vcmp.gt.s32.totalorder %v3960, 0
    %v3962 = vsel %vm3961, %v3960, 0
    %v3963 = vshrl.u32 %v3962, 5
    %v3964 = vand.u32 %v3962, 31
    %v3965 = vsub.s32 32, %v3964
    %v3966 = vshrl.u32 683565275, %v3965
    %v3967 = vshll.u32 683565275, %v3964
    %v3968 = vshrl.u32 2475754826, %v3965
    %v3969 = vor.u32 %v3967, %v3968
    %v3970 = vshll.u32 2475754826, %v3964
    %v3971 = vshrl.u32 2131351028, %v3965
    %v3972 = vor.u32 %v3970, %v3971
    %v3973 = vshll.u32 2131351028, %v3964
    %v3974 = vshrl.u32 2102212464, %v3965
    %v3975 = vor.u32 %v3973, %v3974
    %v3976 = vshll.u32 2102212464, %v3964
    %v3977 = vshrl.u32 920167782, %v3965
    %v3978 = vor.u32 %v3976, %v3977
    %v3979 = vshll.u32 920167782, %v3964
    %v3980 = vshrl.u32 1326507024, %v3965
    %v3981 = vor.u32 %v3979, %v3980
    %vm3982 = vcmp.lt.s32.totalorder %v3963, 1
    %vm3983 = vcmp.lt.s32.totalorder %v3963, 2
    %vm3984 = vcmp.lt.s32.totalorder %v3963, 3
    %vm3985 = vcmp.lt.s32.totalorder %v3963, 4
    %v3986 = vsel %vm3982, %v3966, %v3969
    %v3987 = vsel %vm3985, %v3975, 2102212464
    %v3988 = vsel %vm3984, %v3972, %v3987
    %v3989 = vsel %vm3983, %v3986, %v3988
    %v3990 = vsel %vm3982, %v3969, %v3972
    %v3991 = vsel %vm3985, %v3978, 920167782
    %v3992 = vsel %vm3984, %v3975, %v3991
    %v3993 = vsel %vm3983, %v3990, %v3992
    %v3994 = vsel %vm3982, %v3972, %v3975
    %v3995 = vsel %vm3985, %v3981, 1326507024
    %v3996 = vsel %vm3984, %v3978, %v3995
    %v3997 = vsel %vm3983, %v3994, %v3996
    %v3998 = vshll.u32 %v3958, 8
    %v3999 = vmul.u32.u64.compose %v3998, %v3997
    %v4000 = vextract.low.u32 %v3999
    %v4001 = vextract.high.u32 %v3999
    %v4002 = vmul.u32.u64.compose %v3998, %v3993
    %v4003 = vextract.low.u32 %v4002
    %v4004 = vextract.high.u32 %v4002
    %v4005 = vmul.u32 %v3998, %v3989
    %v4006 = vadd.s32 %v4001, %v4003
    %vm4007 = vc.u32 %v4001, %v4003
    %v4008 = vadd.s32 %v4004, 1
    %v4009 = vsel %vm4007, %v4008, %v4004
    %v4010 = vadd.s32 %v4005, %v4009
    %v4011 = vadd.s32 %v4010, 536870912
    %v4012 = vshrl.u32 %v4011, 30
    %v4013 = vshll.u32 %v4012, 30
    %v4014 = vsub.s32 %v4010, %v4013
    %vm4015 = vcmp.lt.s32.totalorder %v4014, 0
    %v4016 = vsub.s32 0, %v4014
    %v4017 = vsel %vm4015, %v4016, %v4014
    %v4018 = vclz %v4017
    %v4019 = vsub.s32 %v4018, 2
    %vm4020 = vcmp.gt.s32.totalorder 0, %v4019
    %v4021 = vsel %vm4020, 0, %v4019
    %v4022 = vsub.s32 32, %v4021
    %v4023 = vshll.u32 %v4014, %v4021
    %v4024 = vshrl.u32 %v4006, %v4022
    %v4025 = vor.u32 %v4023, %v4024
    %v4026 = vsub.s32 4294967266, %v4021
    %v4027 = vadd.s32 %v4026, 127
    %v4028 = vshll.u32 %v4027, 23
    %v4029 = vor.u32 4788187, %v4028
    %v4030 = vand.u32 2147483647, %v4029
    %v4032 = vcvt.s32.f32 %v4025
    %v4033 = vmul.f32 %v4032, %v4030
    %v4034 = vxor.u32 %v4033, 2147483648
    %v4035 = vsel %vm3952, %v4034, %v4033
    %v4036 = vsub.s32 4, %v4012
    %v4037 = vsel %vm3952, %v4036, %v4012
    %v4038 = vsel %vm3951, %v2455, %v4035
    %v4039 = vsel %vm3951, 0, %v4037
    %v4040 = vcosq.f32.pop %v4038
    %v4041 = vsinq.f32.pop %v4038
    %vm4042 = vweird.f32 %v2455
    %v4043 = vand.u32 %v4039, 3
    %vm4044 = vcmp.lt.s32.totalorder %v4043, 2
    %vm4045 = vcmp.eq.s32.totalorder %v4043, 0
    %v4046 = vxor.u32 %v4041, 2147483648
    %v4047 = vsel %vm4045, %v4040, %v4046
    %vm4048 = vcmp.eq.s32.totalorder %v4043, 2
    %v4049 = vxor.u32 %v4040, 2147483648
    %v4050 = vsel %vm4048, %v4049, %v4041
    %v4051 = vsel %vm4044, %v4047, %v4050
    %v4052 = vsel %vm4042, nan, %v4051
    %v4053 = vand.u32 2147483647, %v2459
    %vm4054 = vcmp.le.f32.partialorder %v4053, 0.7853982
    %vm4055 = vcmp.lt.s32.totalorder %v2459, 0
    %v4056 = vand.u32 %v2459, 2139095040
    %v4057 = vshrl.u32 %v4056, 23
    %v4058 = vsub.s32 %v4057, 127
    %v4059 = vand.u32 2147483647, %v2459
    %v4060 = vand.u32 %v4059, 8388607
    %v4061 = vor.u32 %v4060, 8388608
    %v4062 = vsub.s32 0, %v4061
    %v4063 = vadd.s32 %v4058, 1
    %vm4064 = vcmp.gt.s32.totalorder %v4063, 0
    %v4065 = vsel %vm4064, %v4063, 0
    %v4066 = vshrl.u32 %v4065, 5
    %v4067 = vand.u32 %v4065, 31
    %v4068 = vsub.s32 32, %v4067
    %v4069 = vshrl.u32 683565275, %v4068
    %v4070 = vshll.u32 683565275, %v4067
    %v4071 = vshrl.u32 2475754826, %v4068
    %v4072 = vor.u32 %v4070, %v4071
    %v4073 = vshll.u32 2475754826, %v4067
    %v4074 = vshrl.u32 2131351028, %v4068
    %v4075 = vor.u32 %v4073, %v4074
    %v4076 = vshll.u32 2131351028, %v4067
    %v4077 = vshrl.u32 2102212464, %v4068
    %v4078 = vor.u32 %v4076, %v4077
    %v4079 = vshll.u32 2102212464, %v4067
    %v4080 = vshrl.u32 920167782, %v4068
    %v4081 = vor.u32 %v4079, %v4080
    %v4082 = vshll.u32 920167782, %v4067
    %v4083 = vshrl.u32 1326507024, %v4068
    %v4084 = vor.u32 %v4082, %v4083
    %vm4085 = vcmp.lt.s32.totalorder %v4066, 1
    %vm4086 = vcmp.lt.s32.totalorder %v4066, 2
    %vm4087 = vcmp.lt.s32.totalorder %v4066, 3
    %vm4088 = vcmp.lt.s32.totalorder %v4066, 4
    %v4089 = vsel %vm4085, %v4069, %v4072
    %v4090 = vsel %vm4088, %v4078, 2102212464
    %v4091 = vsel %vm4087, %v4075, %v4090
    %v4092 = vsel %vm4086, %v4089, %v4091
    %v4093 = vsel %vm4085, %v4072, %v4075
    %v4094 = vsel %vm4088, %v4081, 920167782
    %v4095 = vsel %vm4087, %v4078, %v4094
    %v4096 = vsel %vm4086, %v4093, %v4095
    %v4097 = vsel %vm4085, %v4075, %v4078
    %v4098 = vsel %vm4088, %v4084, 1326507024
    %v4099 = vsel %vm4087, %v4081, %v4098
    %v4100 = vsel %vm4086, %v4097, %v4099
    %v4101 = vshll.u32 %v4061, 8
    %v4102 = vmul.u32.u64.compose %v4101, %v4100
    %v4103 = vextract.low.u32 %v4102
    %v4104 = vextract.high.u32 %v4102
    %v4105 = vmul.u32.u64.compose %v4101, %v4096
    %v4106 = vextract.low.u32 %v4105
    %v4107 = vextract.high.u32 %v4105
    %v4108 = vmul.u32 %v4101, %v4092
    %v4109 = vadd.s32 %v4104, %v4106
    %vm4110 = vc.u32 %v4104, %v4106
    %v4111 = vadd.s32 %v4107, 1
    %v4112 = vsel %vm4110, %v4111, %v4107
    %v4113 = vadd.s32 %v4108, %v4112
    %v4114 = vadd.s32 %v4113, 536870912
    %v4115 = vshrl.u32 %v4114, 30
    %v4116 = vshll.u32 %v4115, 30
    %v4117 = vsub.s32 %v4113, %v4116
    %vm4118 = vcmp.lt.s32.totalorder %v4117, 0
    %v4119 = vsub.s32 0, %v4117
    %v4120 = vsel %vm4118, %v4119, %v4117
    %v4121 = vclz %v4120
    %v4122 = vsub.s32 %v4121, 2
    %vm4123 = vcmp.gt.s32.totalorder 0, %v4122
    %v4124 = vsel %vm4123, 0, %v4122
    %v4125 = vsub.s32 32, %v4124
    %v4126 = vshll.u32 %v4117, %v4124
    %v4127 = vshrl.u32 %v4109, %v4125
    %v4128 = vor.u32 %v4126, %v4127
    %v4129 = vsub.s32 4294967266, %v4124
    %v4130 = vadd.s32 %v4129, 127
    %v4131 = vshll.u32 %v4130, 23
    %v4132 = vor.u32 4788187, %v4131
    %v4133 = vand.u32 2147483647, %v4132
    %v4135 = vcvt.s32.f32 %v4128
    %v4136 = vmul.f32 %v4135, %v4133
    %v4137 = vxor.u32 %v4136, 2147483648
    %v4138 = vsel %vm4055, %v4137, %v4136
    %v4139 = vsub.s32 4, %v4115
    %v4140 = vsel %vm4055, %v4139, %v4115
    %v4141 = vsel %vm4054, %v2459, %v4138
    %v4142 = vsel %vm4054, 0, %v4140
    %v4143 = vcosq.f32.pop %v4141
    %v4144 = vsinq.f32.pop %v4141
    %vm4145 = vweird.f32 %v2459
    %v4146 = vand.u32 %v4142, 3
    %vm4147 = vcmp.lt.s32.totalorder %v4146, 2
    %vm4148 = vcmp.eq.s32.totalorder %v4146, 0
    %v4149 = vxor.u32 %v4144, 2147483648
    %v4150 = vsel %vm4148, %v4143, %v4149
    %vm4151 = vcmp.eq.s32.totalorder %v4146, 2
    %v4152 = vxor.u32 %v4143, 2147483648
    %v4153 = vsel %vm4151, %v4152, %v4144
    %v4154 = vsel %vm4147, %v4150, %v4153
    %v4155 = vsel %vm4145, nan, %v4154
    %v4156 = vmul.f32 %v2460, %v2492
    %v4157 = vmul.f32 %v2461, %v2493
    %v4158 = vmul.f32 %v2462, %v2494
    %v4159 = vmul.f32 %v2463, %v2495
    %v4160 = vmul.f32 %v2464, %v2496
    %v4161 = vmul.f32 %v2465, %v2497
    %v4162 = vmul.f32 %v2466, %v2498
    %v4163 = vmul.f32 %v2467, %v2499
    %v4164 = vmul.f32 %v4156, %v2603
    %v4165 = vmul.f32 %v4157, %v2707
    %v4166 = vmul.f32 %v4158, %v2811
    %v4167 = vmul.f32 %v4159, %v2915
    %v4168 = vmul.f32 %v4160, %v3019
    %v4169 = vmul.f32 %v4161, %v3123
    %v4170 = vmul.f32 %v4162, %v3227
    %v4171 = vmul.f32 %v4163, %v3331
    %v4172 = vmul.f32 %v4164, %v3434
    %v4173 = vmul.f32 %v4165, %v3537
    %v4174 = vmul.f32 %v4166, %v3640
    %v4175 = vmul.f32 %v4167, %v3743
    %v4176 = vmul.f32 %v4168, %v3846
    %v4177 = vmul.f32 %v4169, %v3949
    %v4178 = vmul.f32 %v4170, %v4052
    %v4179 = vmul.f32 %v4171, %v4155
    %v4180 = vld [vmem:[#allocation4] sm:$0xff]
    %v4181 = vld [vmem:[#allocation4 + $0x8] sm:$0xff]
    %v4182 = vld [vmem:[#allocation4 + $0x10] sm:$0xff]
    %v4183 = vld [vmem:[#allocation4 + $0x18] sm:$0xff]
    %v4184 = vld [vmem:[#allocation4 + $0x20] sm:$0xff]
    %v4185 = vld [vmem:[#allocation4 + $0x28] sm:$0xff]
    %v4186 = vld [vmem:[#allocation4 + $0x30] sm:$0xff]
    %v4187 = vld [vmem:[#allocation4 + $0x38] sm:$0xff]
    %v4188 = vld [vmem:[#allocation4 + $0x40] sm:$0xff]
    %v4189 = vld [vmem:[#allocation4 + $0x48] sm:$0xff]
    %v4190 = vld [vmem:[#allocation4 + $0x50] sm:$0xff]
    %v4191 = vld [vmem:[#allocation4 + $0x58] sm:$0xff]
    %v4192 = vld [vmem:[#allocation4 + $0x60] sm:$0xff]
    %v4193 = vld [vmem:[#allocation4 + $0x68] sm:$0xff]
    %v4194 = vld [vmem:[#allocation4 + $0x70] sm:$0xff]
    %v4195 = vld [vmem:[#allocation4 + $0x78] sm:$0xff]
    %v4196 = vld [vmem:[#allocation4 + $0x80] sm:$0xff]
    %v4197 = vld [vmem:[#allocation4 + $0x88] sm:$0xff]
    %v4198 = vld [vmem:[#allocation4 + $0x90] sm:$0xff]
    %v4199 = vld [vmem:[#allocation4 + $0x98] sm:$0xff]
    %v4200 = vld [vmem:[#allocation4 + $0xa0] sm:$0xff]
    %v4201 = vld [vmem:[#allocation4 + $0xa8] sm:$0xff]
    %v4202 = vld [vmem:[#allocation4 + $0xb0] sm:$0xff]
    %v4203 = vld [vmem:[#allocation4 + $0xb8] sm:$0xff]
    %v4204 = vld [vmem:[#allocation4 + $0xc0] sm:$0xff]
    %v4205 = vld [vmem:[#allocation4 + $0xc8] sm:$0xff]
    %v4206 = vld [vmem:[#allocation4 + $0xd0] sm:$0xff]
    %v4207 = vld [vmem:[#allocation4 + $0xd8] sm:$0xff]
    %v4208 = vld [vmem:[#allocation4 + $0xe0] sm:$0xff]
    %v4209 = vld [vmem:[#allocation4 + $0xe8] sm:$0xff]
    %v4210 = vld [vmem:[#allocation4 + $0xf0] sm:$0xff]
    %v4211 = vld [vmem:[#allocation4 + $0xf8] sm:$0xff]
    %v4212 = vld [vmem:[%s5] sm:$0x3]
    %v4214 = vlaneseq
    %v4215 = vshrl.u32 %v4214, 7
    %v4216 = vsub.s32 0, %v4215
    %v4217 = vrot.slane %v4212, %v4216
    %v4218 = vlaneseq
    %v4219 = vshrl.u32 %v4218, 7
    %v4220 = vsub.s32 1, %v4219
    %v4221 = vrot.slane %v4212, %v4220
    %4224 = vmatprep.subr.mxu0 %v4181
    %4225 = vmatpush1.msra.mxu0 %v4180
    %4226 = vmatprep.subr.mxu0 %v4183
    %4227 = vmatpush1.msra.mxu0 %v4182
    %4228 = vmatprep.subr.mxu0 %v4185
    %4229 = vmatpush1.msra.mxu0 %v4184
    %4230 = vmatprep.subr.mxu0 %v4187
    %4231 = vmatpush1.msra.mxu0 %v4186
    %4232 = vmatprep.subr.mxu0 %v4189
    %4233 = vmatpush1.msra.mxu0 %v4188
    %4234 = vmatprep.subr.mxu0 %v4191
    %4235 = vmatpush1.msra.mxu0 %v4190
    %4236 = vmatprep.subr.mxu0 %v4193
    %4237 = vmatpush1.msra.mxu0 %v4192
    %4238 = vmatprep.subr.mxu0 %v4195
    %4239 = vmatpush1.msra.mxu0 %v4194
    %4240 = vmatprep.subr.mxu0 %v4197
    %4241 = vmatpush1.msra.mxu0 %v4196
    %4242 = vmatprep.subr.mxu0 %v4199
    %4243 = vmatpush1.msra.mxu0 %v4198
    %4244 = vmatprep.subr.mxu0 %v4201
    %4245 = vmatpush1.msra.mxu0 %v4200
    %4246 = vmatprep.subr.mxu0 %v4203
    %4247 = vmatpush1.msra.mxu0 %v4202
    %4248 = vmatprep.subr.mxu0 %v4205
    %4249 = vmatpush1.msra.mxu0 %v4204
    %4250 = vmatprep.subr.mxu0 %v4207
    %4251 = vmatpush1.msra.mxu0 %v4206
    %4252 = vmatprep.subr.mxu0 %v4209
    %4253 = vmatpush1.msra.mxu0 %v4208
    %4254 = vmatprep.subr.mxu0 %v4211
    %4255 = vmatpush1.msra.mxu0 %v4210
    %4256 = vmatprep.subr.mxu0 0.0
    %4257 = vmatpush1.msra.mxu0 0.0
    %4258 = vmatprep.subr.mxu0 0.0
    %4259 = vmatpush1.msra.mxu0 0.0
    %4260 = vmatprep.subr.mxu0 0.0
    %4261 = vmatpush1.msra.mxu0 0.0
    %4262 = vmatprep.subr.mxu0 0.0
    %4263 = vmatpush1.msra.mxu0 0.0
    %4264 = vmatprep.subr.mxu0 0.0
    %4265 = vmatpush1.msra.mxu0 0.0
    %4266 = vmatprep.subr.mxu0 0.0
    %4267 = vmatpush1.msra.mxu0 0.0
    %4268 = vmatprep.subr.mxu0 0.0
    %4269 = vmatpush1.msra.mxu0 0.0
    %4270 = vmatprep.subr.mxu0 0.0
    %4271 = vmatpush1.msra.mxu0 0.0
    %4272 = vmatprep.subr.mxu0 0.0
    %4273 = vmatpush1.msra.mxu0 0.0
    %4274 = vmatprep.subr.mxu0 0.0
    %4275 = vmatpush1.msra.mxu0 0.0
    %4276 = vmatprep.subr.mxu0 0.0
    %4277 = vmatpush1.msra.mxu0 0.0
    %4278 = vmatprep.subr.mxu0 0.0
    %4279 = vmatpush1.msra.mxu0 0.0
    %4280 = vmatprep.subr.mxu0 0.0
    %4281 = vmatpush1.msra.mxu0 0.0
    %4282 = vmatprep.subr.mxu0 0.0
    %4283 = vmatpush1.msra.mxu0 0.0
    %4284 = vmatprep.subr.mxu0 0.0
    %4285 = vmatpush1.msra.mxu0 0.0
    %4286 = vmatprep.subr.mxu0 0.0
    %4287 = vmatpush1.msra.mxu0 0.0
    %4288 = vmatprep.mubr.f32.mxu0 0.0
    %4289 = vmatmul.mubr.f32.gmra.mrb[0].mxu0 %v4172
    %v4290 = vpop.f32.mrb[0].mxu0
    %v4291 = vadd.f32 %v4217, %v4290
    %v4292 = vpop.f32.mrb[0].mxu0
    %v4293 = vadd.f32 %v4221, %v4292
    %4294 = vmatprep.mubr.f32.mxu0 0.0
    %4295 = vmatmul.mubr.f32.gmra.mrb[0].mxu0 %v4173
    %v4296 = vpop.f32.mrb[0].mxu0
    %v4297 = vadd.f32 %v4217, %v4296
    %v4298 = vpop.f32.mrb[0].mxu0
    %v4299 = vadd.f32 %v4221, %v4298
    %4300 = vmatprep.mubr.f32.mxu0 0.0
    %4301 = vmatmul.mubr.f32.gmra.mrb[0].mxu0 %v4174
    %v4302 = vpop.f32.mrb[0].mxu0
    %v4303 = vadd.f32 %v4217, %v4302
    %v4304 = vpop.f32.mrb[0].mxu0
    %v4305 = vadd.f32 %v4221, %v4304
    %4306 = vmatprep.mubr.f32.mxu0 0.0
    %4307 = vmatmul.mubr.f32.gmra.mrb[0].mxu0 %v4175
    %v4308 = vpop.f32.mrb[0].mxu0
    %v4309 = vadd.f32 %v4217, %v4308
    %v4310 = vpop.f32.mrb[0].mxu0
    %v4311 = vadd.f32 %v4221, %v4310
    %4312 = vmatprep.mubr.f32.mxu0 0.0
    %4313 = vmatmul.mubr.f32.gmra.mrb[0].mxu0 %v4176
    %v4314 = vpop.f32.mrb[0].mxu0
    %v4315 = vadd.f32 %v4217, %v4314
    %v4316 = vpop.f32.mrb[0].mxu0
    %v4317 = vadd.f32 %v4221, %v4316
    %4318 = vmatprep.mubr.f32.mxu0 0.0
    %4319 = vmatmul.mubr.f32.gmra.mrb[0].mxu0 %v4177
    %v4320 = vpop.f32.mrb[0].mxu0
    %v4321 = vadd.f32 %v4217, %v4320
    %v4322 = vpop.f32.mrb[0].mxu0
    %v4323 = vadd.f32 %v4221, %v4322
    %4324 = vmatprep.mubr.f32.mxu0 0.0
    %4325 = vmatmul.mubr.f32.gmra.mrb[0].mxu0 %v4178
    %v4326 = vpop.f32.mrb[0].mxu0
    %v4327 = vadd.f32 %v4217, %v4326
    %v4328 = vpop.f32.mrb[0].mxu0
    %v4329 = vadd.f32 %v4221, %v4328
    %4330 = vmatprep.mubr.f32.mxu0 0.0
    %4331 = vmatmul.mubr.f32.gmra.mrb[0].mxu0 %v4179
    %v4332 = vpop.f32.mrb[0].mxu0
    %v4333 = vadd.f32 %v4217, %v4332
    %v4334 = vpop.f32.mrb[0].mxu0
    %v4335 = vadd.f32 %v4221, %v4334
    %4336 = vdwg.mxu0
    %v4337 = vtanh.pop %v4291
    %v4338 = vtanh.pop %v4297
    %v4339 = vtanh.pop %v4303
    %v4340 = vtanh.pop %v4309
    %v4341 = vtanh.pop %v4315
    %v4342 = vtanh.pop %v4321
    %v4343 = vtanh.pop %v4327
    %v4344 = vtanh.pop %v4333
    %v4345 = vmul.f32 %v4291, 0.5
    %v4346 = vmul.f32 %v4297, 0.5
    %v4347 = vmul.f32 %v4303, 0.5
    %v4348 = vmul.f32 %v4309, 0.5
    %v4349 = vmul.f32 %v4315, 0.5
    %v4350 = vmul.f32 %v4321, 0.5
    %v4351 = vmul.f32 %v4327, 0.5
    %v4352 = vmul.f32 %v4333, 0.5
    %v4353 = vtanh.pop %v4345
    %v4354 = vtanh.pop %v4346
    %v4355 = vtanh.pop %v4347
    %v4356 = vtanh.pop %v4348
    %v4357 = vtanh.pop %v4349
    %v4358 = vtanh.pop %v4350
    %v4359 = vtanh.pop %v4351
    %v4360 = vtanh.pop %v4352
    %v4361 = vadd.f32 %v4353, 1.0
    %v4362 = vadd.f32 %v4354, 1.0
    %v4363 = vadd.f32 %v4355, 1.0
    %v4364 = vadd.f32 %v4356, 1.0
    %v4365 = vadd.f32 %v4357, 1.0
    %v4366 = vadd.f32 %v4358, 1.0
    %v4367 = vadd.f32 %v4359, 1.0
    %v4368 = vadd.f32 %v4360, 1.0
    %v4369 = vmul.f32 %v4361, 0.5
    %v4370 = vmul.f32 %v4362, 0.5
    %v4371 = vmul.f32 %v4363, 0.5
    %v4372 = vmul.f32 %v4364, 0.5
    %v4373 = vmul.f32 %v4365, 0.5
    %v4374 = vmul.f32 %v4366, 0.5
    %v4375 = vmul.f32 %v4367, 0.5
    %v4376 = vmul.f32 %v4368, 0.5
    %v4377 = vand.u32 2147483647, %v4293
    %vm4378 = vcmp.le.f32.partialorder %v4377, 0.7853982
    %vm4379 = vcmp.lt.s32.totalorder %v4293, 0
    %v4380 = vand.u32 %v4293, 2139095040
    %v4381 = vshrl.u32 %v4380, 23
    %v4382 = vsub.s32 %v4381, 127
    %v4383 = vand.u32 2147483647, %v4293
    %v4384 = vand.u32 %v4383, 8388607
    %v4385 = vor.u32 %v4384, 8388608
    %v4386 = vsub.s32 0, %v4385
    %v4387 = vadd.s32 %v4382, 1
    %vm4388 = vcmp.gt.s32.totalorder %v4387, 0
    %v4389 = vsel %vm4388, %v4387, 0
    %v4390 = vshrl.u32 %v4389, 5
    %v4391 = vand.u32 %v4389, 31
    %v4392 = vsub.s32 32, %v4391
    %v4393 = vshrl.u32 683565275, %v4392
    %v4394 = vshll.u32 683565275, %v4391
    %v4395 = vshrl.u32 2475754826, %v4392
    %v4396 = vor.u32 %v4394, %v4395
    %v4397 = vshll.u32 2475754826, %v4391
    %v4398 = vshrl.u32 2131351028, %v4392
    %v4399 = vor.u32 %v4397, %v4398
    %v4400 = vshll.u32 2131351028, %v4391
    %v4401 = vshrl.u32 2102212464, %v4392
    %v4402 = vor.u32 %v4400, %v4401
    %v4403 = vshll.u32 2102212464, %v4391
    %v4404 = vshrl.u32 920167782, %v4392
    %v4405 = vor.u32 %v4403, %v4404
    %v4406 = vshll.u32 920167782, %v4391
    %v4407 = vshrl.u32 1326507024, %v4392
    %v4408 = vor.u32 %v4406, %v4407
    %vm4409 = vcmp.lt.s32.totalorder %v4390, 1
    %vm4410 = vcmp.lt.s32.totalorder %v4390, 2
    %vm4411 = vcmp.lt.s32.totalorder %v4390, 3
    %vm4412 = vcmp.lt.s32.totalorder %v4390, 4
    %v4413 = vsel %vm4409, %v4393, %v4396
    %v4414 = vsel %vm4412, %v4402, 2102212464
    %v4415 = vsel %vm4411, %v4399, %v4414
    %v4416 = vsel %vm4410, %v4413, %v4415
    %v4417 = vsel %vm4409, %v4396, %v4399
    %v4418 = vsel %vm4412, %v4405, 920167782
    %v4419 = vsel %vm4411, %v4402, %v4418
    %v4420 = vsel %vm4410, %v4417, %v4419
    %v4421 = vsel %vm4409, %v4399, %v4402
    %v4422 = vsel %vm4412, %v4408, 1326507024
    %v4423 = vsel %vm4411, %v4405, %v4422
    %v4424 = vsel %vm4410, %v4421, %v4423
    %v4425 = vshll.u32 %v4385, 8
    %v4426 = vmul.u32.u64.compose %v4425, %v4424
    %v4427 = vextract.low.u32 %v4426
    %v4428 = vextract.high.u32 %v4426
    %v4429 = vmul.u32.u64.compose %v4425, %v4420
    %v4430 = vextract.low.u32 %v4429
    %v4431 = vextract.high.u32 %v4429
    %v4432 = vmul.u32 %v4425, %v4416
    %v4433 = vadd.s32 %v4428, %v4430
    %vm4434 = vc.u32 %v4428, %v4430
    %v4435 = vadd.s32 %v4431, 1
    %v4436 = vsel %vm4434, %v4435, %v4431
    %v4437 = vadd.s32 %v4432, %v4436
    %v4438 = vadd.s32 %v4437, 536870912
    %v4439 = vshrl.u32 %v4438, 30
    %v4440 = vshll.u32 %v4439, 30
    %v4441 = vsub.s32 %v4437, %v4440
    %vm4442 = vcmp.lt.s32.totalorder %v4441, 0
    %v4443 = vsub.s32 0, %v4441
    %v4444 = vsel %vm4442, %v4443, %v4441
    %v4445 = vclz %v4444
    %v4446 = vsub.s32 %v4445, 2
    %vm4447 = vcmp.gt.s32.totalorder 0, %v4446
    %v4448 = vsel %vm4447, 0, %v4446
    %v4449 = vsub.s32 32, %v4448
    %v4450 = vshll.u32 %v4441, %v4448
    %v4451 = vshrl.u32 %v4433, %v4449
    %v4452 = vor.u32 %v4450, %v4451
    %v4453 = vsub.s32 4294967266, %v4448
    %v4454 = vadd.s32 %v4453, 127
    %v4455 = vshll.u32 %v4454, 23
    %v4456 = vor.u32 4788187, %v4455
    %v4457 = vand.u32 2147483647, %v4456
    %v4459 = vcvt.s32.f32 %v4452
    %v4460 = vmul.f32 %v4459, %v4457
    %v4461 = vxor.u32 %v4460, 2147483648
    %v4462 = vsel %vm4379, %v4461, %v4460
    %v4463 = vsub.s32 4, %v4439
    %v4464 = vsel %vm4379, %v4463, %v4439
    %v4465 = vsel %vm4378, %v4293, %v4462
    %v4466 = vsel %vm4378, 0, %v4464
    %v4467 = vcosq.f32.pop %v4465
    %v4468 = vsinq.f32.pop %v4465
    %vm4469 = vweird.f32 %v4293
    %v4470 = vadd.s32 %v4466, 3
    %v4471 = vand.u32 %v4470, 3
    %vm4472 = vcmp.lt.s32.totalorder %v4471, 2
    %vm4473 = vcmp.eq.s32.totalorder %v4471, 0
    %v4474 = vxor.u32 %v4468, 2147483648
    %v4475 = vsel %vm4473, %v4467, %v4474
    %vm4476 = vcmp.eq.s32.totalorder %v4471, 2
    %v4477 = vxor.u32 %v4467, 2147483648
    %v4478 = vsel %vm4476, %v4477, %v4468
    %v4479 = vsel %vm4472, %v4475, %v4478
    %v4480 = vsel %vm4469, nan, %v4479
    %v4481 = vand.u32 2147483647, %v4299
    %vm4482 = vcmp.le.f32.partialorder %v4481, 0.7853982
    %vm4483 = vcmp.lt.s32.totalorder %v4299, 0
    %v4484 = vand.u32 %v4299, 2139095040
    %v4485 = vshrl.u32 %v4484, 23
    %v4486 = vsub.s32 %v4485, 127
    %v4487 = vand.u32 2147483647, %v4299
    %v4488 = vand.u32 %v4487, 8388607
    %v4489 = vor.u32 %v4488, 8388608
    %v4490 = vsub.s32 0, %v4489
    %v4491 = vadd.s32 %v4486, 1
    %vm4492 = vcmp.gt.s32.totalorder %v4491, 0
    %v4493 = vsel %vm4492, %v4491, 0
    %v4494 = vshrl.u32 %v4493, 5
    %v4495 = vand.u32 %v4493, 31
    %v4496 = vsub.s32 32, %v4495
    %v4497 = vshrl.u32 683565275, %v4496
    %v4498 = vshll.u32 683565275, %v4495
    %v4499 = vshrl.u32 2475754826, %v4496
    %v4500 = vor.u32 %v4498, %v4499
    %v4501 = vshll.u32 2475754826, %v4495
    %v4502 = vshrl.u32 2131351028, %v4496
    %v4503 = vor.u32 %v4501, %v4502
    %v4504 = vshll.u32 2131351028, %v4495
    %v4505 = vshrl.u32 2102212464, %v4496
    %v4506 = vor.u32 %v4504, %v4505
    %v4507 = vshll.u32 2102212464, %v4495
    %v4508 = vshrl.u32 920167782, %v4496
    %v4509 = vor.u32 %v4507, %v4508
    %v4510 = vshll.u32 920167782, %v4495
    %v4511 = vshrl.u32 1326507024, %v4496
    %v4512 = vor.u32 %v4510, %v4511
    %vm4513 = vcmp.lt.s32.totalorder %v4494, 1
    %vm4514 = vcmp.lt.s32.totalorder %v4494, 2
    %vm4515 = vcmp.lt.s32.totalorder %v4494, 3
    %vm4516 = vcmp.lt.s32.totalorder %v4494, 4
    %v4517 = vsel %vm4513, %v4497, %v4500
    %v4518 = vsel %vm4516, %v4506, 2102212464
    %v4519 = vsel %vm4515, %v4503, %v4518
    %v4520 = vsel %vm4514, %v4517, %v4519
    %v4521 = vsel %vm4513, %v4500, %v4503
    %v4522 = vsel %vm4516, %v4509, 920167782
    %v4523 = vsel %vm4515, %v4506, %v4522
    %v4524 = vsel %vm4514, %v4521, %v4523
    %v4525 = vsel %vm4513, %v4503, %v4506
    %v4526 = vsel %vm4516, %v4512, 1326507024
    %v4527 = vsel %vm4515, %v4509, %v4526
    %v4528 = vsel %vm4514, %v4525, %v4527
    %v4529 = vshll.u32 %v4489, 8
    %v4530 = vmul.u32.u64.compose %v4529, %v4528
    %v4531 = vextract.low.u32 %v4530
    %v4532 = vextract.high.u32 %v4530
    %v4533 = vmul.u32.u64.compose %v4529, %v4524
    %v4534 = vextract.low.u32 %v4533
    %v4535 = vextract.high.u32 %v4533
    %v4536 = vmul.u32 %v4529, %v4520
    %v4537 = vadd.s32 %v4532, %v4534
    %vm4538 = vc.u32 %v4532, %v4534
    %v4539 = vadd.s32 %v4535, 1
    %v4540 = vsel %vm4538, %v4539, %v4535
    %v4541 = vadd.s32 %v4536, %v4540
    %v4542 = vadd.s32 %v4541, 536870912
    %v4543 = vshrl.u32 %v4542, 30
    %v4544 = vshll.u32 %v4543, 30
    %v4545 = vsub.s32 %v4541, %v4544
    %vm4546 = vcmp.lt.s32.totalorder %v4545, 0
    %v4547 = vsub.s32 0, %v4545
    %v4548 = vsel %vm4546, %v4547, %v4545
    %v4549 = vclz %v4548
    %v4550 = vsub.s32 %v4549, 2
    %vm4551 = vcmp.gt.s32.totalorder 0, %v4550
    %v4552 = vsel %vm4551, 0, %v4550
    %v4553 = vsub.s32 32, %v4552
    %v4554 = vshll.u32 %v4545, %v4552
    %v4555 = vshrl.u32 %v4537, %v4553
    %v4556 = vor.u32 %v4554, %v4555
    %v4557 = vsub.s32 4294967266, %v4552
    %v4558 = vadd.s32 %v4557, 127
    %v4559 = vshll.u32 %v4558, 23
    %v4560 = vor.u32 4788187, %v4559
    %v4561 = vand.u32 2147483647, %v4560
    %v4563 = vcvt.s32.f32 %v4556
    %v4564 = vmul.f32 %v4563, %v4561
    %v4565 = vxor.u32 %v4564, 2147483648
    %v4566 = vsel %vm4483, %v4565, %v4564
    %v4567 = vsub.s32 4, %v4543
    %v4568 = vsel %vm4483, %v4567, %v4543
    %v4569 = vsel %vm4482, %v4299, %v4566
    %v4570 = vsel %vm4482, 0, %v4568
    %v4571 = vcosq.f32.pop %v4569
    %v4572 = vsinq.f32.pop %v4569
    %vm4573 = vweird.f32 %v4299
    %v4574 = vadd.s32 %v4570, 3
    %v4575 = vand.u32 %v4574, 3
    %vm4576 = vcmp.lt.s32.totalorder %v4575, 2
    %vm4577 = vcmp.eq.s32.totalorder %v4575, 0
    %v4578 = vxor.u32 %v4572, 2147483648
    %v4579 = vsel %vm4577, %v4571, %v4578
    %vm4580 = vcmp.eq.s32.totalorder %v4575, 2
    %v4581 = vxor.u32 %v4571, 2147483648
    %v4582 = vsel %vm4580, %v4581, %v4572
    %v4583 = vsel %vm4576, %v4579, %v4582
    %v4584 = vsel %vm4573, nan, %v4583
    %v4585 = vand.u32 2147483647, %v4305
    %vm4586 = vcmp.le.f32.partialorder %v4585, 0.7853982
    %vm4587 = vcmp.lt.s32.totalorder %v4305, 0
    %v4588 = vand.u32 %v4305, 2139095040
    %v4589 = vshrl.u32 %v4588, 23
    %v4590 = vsub.s32 %v4589, 127
    %v4591 = vand.u32 2147483647, %v4305
    %v4592 = vand.u32 %v4591, 8388607
    %v4593 = vor.u32 %v4592, 8388608
    %v4594 = vsub.s32 0, %v4593
    %v4595 = vadd.s32 %v4590, 1
    %vm4596 = vcmp.gt.s32.totalorder %v4595, 0
    %v4597 = vsel %vm4596, %v4595, 0
    %v4598 = vshrl.u32 %v4597, 5
    %v4599 = vand.u32 %v4597, 31
    %v4600 = vsub.s32 32, %v4599
    %v4601 = vshrl.u32 683565275, %v4600
    %v4602 = vshll.u32 683565275, %v4599
    %v4603 = vshrl.u32 2475754826, %v4600
    %v4604 = vor.u32 %v4602, %v4603
    %v4605 = vshll.u32 2475754826, %v4599
    %v4606 = vshrl.u32 2131351028, %v4600
    %v4607 = vor.u32 %v4605, %v4606
    %v4608 = vshll.u32 2131351028, %v4599
    %v4609 = vshrl.u32 2102212464, %v4600
    %v4610 = vor.u32 %v4608, %v4609
    %v4611 = vshll.u32 2102212464, %v4599
    %v4612 = vshrl.u32 920167782, %v4600
    %v4613 = vor.u32 %v4611, %v4612
    %v4614 = vshll.u32 920167782, %v4599
    %v4615 = vshrl.u32 1326507024, %v4600
    %v4616 = vor.u32 %v4614, %v4615
    %vm4617 = vcmp.lt.s32.totalorder %v4598, 1
    %vm4618 = vcmp.lt.s32.totalorder %v4598, 2
    %vm4619 = vcmp.lt.s32.totalorder %v4598, 3
    %vm4620 = vcmp.lt.s32.totalorder %v4598, 4
    %v4621 = vsel %vm4617, %v4601, %v4604
    %v4622 = vsel %vm4620, %v4610, 2102212464
    %v4623 = vsel %vm4619, %v4607, %v4622
    %v4624 = vsel %vm4618, %v4621, %v4623
    %v4625 = vsel %vm4617, %v4604, %v4607
    %v4626 = vsel %vm4620, %v4613, 920167782
    %v4627 = vsel %vm4619, %v4610, %v4626
    %v4628 = vsel %vm4618, %v4625, %v4627
    %v4629 = vsel %vm4617, %v4607, %v4610
    %v4630 = vsel %vm4620, %v4616, 1326507024
    %v4631 = vsel %vm4619, %v4613, %v4630
    %v4632 = vsel %vm4618, %v4629, %v4631
    %v4633 = vshll.u32 %v4593, 8
    %v4634 = vmul.u32.u64.compose %v4633, %v4632
    %v4635 = vextract.low.u32 %v4634
    %v4636 = vextract.high.u32 %v4634
    %v4637 = vmul.u32.u64.compose %v4633, %v4628
    %v4638 = vextract.low.u32 %v4637
    %v4639 = vextract.high.u32 %v4637
    %v4640 = vmul.u32 %v4633, %v4624
    %v4641 = vadd.s32 %v4636, %v4638
    %vm4642 = vc.u32 %v4636, %v4638
    %v4643 = vadd.s32 %v4639, 1
    %v4644 = vsel %vm4642, %v4643, %v4639
    %v4645 = vadd.s32 %v4640, %v4644
    %v4646 = vadd.s32 %v4645, 536870912
    %v4647 = vshrl.u32 %v4646, 30
    %v4648 = vshll.u32 %v4647, 30
    %v4649 = vsub.s32 %v4645, %v4648
    %vm4650 = vcmp.lt.s32.totalorder %v4649, 0
    %v4651 = vsub.s32 0, %v4649
    %v4652 = vsel %vm4650, %v4651, %v4649
    %v4653 = vclz %v4652
    %v4654 = vsub.s32 %v4653, 2
    %vm4655 = vcmp.gt.s32.totalorder 0, %v4654
    %v4656 = vsel %vm4655, 0, %v4654
    %v4657 = vsub.s32 32, %v4656
    %v4658 = vshll.u32 %v4649, %v4656
    %v4659 = vshrl.u32 %v4641, %v4657
    %v4660 = vor.u32 %v4658, %v4659
    %v4661 = vsub.s32 4294967266, %v4656
    %v4662 = vadd.s32 %v4661, 127
    %v4663 = vshll.u32 %v4662, 23
    %v4664 = vor.u32 4788187, %v4663
    %v4665 = vand.u32 2147483647, %v4664
    %v4667 = vcvt.s32.f32 %v4660
    %v4668 = vmul.f32 %v4667, %v4665
    %v4669 = vxor.u32 %v4668, 2147483648
    %v4670 = vsel %vm4587, %v4669, %v4668
    %v4671 = vsub.s32 4, %v4647
    %v4672 = vsel %vm4587, %v4671, %v4647
    %v4673 = vsel %vm4586, %v4305, %v4670
    %v4674 = vsel %vm4586, 0, %v4672
    %v4675 = vcosq.f32.pop %v4673
    %v4676 = vsinq.f32.pop %v4673
    %vm4677 = vweird.f32 %v4305
    %v4678 = vadd.s32 %v4674, 3
    %v4679 = vand.u32 %v4678, 3
    %vm4680 = vcmp.lt.s32.totalorder %v4679, 2
    %vm4681 = vcmp.eq.s32.totalorder %v4679, 0
    %v4682 = vxor.u32 %v4676, 2147483648
    %v4683 = vsel %vm4681, %v4675, %v4682
    %vm4684 = vcmp.eq.s32.totalorder %v4679, 2
    %v4685 = vxor.u32 %v4675, 2147483648
    %v4686 = vsel %vm4684, %v4685, %v4676
    %v4687 = vsel %vm4680, %v4683, %v4686
    %v4688 = vsel %vm4677, nan, %v4687
    %v4689 = vand.u32 2147483647, %v4311
    %vm4690 = vcmp.le.f32.partialorder %v4689, 0.7853982
    %vm4691 = vcmp.lt.s32.totalorder %v4311, 0
    %v4692 = vand.u32 %v4311, 2139095040
    %v4693 = vshrl.u32 %v4692, 23
    %v4694 = vsub.s32 %v4693, 127
    %v4695 = vand.u32 2147483647, %v4311
    %v4696 = vand.u32 %v4695, 8388607
    %v4697 = vor.u32 %v4696, 8388608
    %v4698 = vsub.s32 0, %v4697
    %v4699 = vadd.s32 %v4694, 1
    %vm4700 = vcmp.gt.s32.totalorder %v4699, 0
    %v4701 = vsel %vm4700, %v4699, 0
    %v4702 = vshrl.u32 %v4701, 5
    %v4703 = vand.u32 %v4701, 31
    %v4704 = vsub.s32 32, %v4703
    %v4705 = vshrl.u32 683565275, %v4704
    %v4706 = vshll.u32 683565275, %v4703
    %v4707 = vshrl.u32 2475754826, %v4704
    %v4708 = vor.u32 %v4706, %v4707
    %v4709 = vshll.u32 2475754826, %v4703
    %v4710 = vshrl.u32 2131351028, %v4704
    %v4711 = vor.u32 %v4709, %v4710
    %v4712 = vshll.u32 2131351028, %v4703
    %v4713 = vshrl.u32 2102212464, %v4704
    %v4714 = vor.u32 %v4712, %v4713
    %v4715 = vshll.u32 2102212464, %v4703
    %v4716 = vshrl.u32 920167782, %v4704
    %v4717 = vor.u32 %v4715, %v4716
    %v4718 = vshll.u32 920167782, %v4703
    %v4719 = vshrl.u32 1326507024, %v4704
    %v4720 = vor.u32 %v4718, %v4719
    %vm4721 = vcmp.lt.s32.totalorder %v4702, 1
    %vm4722 = vcmp.lt.s32.totalorder %v4702, 2
    %vm4723 = vcmp.lt.s32.totalorder %v4702, 3
    %vm4724 = vcmp.lt.s32.totalorder %v4702, 4
    %v4725 = vsel %vm4721, %v4705, %v4708
    %v4726 = vsel %vm4724, %v4714, 2102212464
    %v4727 = vsel %vm4723, %v4711, %v4726
    %v4728 = vsel %vm4722, %v4725, %v4727
    %v4729 = vsel %vm4721, %v4708, %v4711
    %v4730 = vsel %vm4724, %v4717, 920167782
    %v4731 = vsel %vm4723, %v4714, %v4730
    %v4732 = vsel %vm4722, %v4729, %v4731
    %v4733 = vsel %vm4721, %v4711, %v4714
    %v4734 = vsel %vm4724, %v4720, 1326507024
    %v4735 = vsel %vm4723, %v4717, %v4734
    %v4736 = vsel %vm4722, %v4733, %v4735
    %v4737 = vshll.u32 %v4697, 8
    %v4738 = vmul.u32.u64.compose %v4737, %v4736
    %v4739 = vextract.low.u32 %v4738
    %v4740 = vextract.high.u32 %v4738
    %v4741 = vmul.u32.u64.compose %v4737, %v4732
    %v4742 = vextract.low.u32 %v4741
    %v4743 = vextract.high.u32 %v4741
    %v4744 = vmul.u32 %v4737, %v4728
    %v4745 = vadd.s32 %v4740, %v4742
    %vm4746 = vc.u32 %v4740, %v4742
    %v4747 = vadd.s32 %v4743, 1
    %v4748 = vsel %vm4746, %v4747, %v4743
    %v4749 = vadd.s32 %v4744, %v4748
    %v4750 = vadd.s32 %v4749, 536870912
    %v4751 = vshrl.u32 %v4750, 30
    %v4752 = vshll.u32 %v4751, 30
    %v4753 = vsub.s32 %v4749, %v4752
    %vm4754 = vcmp.lt.s32.totalorder %v4753, 0
    %v4755 = vsub.s32 0, %v4753
    %v4756 = vsel %vm4754, %v4755, %v4753
    %v4757 = vclz %v4756
    %v4758 = vsub.s32 %v4757, 2
    %vm4759 = vcmp.gt.s32.totalorder 0, %v4758
    %v4760 = vsel %vm4759, 0, %v4758
    %v4761 = vsub.s32 32, %v4760
    %v4762 = vshll.u32 %v4753, %v4760
    %v4763 = vshrl.u32 %v4745, %v4761
    %v4764 = vor.u32 %v4762, %v4763
    %v4765 = vsub.s32 4294967266, %v4760
    %v4766 = vadd.s32 %v4765, 127
    %v4767 = vshll.u32 %v4766, 23
    %v4768 = vor.u32 4788187, %v4767
    %v4769 = vand.u32 2147483647, %v4768
    %v4771 = vcvt.s32.f32 %v4764
    %v4772 = vmul.f32 %v4771, %v4769
    %v4773 = vxor.u32 %v4772, 2147483648
    %v4774 = vsel %vm4691, %v4773, %v4772
    %v4775 = vsub.s32 4, %v4751
    %v4776 = vsel %vm4691, %v4775, %v4751
    %v4777 = vsel %vm4690, %v4311, %v4774
    %v4778 = vsel %vm4690, 0, %v4776
    %v4779 = vcosq.f32.pop %v4777
    %v4780 = vsinq.f32.pop %v4777
    %vm4781 = vweird.f32 %v4311
    %v4782 = vadd.s32 %v4778, 3
    %v4783 = vand.u32 %v4782, 3
    %vm4784 = vcmp.lt.s32.totalorder %v4783, 2
    %vm4785 = vcmp.eq.s32.totalorder %v4783, 0
    %v4786 = vxor.u32 %v4780, 2147483648
    %v4787 = vsel %vm4785, %v4779, %v4786
    %vm4788 = vcmp.eq.s32.totalorder %v4783, 2
    %v4789 = vxor.u32 %v4779, 2147483648
    %v4790 = vsel %vm4788, %v4789, %v4780
    %v4791 = vsel %vm4784, %v4787, %v4790
    %v4792 = vsel %vm4781, nan, %v4791
    %v4793 = vand.u32 2147483647, %v4317
    %vm4794 = vcmp.le.f32.partialorder %v4793, 0.7853982
    %vm4795 = vcmp.lt.s32.totalorder %v4317, 0
    %v4796 = vand.u32 %v4317, 2139095040
    %v4797 = vshrl.u32 %v4796, 23
    %v4798 = vsub.s32 %v4797, 127
    %v4799 = vand.u32 2147483647, %v4317
    %v4800 = vand.u32 %v4799, 8388607
    %v4801 = vor.u32 %v4800, 8388608
    %v4802 = vsub.s32 0, %v4801
    %v4803 = vadd.s32 %v4798, 1
    %vm4804 = vcmp.gt.s32.totalorder %v4803, 0
    %v4805 = vsel %vm4804, %v4803, 0
    %v4806 = vshrl.u32 %v4805, 5
    %v4807 = vand.u32 %v4805, 31
    %v4808 = vsub.s32 32, %v4807
    %v4809 = vshrl.u32 683565275, %v4808
    %v4810 = vshll.u32 683565275, %v4807
    %v4811 = vshrl.u32 2475754826, %v4808
    %v4812 = vor.u32 %v4810, %v4811
    %v4813 = vshll.u32 2475754826, %v4807
    %v4814 = vshrl.u32 2131351028, %v4808
    %v4815 = vor.u32 %v4813, %v4814
    %v4816 = vshll.u32 2131351028, %v4807
    %v4817 = vshrl.u32 2102212464, %v4808
    %v4818 = vor.u32 %v4816, %v4817
    %v4819 = vshll.u32 2102212464, %v4807
    %v4820 = vshrl.u32 920167782, %v4808
    %v4821 = vor.u32 %v4819, %v4820
    %v4822 = vshll.u32 920167782, %v4807
    %v4823 = vshrl.u32 1326507024, %v4808
    %v4824 = vor.u32 %v4822, %v4823
    %vm4825 = vcmp.lt.s32.totalorder %v4806, 1
    %vm4826 = vcmp.lt.s32.totalorder %v4806, 2
    %vm4827 = vcmp.lt.s32.totalorder %v4806, 3
    %vm4828 = vcmp.lt.s32.totalorder %v4806, 4
    %v4829 = vsel %vm4825, %v4809, %v4812
    %v4830 = vsel %vm4828, %v4818, 2102212464
    %v4831 = vsel %vm4827, %v4815, %v4830
    %v4832 = vsel %vm4826, %v4829, %v4831
    %v4833 = vsel %vm4825, %v4812, %v4815
    %v4834 = vsel %vm4828, %v4821, 920167782
    %v4835 = vsel %vm4827, %v4818, %v4834
    %v4836 = vsel %vm4826, %v4833, %v4835
    %v4837 = vsel %vm4825, %v4815, %v4818
    %v4838 = vsel %vm4828, %v4824, 1326507024
    %v4839 = vsel %vm4827, %v4821, %v4838
    %v4840 = vsel %vm4826, %v4837, %v4839
    %v4841 = vshll.u32 %v4801, 8
    %v4842 = vmul.u32.u64.compose %v4841, %v4840
    %v4843 = vextract.low.u32 %v4842
    %v4844 = vextract.high.u32 %v4842
    %v4845 = vmul.u32.u64.compose %v4841, %v4836
    %v4846 = vextract.low.u32 %v4845
    %v4847 = vextract.high.u32 %v4845
    %v4848 = vmul.u32 %v4841, %v4832
    %v4849 = vadd.s32 %v4844, %v4846
    %vm4850 = vc.u32 %v4844, %v4846
    %v4851 = vadd.s32 %v4847, 1
    %v4852 = vsel %vm4850, %v4851, %v4847
    %v4853 = vadd.s32 %v4848, %v4852
    %v4854 = vadd.s32 %v4853, 536870912
    %v4855 = vshrl.u32 %v4854, 30
    %v4856 = vshll.u32 %v4855, 30
    %v4857 = vsub.s32 %v4853, %v4856
    %vm4858 = vcmp.lt.s32.totalorder %v4857, 0
    %v4859 = vsub.s32 0, %v4857
    %v4860 = vsel %vm4858, %v4859, %v4857
    %v4861 = vclz %v4860
    %v4862 = vsub.s32 %v4861, 2
    %vm4863 = vcmp.gt.s32.totalorder 0, %v4862
    %v4864 = vsel %vm4863, 0, %v4862
    %v4865 = vsub.s32 32, %v4864
    %v4866 = vshll.u32 %v4857, %v4864
    %v4867 = vshrl.u32 %v4849, %v4865
    %v4868 = vor.u32 %v4866, %v4867
    %v4869 = vsub.s32 4294967266, %v4864
    %v4870 = vadd.s32 %v4869, 127
    %v4871 = vshll.u32 %v4870, 23
    %v4872 = vor.u32 4788187, %v4871
    %v4873 = vand.u32 2147483647, %v4872
    %v4875 = vcvt.s32.f32 %v4868
    %v4876 = vmul.f32 %v4875, %v4873
    %v4877 = vxor.u32 %v4876, 2147483648
    %v4878 = vsel %vm4795, %v4877, %v4876
    %v4879 = vsub.s32 4, %v4855
    %v4880 = vsel %vm4795, %v4879, %v4855
    %v4881 = vsel %vm4794, %v4317, %v4878
    %v4882 = vsel %vm4794, 0, %v4880
    %v4883 = vcosq.f32.pop %v4881
    %v4884 = vsinq.f32.pop %v4881
    %vm4885 = vweird.f32 %v4317
    %v4886 = vadd.s32 %v4882, 3
    %v4887 = vand.u32 %v4886, 3
    %vm4888 = vcmp.lt.s32.totalorder %v4887, 2
    %vm4889 = vcmp.eq.s32.totalorder %v4887, 0
    %v4890 = vxor.u32 %v4884, 2147483648
    %v4891 = vsel %vm4889, %v4883, %v4890
    %vm4892 = vcmp.eq.s32.totalorder %v4887, 2
    %v4893 = vxor.u32 %v4883, 2147483648
    %v4894 = vsel %vm4892, %v4893, %v4884
    %v4895 = vsel %vm4888, %v4891, %v4894
    %v4896 = vsel %vm4885, nan, %v4895
    %v4897 = vand.u32 2147483647, %v4323
    %vm4898 = vcmp.le.f32.partialorder %v4897, 0.7853982
    %vm4899 = vcmp.lt.s32.totalorder %v4323, 0
    %v4900 = vand.u32 %v4323, 2139095040
    %v4901 = vshrl.u32 %v4900, 23
    %v4902 = vsub.s32 %v4901, 127
    %v4903 = vand.u32 2147483647, %v4323
    %v4904 = vand.u32 %v4903, 8388607
    %v4905 = vor.u32 %v4904, 8388608
    %v4906 = vsub.s32 0, %v4905
    %v4907 = vadd.s32 %v4902, 1
    %vm4908 = vcmp.gt.s32.totalorder %v4907, 0
    %v4909 = vsel %vm4908, %v4907, 0
    %v4910 = vshrl.u32 %v4909, 5
    %v4911 = vand.u32 %v4909, 31
    %v4912 = vsub.s32 32, %v4911
    %v4913 = vshrl.u32 683565275, %v4912
    %v4914 = vshll.u32 683565275, %v4911
    %v4915 = vshrl.u32 2475754826, %v4912
    %v4916 = vor.u32 %v4914, %v4915
    %v4917 = vshll.u32 2475754826, %v4911
    %v4918 = vshrl.u32 2131351028, %v4912
    %v4919 = vor.u32 %v4917, %v4918
    %v4920 = vshll.u32 2131351028, %v4911
    %v4921 = vshrl.u32 2102212464, %v4912
    %v4922 = vor.u32 %v4920, %v4921
    %v4923 = vshll.u32 2102212464, %v4911
    %v4924 = vshrl.u32 920167782, %v4912
    %v4925 = vor.u32 %v4923, %v4924
    %v4926 = vshll.u32 920167782, %v4911
    %v4927 = vshrl.u32 1326507024, %v4912
    %v4928 = vor.u32 %v4926, %v4927
    %vm4929 = vcmp.lt.s32.totalorder %v4910, 1
    %vm4930 = vcmp.lt.s32.totalorder %v4910, 2
    %vm4931 = vcmp.lt.s32.totalorder %v4910, 3
    %vm4932 = vcmp.lt.s32.totalorder %v4910, 4
    %v4933 = vsel %vm4929, %v4913, %v4916
    %v4934 = vsel %vm4932, %v4922, 2102212464
    %v4935 = vsel %vm4931, %v4919, %v4934
    %v4936 = vsel %vm4930, %v4933, %v4935
    %v4937 = vsel %vm4929, %v4916, %v4919
    %v4938 = vsel %vm4932, %v4925, 920167782
    %v4939 = vsel %vm4931, %v4922, %v4938
    %v4940 = vsel %vm4930, %v4937, %v4939
    %v4941 = vsel %vm4929, %v4919, %v4922
    %v4942 = vsel %vm4932, %v4928, 1326507024
    %v4943 = vsel %vm4931, %v4925, %v4942
    %v4944 = vsel %vm4930, %v4941, %v4943
    %v4945 = vshll.u32 %v4905, 8
    %v4946 = vmul.u32.u64.compose %v4945, %v4944
    %v4947 = vextract.low.u32 %v4946
    %v4948 = vextract.high.u32 %v4946
    %v4949 = vmul.u32.u64.compose %v4945, %v4940
    %v4950 = vextract.low.u32 %v4949
    %v4951 = vextract.high.u32 %v4949
    %v4952 = vmul.u32 %v4945, %v4936
    %v4953 = vadd.s32 %v4948, %v4950
    %vm4954 = vc.u32 %v4948, %v4950
    %v4955 = vadd.s32 %v4951, 1
    %v4956 = vsel %vm4954, %v4955, %v4951
    %v4957 = vadd.s32 %v4952, %v4956
    %v4958 = vadd.s32 %v4957, 536870912
    %v4959 = vshrl.u32 %v4958, 30
    %v4960 = vshll.u32 %v4959, 30
    %v4961 = vsub.s32 %v4957, %v4960
    %vm4962 = vcmp.lt.s32.totalorder %v4961, 0
    %v4963 = vsub.s32 0, %v4961
    %v4964 = vsel %vm4962, %v4963, %v4961
    %v4965 = vclz %v4964
    %v4966 = vsub.s32 %v4965, 2
    %vm4967 = vcmp.gt.s32.totalorder 0, %v4966
    %v4968 = vsel %vm4967, 0, %v4966
    %v4969 = vsub.s32 32, %v4968
    %v4970 = vshll.u32 %v4961, %v4968
    %v4971 = vshrl.u32 %v4953, %v4969
    %v4972 = vor.u32 %v4970, %v4971
    %v4973 = vsub.s32 4294967266, %v4968
    %v4974 = vadd.s32 %v4973, 127
    %v4975 = vshll.u32 %v4974, 23
    %v4976 = vor.u32 4788187, %v4975
    %v4977 = vand.u32 2147483647, %v4976
    %v4979 = vcvt.s32.f32 %v4972
    %v4980 = vmul.f32 %v4979, %v4977
    %v4981 = vxor.u32 %v4980, 2147483648
    %v4982 = vsel %vm4899, %v4981, %v4980
    %v4983 = vsub.s32 4, %v4959
    %v4984 = vsel %vm4899, %v4983, %v4959
    %v4985 = vsel %vm4898, %v4323, %v4982
    %v4986 = vsel %vm4898, 0, %v4984
    %v4987 = vcosq.f32.pop %v4985
    %v4988 = vsinq.f32.pop %v4985
    %vm4989 = vweird.f32 %v4323
    %v4990 = vadd.s32 %v4986, 3
    %v4991 = vand.u32 %v4990, 3
    %vm4992 = vcmp.lt.s32.totalorder %v4991, 2
    %vm4993 = vcmp.eq.s32.totalorder %v4991, 0
    %v4994 = vxor.u32 %v4988, 2147483648
    %v4995 = vsel %vm4993, %v4987, %v4994
    %vm4996 = vcmp.eq.s32.totalorder %v4991, 2
    %v4997 = vxor.u32 %v4987, 2147483648
    %v4998 = vsel %vm4996, %v4997, %v4988
    %v4999 = vsel %vm4992, %v4995, %v4998
    %v5000 = vsel %vm4989, nan, %v4999
    %v5001 = vand.u32 2147483647, %v4329
    %vm5002 = vcmp.le.f32.partialorder %v5001, 0.7853982
    %vm5003 = vcmp.lt.s32.totalorder %v4329, 0
    %v5004 = vand.u32 %v4329, 2139095040
    %v5005 = vshrl.u32 %v5004, 23
    %v5006 = vsub.s32 %v5005, 127
    %v5007 = vand.u32 2147483647, %v4329
    %v5008 = vand.u32 %v5007, 8388607
    %v5009 = vor.u32 %v5008, 8388608
    %v5010 = vsub.s32 0, %v5009
    %v5011 = vadd.s32 %v5006, 1
    %vm5012 = vcmp.gt.s32.totalorder %v5011, 0
    %v5013 = vsel %vm5012, %v5011, 0
    %v5014 = vshrl.u32 %v5013, 5
    %v5015 = vand.u32 %v5013, 31
    %v5016 = vsub.s32 32, %v5015
    %v5017 = vshrl.u32 683565275, %v5016
    %v5018 = vshll.u32 683565275, %v5015
    %v5019 = vshrl.u32 2475754826, %v5016
    %v5020 = vor.u32 %v5018, %v5019
    %v5021 = vshll.u32 2475754826, %v5015
    %v5022 = vshrl.u32 2131351028, %v5016
    %v5023 = vor.u32 %v5021, %v5022
    %v5024 = vshll.u32 2131351028, %v5015
    %v5025 = vshrl.u32 2102212464, %v5016
    %v5026 = vor.u32 %v5024, %v5025
    %v5027 = vshll.u32 2102212464, %v5015
    %v5028 = vshrl.u32 920167782, %v5016
    %v5029 = vor.u32 %v5027, %v5028
    %v5030 = vshll.u32 920167782, %v5015
    %v5031 = vshrl.u32 1326507024, %v5016
    %v5032 = vor.u32 %v5030, %v5031
    %vm5033 = vcmp.lt.s32.totalorder %v5014, 1
    %vm5034 = vcmp.lt.s32.totalorder %v5014, 2
    %vm5035 = vcmp.lt.s32.totalorder %v5014, 3
    %vm5036 = vcmp.lt.s32.totalorder %v5014, 4
    %v5037 = vsel %vm5033, %v5017, %v5020
    %v5038 = vsel %vm5036, %v5026, 2102212464
    %v5039 = vsel %vm5035, %v5023, %v5038
    %v5040 = vsel %vm5034, %v5037, %v5039
    %v5041 = vsel %vm5033, %v5020, %v5023
    %v5042 = vsel %vm5036, %v5029, 920167782
    %v5043 = vsel %vm5035, %v5026, %v5042
    %v5044 = vsel %vm5034, %v5041, %v5043
    %v5045 = vsel %vm5033, %v5023, %v5026
    %v5046 = vsel %vm5036, %v5032, 1326507024
    %v5047 = vsel %vm5035, %v5029, %v5046
    %v5048 = vsel %vm5034, %v5045, %v5047
    %v5049 = vshll.u32 %v5009, 8
    %v5050 = vmul.u32.u64.compose %v5049, %v5048
    %v5051 = vextract.low.u32 %v5050
    %v5052 = vextract.high.u32 %v5050
    %v5053 = vmul.u32.u64.compose %v5049, %v5044
    %v5054 = vextract.low.u32 %v5053
    %v5055 = vextract.high.u32 %v5053
    %v5056 = vmul.u32 %v5049, %v5040
    %v5057 = vadd.s32 %v5052, %v5054
    %vm5058 = vc.u32 %v5052, %v5054
    %v5059 = vadd.s32 %v5055, 1
    %v5060 = vsel %vm5058, %v5059, %v5055
    %v5061 = vadd.s32 %v5056, %v5060
    %v5062 = vadd.s32 %v5061, 536870912
    %v5063 = vshrl.u32 %v5062, 30
    %v5064 = vshll.u32 %v5063, 30
    %v5065 = vsub.s32 %v5061, %v5064
    %vm5066 = vcmp.lt.s32.totalorder %v5065, 0
    %v5067 = vsub.s32 0, %v5065
    %v5068 = vsel %vm5066, %v5067, %v5065
    %v5069 = vclz %v5068
    %v5070 = vsub.s32 %v5069, 2
    %vm5071 = vcmp.gt.s32.totalorder 0, %v5070
    %v5072 = vsel %vm5071, 0, %v5070
    %v5073 = vsub.s32 32, %v5072
    %v5074 = vshll.u32 %v5065, %v5072
    %v5075 = vshrl.u32 %v5057, %v5073
    %v5076 = vor.u32 %v5074, %v5075
    %v5077 = vsub.s32 4294967266, %v5072
    %v5078 = vadd.s32 %v5077, 127
    %v5079 = vshll.u32 %v5078, 23
    %v5080 = vor.u32 4788187, %v5079
    %v5081 = vand.u32 2147483647, %v5080
    %v5083 = vcvt.s32.f32 %v5076
    %v5084 = vmul.f32 %v5083, %v5081
    %v5085 = vxor.u32 %v5084, 2147483648
    %v5086 = vsel %vm5003, %v5085, %v5084
    %v5087 = vsub.s32 4, %v5063
    %v5088 = vsel %vm5003, %v5087, %v5063
    %v5089 = vsel %vm5002, %v4329, %v5086
    %v5090 = vsel %vm5002, 0, %v5088
    %v5091 = vcosq.f32.pop %v5089
    %v5092 = vsinq.f32.pop %v5089
    %vm5093 = vweird.f32 %v4329
    %v5094 = vadd.s32 %v5090, 3
    %v5095 = vand.u32 %v5094, 3
    %vm5096 = vcmp.lt.s32.totalorder %v5095, 2
    %vm5097 = vcmp.eq.s32.totalorder %v5095, 0
    %v5098 = vxor.u32 %v5092, 2147483648
    %v5099 = vsel %vm5097, %v5091, %v5098
    %vm5100 = vcmp.eq.s32.totalorder %v5095, 2
    %v5101 = vxor.u32 %v5091, 2147483648
    %v5102 = vsel %vm5100, %v5101, %v5092
    %v5103 = vsel %vm5096, %v5099, %v5102
    %v5104 = vsel %vm5093, nan, %v5103
    %v5105 = vand.u32 2147483647, %v4335
    %vm5106 = vcmp.le.f32.partialorder %v5105, 0.7853982
    %vm5107 = vcmp.lt.s32.totalorder %v4335, 0
    %v5108 = vand.u32 %v4335, 2139095040
    %v5109 = vshrl.u32 %v5108, 23
    %v5110 = vsub.s32 %v5109, 127
    %v5111 = vand.u32 2147483647, %v4335
    %v5112 = vand.u32 %v5111, 8388607
    %v5113 = vor.u32 %v5112, 8388608
    %v5114 = vsub.s32 0, %v5113
    %v5115 = vadd.s32 %v5110, 1
    %vm5116 = vcmp.gt.s32.totalorder %v5115, 0
    %v5117 = vsel %vm5116, %v5115, 0
    %v5118 = vshrl.u32 %v5117, 5
    %v5119 = vand.u32 %v5117, 31
    %v5120 = vsub.s32 32, %v5119
    %v5121 = vshrl.u32 683565275, %v5120
    %v5122 = vshll.u32 683565275, %v5119
    %v5123 = vshrl.u32 2475754826, %v5120
    %v5124 = vor.u32 %v5122, %v5123
    %v5125 = vshll.u32 2475754826, %v5119
    %v5126 = vshrl.u32 2131351028, %v5120
    %v5127 = vor.u32 %v5125, %v5126
    %v5128 = vshll.u32 2131351028, %v5119
    %v5129 = vshrl.u32 2102212464, %v5120
    %v5130 = vor.u32 %v5128, %v5129
    %v5131 = vshll.u32 2102212464, %v5119
    %v5132 = vshrl.u32 920167782, %v5120
    %v5133 = vor.u32 %v5131, %v5132
    %v5134 = vshll.u32 920167782, %v5119
    %v5135 = vshrl.u32 1326507024, %v5120
    %v5136 = vor.u32 %v5134, %v5135
    %vm5137 = vcmp.lt.s32.totalorder %v5118, 1
    %vm5138 = vcmp.lt.s32.totalorder %v5118, 2
    %vm5139 = vcmp.lt.s32.totalorder %v5118, 3
    %vm5140 = vcmp.lt.s32.totalorder %v5118, 4
    %v5141 = vsel %vm5137, %v5121, %v5124
    %v5142 = vsel %vm5140, %v5130, 2102212464
    %v5143 = vsel %vm5139, %v5127, %v5142
    %v5144 = vsel %vm5138, %v5141, %v5143
    %v5145 = vsel %vm5137, %v5124, %v5127
    %v5146 = vsel %vm5140, %v5133, 920167782
    %v5147 = vsel %vm5139, %v5130, %v5146
    %v5148 = vsel %vm5138, %v5145, %v5147
    %v5149 = vsel %vm5137, %v5127, %v5130
    %v5150 = vsel %vm5140, %v5136, 1326507024
    %v5151 = vsel %vm5139, %v5133, %v5150
    %v5152 = vsel %vm5138, %v5149, %v5151
    %v5153 = vshll.u32 %v5113, 8
    %v5154 = vmul.u32.u64.compose %v5153, %v5152
    %v5155 = vextract.low.u32 %v5154
    %v5156 = vextract.high.u32 %v5154
    %v5157 = vmul.u32.u64.compose %v5153, %v5148
    %v5158 = vextract.low.u32 %v5157
    %v5159 = vextract.high.u32 %v5157
    %v5160 = vmul.u32 %v5153, %v5144
    %v5161 = vadd.s32 %v5156, %v5158
    %vm5162 = vc.u32 %v5156, %v5158
    %v5163 = vadd.s32 %v5159, 1
    %v5164 = vsel %vm5162, %v5163, %v5159
    %v5165 = vadd.s32 %v5160, %v5164
    %v5166 = vadd.s32 %v5165, 536870912
    %v5167 = vshrl.u32 %v5166, 30
    %v5168 = vshll.u32 %v5167, 30
    %v5169 = vsub.s32 %v5165, %v5168
    %vm5170 = vcmp.lt.s32.totalorder %v5169, 0
    %v5171 = vsub.s32 0, %v5169
    %v5172 = vsel %vm5170, %v5171, %v5169
    %v5173 = vclz %v5172
    %v5174 = vsub.s32 %v5173, 2
    %vm5175 = vcmp.gt.s32.totalorder 0, %v5174
    %v5176 = vsel %vm5175, 0, %v5174
    %v5177 = vsub.s32 32, %v5176
    %v5178 = vshll.u32 %v5169, %v5176
    %v5179 = vshrl.u32 %v5161, %v5177
    %v5180 = vor.u32 %v5178, %v5179
    %v5181 = vsub.s32 4294967266, %v5176
    %v5182 = vadd.s32 %v5181, 127
    %v5183 = vshll.u32 %v5182, 23
    %v5184 = vor.u32 4788187, %v5183
    %v5185 = vand.u32 2147483647, %v5184
    %v5187 = vcvt.s32.f32 %v5180
    %v5188 = vmul.f32 %v5187, %v5185
    %v5189 = vxor.u32 %v5188, 2147483648
    %v5190 = vsel %vm5107, %v5189, %v5188
    %v5191 = vsub.s32 4, %v5167
    %v5192 = vsel %vm5107, %v5191, %v5167
    %v5193 = vsel %vm5106, %v4335, %v5190
    %v5194 = vsel %vm5106, 0, %v5192
    %v5195 = vcosq.f32.pop %v5193
    %v5196 = vsinq.f32.pop %v5193
    %vm5197 = vweird.f32 %v4335
    %v5198 = vadd.s32 %v5194, 3
    %v5199 = vand.u32 %v5198, 3
    %vm5200 = vcmp.lt.s32.totalorder %v5199, 2
    %vm5201 = vcmp.eq.s32.totalorder %v5199, 0
    %v5202 = vxor.u32 %v5196, 2147483648
    %v5203 = vsel %vm5201, %v5195, %v5202
    %vm5204 = vcmp.eq.s32.totalorder %v5199, 2
    %v5205 = vxor.u32 %v5195, 2147483648
    %v5206 = vsel %vm5204, %v5205, %v5196
    %v5207 = vsel %vm5200, %v5203, %v5206
    %v5208 = vsel %vm5197, nan, %v5207
    %v5209 = vand.u32 2147483647, %v4293
    %vm5210 = vcmp.le.f32.partialorder %v5209, 0.7853982
    %vm5211 = vcmp.lt.s32.totalorder %v4293, 0
    %v5212 = vand.u32 %v4293, 2139095040
    %v5213 = vshrl.u32 %v5212, 23
    %v5214 = vsub.s32 %v5213, 127
    %v5215 = vand.u32 2147483647, %v4293
    %v5216 = vand.u32 %v5215, 8388607
    %v5217 = vor.u32 %v5216, 8388608
    %v5218 = vsub.s32 0, %v5217
    %v5219 = vadd.s32 %v5214, 1
    %vm5220 = vcmp.gt.s32.totalorder %v5219, 0
    %v5221 = vsel %vm5220, %v5219, 0
    %v5222 = vshrl.u32 %v5221, 5
    %v5223 = vand.u32 %v5221, 31
    %v5224 = vsub.s32 32, %v5223
    %v5225 = vshrl.u32 683565275, %v5224
    %v5226 = vshll.u32 683565275, %v5223
    %v5227 = vshrl.u32 2475754826, %v5224
    %v5228 = vor.u32 %v5226, %v5227
    %v5229 = vshll.u32 2475754826, %v5223
    %v5230 = vshrl.u32 2131351028, %v5224
    %v5231 = vor.u32 %v5229, %v5230
    %v5232 = vshll.u32 2131351028, %v5223
    %v5233 = vshrl.u32 2102212464, %v5224
    %v5234 = vor.u32 %v5232, %v5233
    %v5235 = vshll.u32 2102212464, %v5223
    %v5236 = vshrl.u32 920167782, %v5224
    %v5237 = vor.u32 %v5235, %v5236
    %v5238 = vshll.u32 920167782, %v5223
    %v5239 = vshrl.u32 1326507024, %v5224
    %v5240 = vor.u32 %v5238, %v5239
    %vm5241 = vcmp.lt.s32.totalorder %v5222, 1
    %vm5242 = vcmp.lt.s32.totalorder %v5222, 2
    %vm5243 = vcmp.lt.s32.totalorder %v5222, 3
    %vm5244 = vcmp.lt.s32.totalorder %v5222, 4
    %v5245 = vsel %vm5241, %v5225, %v5228
    %v5246 = vsel %vm5244, %v5234, 2102212464
    %v5247 = vsel %vm5243, %v5231, %v5246
    %v5248 = vsel %vm5242, %v5245, %v5247
    %v5249 = vsel %vm5241, %v5228, %v5231
    %v5250 = vsel %vm5244, %v5237, 920167782
    %v5251 = vsel %vm5243, %v5234, %v5250
    %v5252 = vsel %vm5242, %v5249, %v5251
    %v5253 = vsel %vm5241, %v5231, %v5234
    %v5254 = vsel %vm5244, %v5240, 1326507024
    %v5255 = vsel %vm5243, %v5237, %v5254
    %v5256 = vsel %vm5242, %v5253, %v5255
    %v5257 = vshll.u32 %v5217, 8
    %v5258 = vmul.u32.u64.compose %v5257, %v5256
    %v5259 = vextract.low.u32 %v5258
    %v5260 = vextract.high.u32 %v5258
    %v5261 = vmul.u32.u64.compose %v5257, %v5252
    %v5262 = vextract.low.u32 %v5261
    %v5263 = vextract.high.u32 %v5261
    %v5264 = vmul.u32 %v5257, %v5248
    %v5265 = vadd.s32 %v5260, %v5262
    %vm5266 = vc.u32 %v5260, %v5262
    %v5267 = vadd.s32 %v5263, 1
    %v5268 = vsel %vm5266, %v5267, %v5263
    %v5269 = vadd.s32 %v5264, %v5268
    %v5270 = vadd.s32 %v5269, 536870912
    %v5271 = vshrl.u32 %v5270, 30
    %v5272 = vshll.u32 %v5271, 30
    %v5273 = vsub.s32 %v5269, %v5272
    %vm5274 = vcmp.lt.s32.totalorder %v5273, 0
    %v5275 = vsub.s32 0, %v5273
    %v5276 = vsel %vm5274, %v5275, %v5273
    %v5277 = vclz %v5276
    %v5278 = vsub.s32 %v5277, 2
    %vm5279 = vcmp.gt.s32.totalorder 0, %v5278
    %v5280 = vsel %vm5279, 0, %v5278
    %v5281 = vsub.s32 32, %v5280
    %v5282 = vshll.u32 %v5273, %v5280
    %v5283 = vshrl.u32 %v5265, %v5281
    %v5284 = vor.u32 %v5282, %v5283
    %v5285 = vsub.s32 4294967266, %v5280
    %v5286 = vadd.s32 %v5285, 127
    %v5287 = vshll.u32 %v5286, 23
    %v5288 = vor.u32 4788187, %v5287
    %v5289 = vand.u32 2147483647, %v5288
    %v5291 = vcvt.s32.f32 %v5284
    %v5292 = vmul.f32 %v5291, %v5289
    %v5293 = vxor.u32 %v5292, 2147483648
    %v5294 = vsel %vm5211, %v5293, %v5292
    %v5295 = vsub.s32 4, %v5271
    %v5296 = vsel %vm5211, %v5295, %v5271
    %v5297 = vsel %vm5210, %v4293, %v5294
    %v5298 = vsel %vm5210, 0, %v5296
    %v5299 = vcosq.f32.pop %v5297
    %v5300 = vsinq.f32.pop %v5297
    %vm5301 = vweird.f32 %v4293
    %v5302 = vand.u32 %v5298, 3
    %vm5303 = vcmp.lt.s32.totalorder %v5302, 2
    %vm5304 = vcmp.eq.s32.totalorder %v5302, 0
    %v5305 = vxor.u32 %v5300, 2147483648
    %v5306 = vsel %vm5304, %v5299, %v5305
    %vm5307 = vcmp.eq.s32.totalorder %v5302, 2
    %v5308 = vxor.u32 %v5299, 2147483648
    %v5309 = vsel %vm5307, %v5308, %v5300
    %v5310 = vsel %vm5303, %v5306, %v5309
    %v5311 = vsel %vm5301, nan, %v5310
    %v5312 = vand.u32 2147483647, %v4299
    %vm5313 = vcmp.le.f32.partialorder %v5312, 0.7853982
    %vm5314 = vcmp.lt.s32.totalorder %v4299, 0
    %v5315 = vand.u32 %v4299, 2139095040
    %v5316 = vshrl.u32 %v5315, 23
    %v5317 = vsub.s32 %v5316, 127
    %v5318 = vand.u32 2147483647, %v4299
    %v5319 = vand.u32 %v5318, 8388607
    %v5320 = vor.u32 %v5319, 8388608
    %v5321 = vsub.s32 0, %v5320
    %v5322 = vadd.s32 %v5317, 1
    %vm5323 = vcmp.gt.s32.totalorder %v5322, 0
    %v5324 = vsel %vm5323, %v5322, 0
    %v5325 = vshrl.u32 %v5324, 5
    %v5326 = vand.u32 %v5324, 31
    %v5327 = vsub.s32 32, %v5326
    %v5328 = vshrl.u32 683565275, %v5327
    %v5329 = vshll.u32 683565275, %v5326
    %v5330 = vshrl.u32 2475754826, %v5327
    %v5331 = vor.u32 %v5329, %v5330
    %v5332 = vshll.u32 2475754826, %v5326
    %v5333 = vshrl.u32 2131351028, %v5327
    %v5334 = vor.u32 %v5332, %v5333
    %v5335 = vshll.u32 2131351028, %v5326
    %v5336 = vshrl.u32 2102212464, %v5327
    %v5337 = vor.u32 %v5335, %v5336
    %v5338 = vshll.u32 2102212464, %v5326
    %v5339 = vshrl.u32 920167782, %v5327
    %v5340 = vor.u32 %v5338, %v5339
    %v5341 = vshll.u32 920167782, %v5326
    %v5342 = vshrl.u32 1326507024, %v5327
    %v5343 = vor.u32 %v5341, %v5342
    %vm5344 = vcmp.lt.s32.totalorder %v5325, 1
    %vm5345 = vcmp.lt.s32.totalorder %v5325, 2
    %vm5346 = vcmp.lt.s32.totalorder %v5325, 3
    %vm5347 = vcmp.lt.s32.totalorder %v5325, 4
    %v5348 = vsel %vm5344, %v5328, %v5331
    %v5349 = vsel %vm5347, %v5337, 2102212464
    %v5350 = vsel %vm5346, %v5334, %v5349
    %v5351 = vsel %vm5345, %v5348, %v5350
    %v5352 = vsel %vm5344, %v5331, %v5334
    %v5353 = vsel %vm5347, %v5340, 920167782
    %v5354 = vsel %vm5346, %v5337, %v5353
    %v5355 = vsel %vm5345, %v5352, %v5354
    %v5356 = vsel %vm5344, %v5334, %v5337
    %v5357 = vsel %vm5347, %v5343, 1326507024
    %v5358 = vsel %vm5346, %v5340, %v5357
    %v5359 = vsel %vm5345, %v5356, %v5358
    %v5360 = vshll.u32 %v5320, 8
    %v5361 = vmul.u32.u64.compose %v5360, %v5359
    %v5362 = vextract.low.u32 %v5361
    %v5363 = vextract.high.u32 %v5361
    %v5364 = vmul.u32.u64.compose %v5360, %v5355
    %v5365 = vextract.low.u32 %v5364
    %v5366 = vextract.high.u32 %v5364
    %v5367 = vmul.u32 %v5360, %v5351
    %v5368 = vadd.s32 %v5363, %v5365
    %vm5369 = vc.u32 %v5363, %v5365
    %v5370 = vadd.s32 %v5366, 1
    %v5371 = vsel %vm5369, %v5370, %v5366
    %v5372 = vadd.s32 %v5367, %v5371
    %v5373 = vadd.s32 %v5372, 536870912
    %v5374 = vshrl.u32 %v5373, 30
    %v5375 = vshll.u32 %v5374, 30
    %v5376 = vsub.s32 %v5372, %v5375
    %vm5377 = vcmp.lt.s32.totalorder %v5376, 0
    %v5378 = vsub.s32 0, %v5376
    %v5379 = vsel %vm5377, %v5378, %v5376
    %v5380 = vclz %v5379
    %v5381 = vsub.s32 %v5380, 2
    %vm5382 = vcmp.gt.s32.totalorder 0, %v5381
    %v5383 = vsel %vm5382, 0, %v5381
    %v5384 = vsub.s32 32, %v5383
    %v5385 = vshll.u32 %v5376, %v5383
    %v5386 = vshrl.u32 %v5368, %v5384
    %v5387 = vor.u32 %v5385, %v5386
    %v5388 = vsub.s32 4294967266, %v5383
    %v5389 = vadd.s32 %v5388, 127
    %v5390 = vshll.u32 %v5389, 23
    %v5391 = vor.u32 4788187, %v5390
    %v5392 = vand.u32 2147483647, %v5391
    %v5394 = vcvt.s32.f32 %v5387
    %v5395 = vmul.f32 %v5394, %v5392
    %v5396 = vxor.u32 %v5395, 2147483648
    %v5397 = vsel %vm5314, %v5396, %v5395
    %v5398 = vsub.s32 4, %v5374
    %v5399 = vsel %vm5314, %v5398, %v5374
    %v5400 = vsel %vm5313, %v4299, %v5397
    %v5401 = vsel %vm5313, 0, %v5399
    %v5402 = vcosq.f32.pop %v5400
    %v5403 = vsinq.f32.pop %v5400
    %vm5404 = vweird.f32 %v4299
    %v5405 = vand.u32 %v5401, 3
    %vm5406 = vcmp.lt.s32.totalorder %v5405, 2
    %vm5407 = vcmp.eq.s32.totalorder %v5405, 0
    %v5408 = vxor.u32 %v5403, 2147483648
    %v5409 = vsel %vm5407, %v5402, %v5408
    %vm5410 = vcmp.eq.s32.totalorder %v5405, 2
    %v5411 = vxor.u32 %v5402, 2147483648
    %v5412 = vsel %vm5410, %v5411, %v5403
    %v5413 = vsel %vm5406, %v5409, %v5412
    %v5414 = vsel %vm5404, nan, %v5413
    %v5415 = vand.u32 2147483647, %v4305
    %vm5416 = vcmp.le.f32.partialorder %v5415, 0.7853982
    %vm5417 = vcmp.lt.s32.totalorder %v4305, 0
    %v5418 = vand.u32 %v4305, 2139095040
    %v5419 = vshrl.u32 %v5418, 23
    %v5420 = vsub.s32 %v5419, 127
    %v5421 = vand.u32 2147483647, %v4305
    %v5422 = vand.u32 %v5421, 8388607
    %v5423 = vor.u32 %v5422, 8388608
    %v5424 = vsub.s32 0, %v5423
    %v5425 = vadd.s32 %v5420, 1
    %vm5426 = vcmp.gt.s32.totalorder %v5425, 0
    %v5427 = vsel %vm5426, %v5425, 0
    %v5428 = vshrl.u32 %v5427, 5
    %v5429 = vand.u32 %v5427, 31
    %v5430 = vsub.s32 32, %v5429
    %v5431 = vshrl.u32 683565275, %v5430
    %v5432 = vshll.u32 683565275, %v5429
    %v5433 = vshrl.u32 2475754826, %v5430
    %v5434 = vor.u32 %v5432, %v5433
    %v5435 = vshll.u32 2475754826, %v5429
    %v5436 = vshrl.u32 2131351028, %v5430
    %v5437 = vor.u32 %v5435, %v5436
    %v5438 = vshll.u32 2131351028, %v5429
    %v5439 = vshrl.u32 2102212464, %v5430
    %v5440 = vor.u32 %v5438, %v5439
    %v5441 = vshll.u32 2102212464, %v5429
    %v5442 = vshrl.u32 920167782, %v5430
    %v5443 = vor.u32 %v5441, %v5442
    %v5444 = vshll.u32 920167782, %v5429
    %v5445 = vshrl.u32 1326507024, %v5430
    %v5446 = vor.u32 %v5444, %v5445
    %vm5447 = vcmp.lt.s32.totalorder %v5428, 1
    %vm5448 = vcmp.lt.s32.totalorder %v5428, 2
    %vm5449 = vcmp.lt.s32.totalorder %v5428, 3
    %vm5450 = vcmp.lt.s32.totalorder %v5428, 4
    %v5451 = vsel %vm5447, %v5431, %v5434
    %v5452 = vsel %vm5450, %v5440, 2102212464
    %v5453 = vsel %vm5449, %v5437, %v5452
    %v5454 = vsel %vm5448, %v5451, %v5453
    %v5455 = vsel %vm5447, %v5434, %v5437
    %v5456 = vsel %vm5450, %v5443, 920167782
    %v5457 = vsel %vm5449, %v5440, %v5456
    %v5458 = vsel %vm5448, %v5455, %v5457
    %v5459 = vsel %vm5447, %v5437, %v5440
    %v5460 = vsel %vm5450, %v5446, 1326507024
    %v5461 = vsel %vm5449, %v5443, %v5460
    %v5462 = vsel %vm5448, %v5459, %v5461
    %v5463 = vshll.u32 %v5423, 8
    %v5464 = vmul.u32.u64.compose %v5463, %v5462
    %v5465 = vextract.low.u32 %v5464
    %v5466 = vextract.high.u32 %v5464
    %v5467 = vmul.u32.u64.compose %v5463, %v5458
    %v5468 = vextract.low.u32 %v5467
    %v5469 = vextract.high.u32 %v5467
    %v5470 = vmul.u32 %v5463, %v5454
    %v5471 = vadd.s32 %v5466, %v5468
    %vm5472 = vc.u32 %v5466, %v5468
    %v5473 = vadd.s32 %v5469, 1
    %v5474 = vsel %vm5472, %v5473, %v5469
    %v5475 = vadd.s32 %v5470, %v5474
    %v5476 = vadd.s32 %v5475, 536870912
    %v5477 = vshrl.u32 %v5476, 30
    %v5478 = vshll.u32 %v5477, 30
    %v5479 = vsub.s32 %v5475, %v5478
    %vm5480 = vcmp.lt.s32.totalorder %v5479, 0
    %v5481 = vsub.s32 0, %v5479
    %v5482 = vsel %vm5480, %v5481, %v5479
    %v5483 = vclz %v5482
    %v5484 = vsub.s32 %v5483, 2
    %vm5485 = vcmp.gt.s32.totalorder 0, %v5484
    %v5486 = vsel %vm5485, 0, %v5484
    %v5487 = vsub.s32 32, %v5486
    %v5488 = vshll.u32 %v5479, %v5486
    %v5489 = vshrl.u32 %v5471, %v5487
    %v5490 = vor.u32 %v5488, %v5489
    %v5491 = vsub.s32 4294967266, %v5486
    %v5492 = vadd.s32 %v5491, 127
    %v5493 = vshll.u32 %v5492, 23
    %v5494 = vor.u32 4788187, %v5493
    %v5495 = vand.u32 2147483647, %v5494
    %v5497 = vcvt.s32.f32 %v5490
    %v5498 = vmul.f32 %v5497, %v5495
    %v5499 = vxor.u32 %v5498, 2147483648
    %v5500 = vsel %vm5417, %v5499, %v5498
    %v5501 = vsub.s32 4, %v5477
    %v5502 = vsel %vm5417, %v5501, %v5477
    %v5503 = vsel %vm5416, %v4305, %v5500
    %v5504 = vsel %vm5416, 0, %v5502
    %v5505 = vcosq.f32.pop %v5503
    %v5506 = vsinq.f32.pop %v5503
    %vm5507 = vweird.f32 %v4305
    %v5508 = vand.u32 %v5504, 3
    %vm5509 = vcmp.lt.s32.totalorder %v5508, 2
    %vm5510 = vcmp.eq.s32.totalorder %v5508, 0
    %v5511 = vxor.u32 %v5506, 2147483648
    %v5512 = vsel %vm5510, %v5505, %v5511
    %vm5513 = vcmp.eq.s32.totalorder %v5508, 2
    %v5514 = vxor.u32 %v5505, 2147483648
    %v5515 = vsel %vm5513, %v5514, %v5506
    %v5516 = vsel %vm5509, %v5512, %v5515
    %v5517 = vsel %vm5507, nan, %v5516
    %v5518 = vand.u32 2147483647, %v4311
    %vm5519 = vcmp.le.f32.partialorder %v5518, 0.7853982
    %vm5520 = vcmp.lt.s32.totalorder %v4311, 0
    %v5521 = vand.u32 %v4311, 2139095040
    %v5522 = vshrl.u32 %v5521, 23
    %v5523 = vsub.s32 %v5522, 127
    %v5524 = vand.u32 2147483647, %v4311
    %v5525 = vand.u32 %v5524, 8388607
    %v5526 = vor.u32 %v5525, 8388608
    %v5527 = vsub.s32 0, %v5526
    %v5528 = vadd.s32 %v5523, 1
    %vm5529 = vcmp.gt.s32.totalorder %v5528, 0
    %v5530 = vsel %vm5529, %v5528, 0
    %v5531 = vshrl.u32 %v5530, 5
    %v5532 = vand.u32 %v5530, 31
    %v5533 = vsub.s32 32, %v5532
    %v5534 = vshrl.u32 683565275, %v5533
    %v5535 = vshll.u32 683565275, %v5532
    %v5536 = vshrl.u32 2475754826, %v5533
    %v5537 = vor.u32 %v5535, %v5536
    %v5538 = vshll.u32 2475754826, %v5532
    %v5539 = vshrl.u32 2131351028, %v5533
    %v5540 = vor.u32 %v5538, %v5539
    %v5541 = vshll.u32 2131351028, %v5532
    %v5542 = vshrl.u32 2102212464, %v5533
    %v5543 = vor.u32 %v5541, %v5542
    %v5544 = vshll.u32 2102212464, %v5532
    %v5545 = vshrl.u32 920167782, %v5533
    %v5546 = vor.u32 %v5544, %v5545
    %v5547 = vshll.u32 920167782, %v5532
    %v5548 = vshrl.u32 1326507024, %v5533
    %v5549 = vor.u32 %v5547, %v5548
    %vm5550 = vcmp.lt.s32.totalorder %v5531, 1
    %vm5551 = vcmp.lt.s32.totalorder %v5531, 2
    %vm5552 = vcmp.lt.s32.totalorder %v5531, 3
    %vm5553 = vcmp.lt.s32.totalorder %v5531, 4
    %v5554 = vsel %vm5550, %v5534, %v5537
    %v5555 = vsel %vm5553, %v5543, 2102212464
    %v5556 = vsel %vm5552, %v5540, %v5555
    %v5557 = vsel %vm5551, %v5554, %v5556
    %v5558 = vsel %vm5550, %v5537, %v5540
    %v5559 = vsel %vm5553, %v5546, 920167782
    %v5560 = vsel %vm5552, %v5543, %v5559
    %v5561 = vsel %vm5551, %v5558, %v5560
    %v5562 = vsel %vm5550, %v5540, %v5543
    %v5563 = vsel %vm5553, %v5549, 1326507024
    %v5564 = vsel %vm5552, %v5546, %v5563
    %v5565 = vsel %vm5551, %v5562, %v5564
    %v5566 = vshll.u32 %v5526, 8
    %v5567 = vmul.u32.u64.compose %v5566, %v5565
    %v5568 = vextract.low.u32 %v5567
    %v5569 = vextract.high.u32 %v5567
    %v5570 = vmul.u32.u64.compose %v5566, %v5561
    %v5571 = vextract.low.u32 %v5570
    %v5572 = vextract.high.u32 %v5570
    %v5573 = vmul.u32 %v5566, %v5557
    %v5574 = vadd.s32 %v5569, %v5571
    %vm5575 = vc.u32 %v5569, %v5571
    %v5576 = vadd.s32 %v5572, 1
    %v5577 = vsel %vm5575, %v5576, %v5572
    %v5578 = vadd.s32 %v5573, %v5577
    %v5579 = vadd.s32 %v5578, 536870912
    %v5580 = vshrl.u32 %v5579, 30
    %v5581 = vshll.u32 %v5580, 30
    %v5582 = vsub.s32 %v5578, %v5581
    %vm5583 = vcmp.lt.s32.totalorder %v5582, 0
    %v5584 = vsub.s32 0, %v5582
    %v5585 = vsel %vm5583, %v5584, %v5582
    %v5586 = vclz %v5585
    %v5587 = vsub.s32 %v5586, 2
    %vm5588 = vcmp.gt.s32.totalorder 0, %v5587
    %v5589 = vsel %vm5588, 0, %v5587
    %v5590 = vsub.s32 32, %v5589
    %v5591 = vshll.u32 %v5582, %v5589
    %v5592 = vshrl.u32 %v5574, %v5590
    %v5593 = vor.u32 %v5591, %v5592
    %v5594 = vsub.s32 4294967266, %v5589
    %v5595 = vadd.s32 %v5594, 127
    %v5596 = vshll.u32 %v5595, 23
    %v5597 = vor.u32 4788187, %v5596
    %v5598 = vand.u32 2147483647, %v5597
    %v5600 = vcvt.s32.f32 %v5593
    %v5601 = vmul.f32 %v5600, %v5598
    %v5602 = vxor.u32 %v5601, 2147483648
    %v5603 = vsel %vm5520, %v5602, %v5601
    %v5604 = vsub.s32 4, %v5580
    %v5605 = vsel %vm5520, %v5604, %v5580
    %v5606 = vsel %vm5519, %v4311, %v5603
    %v5607 = vsel %vm5519, 0, %v5605
    %v5608 = vcosq.f32.pop %v5606
    %v5609 = vsinq.f32.pop %v5606
    %vm5610 = vweird.f32 %v4311
    %v5611 = vand.u32 %v5607, 3
    %vm5612 = vcmp.lt.s32.totalorder %v5611, 2
    %vm5613 = vcmp.eq.s32.totalorder %v5611, 0
    %v5614 = vxor.u32 %v5609, 2147483648
    %v5615 = vsel %vm5613, %v5608, %v5614
    %vm5616 = vcmp.eq.s32.totalorder %v5611, 2
    %v5617 = vxor.u32 %v5608, 2147483648
    %v5618 = vsel %vm5616, %v5617, %v5609
    %v5619 = vsel %vm5612, %v5615, %v5618
    %v5620 = vsel %vm5610, nan, %v5619
    %v5621 = vand.u32 2147483647, %v4317
    %vm5622 = vcmp.le.f32.partialorder %v5621, 0.7853982
    %vm5623 = vcmp.lt.s32.totalorder %v4317, 0
    %v5624 = vand.u32 %v4317, 2139095040
    %v5625 = vshrl.u32 %v5624, 23
    %v5626 = vsub.s32 %v5625, 127
    %v5627 = vand.u32 2147483647, %v4317
    %v5628 = vand.u32 %v5627, 8388607
    %v5629 = vor.u32 %v5628, 8388608
    %v5630 = vsub.s32 0, %v5629
    %v5631 = vadd.s32 %v5626, 1
    %vm5632 = vcmp.gt.s32.totalorder %v5631, 0
    %v5633 = vsel %vm5632, %v5631, 0
    %v5634 = vshrl.u32 %v5633, 5
    %v5635 = vand.u32 %v5633, 31
    %v5636 = vsub.s32 32, %v5635
    %v5637 = vshrl.u32 683565275, %v5636
    %v5638 = vshll.u32 683565275, %v5635
    %v5639 = vshrl.u32 2475754826, %v5636
    %v5640 = vor.u32 %v5638, %v5639
    %v5641 = vshll.u32 2475754826, %v5635
    %v5642 = vshrl.u32 2131351028, %v5636
    %v5643 = vor.u32 %v5641, %v5642
    %v5644 = vshll.u32 2131351028, %v5635
    %v5645 = vshrl.u32 2102212464, %v5636
    %v5646 = vor.u32 %v5644, %v5645
    %v5647 = vshll.u32 2102212464, %v5635
    %v5648 = vshrl.u32 920167782, %v5636
    %v5649 = vor.u32 %v5647, %v5648
    %v5650 = vshll.u32 920167782, %v5635
    %v5651 = vshrl.u32 1326507024, %v5636
    %v5652 = vor.u32 %v5650, %v5651
    %vm5653 = vcmp.lt.s32.totalorder %v5634, 1
    %vm5654 = vcmp.lt.s32.totalorder %v5634, 2
    %vm5655 = vcmp.lt.s32.totalorder %v5634, 3
    %vm5656 = vcmp.lt.s32.totalorder %v5634, 4
    %v5657 = vsel %vm5653, %v5637, %v5640
    %v5658 = vsel %vm5656, %v5646, 2102212464
    %v5659 = vsel %vm5655, %v5643, %v5658
    %v5660 = vsel %vm5654, %v5657, %v5659
    %v5661 = vsel %vm5653, %v5640, %v5643
    %v5662 = vsel %vm5656, %v5649, 920167782
    %v5663 = vsel %vm5655, %v5646, %v5662
    %v5664 = vsel %vm5654, %v5661, %v5663
    %v5665 = vsel %vm5653, %v5643, %v5646
    %v5666 = vsel %vm5656, %v5652, 1326507024
    %v5667 = vsel %vm5655, %v5649, %v5666
    %v5668 = vsel %vm5654, %v5665, %v5667
    %v5669 = vshll.u32 %v5629, 8
    %v5670 = vmul.u32.u64.compose %v5669, %v5668
    %v5671 = vextract.low.u32 %v5670
    %v5672 = vextract.high.u32 %v5670
    %v5673 = vmul.u32.u64.compose %v5669, %v5664
    %v5674 = vextract.low.u32 %v5673
    %v5675 = vextract.high.u32 %v5673
    %v5676 = vmul.u32 %v5669, %v5660
    %v5677 = vadd.s32 %v5672, %v5674
    %vm5678 = vc.u32 %v5672, %v5674
    %v5679 = vadd.s32 %v5675, 1
    %v5680 = vsel %vm5678, %v5679, %v5675
    %v5681 = vadd.s32 %v5676, %v5680
    %v5682 = vadd.s32 %v5681, 536870912
    %v5683 = vshrl.u32 %v5682, 30
    %v5684 = vshll.u32 %v5683, 30
    %v5685 = vsub.s32 %v5681, %v5684
    %vm5686 = vcmp.lt.s32.totalorder %v5685, 0
    %v5687 = vsub.s32 0, %v5685
    %v5688 = vsel %vm5686, %v5687, %v5685
    %v5689 = vclz %v5688
    %v5690 = vsub.s32 %v5689, 2
    %vm5691 = vcmp.gt.s32.totalorder 0, %v5690
    %v5692 = vsel %vm5691, 0, %v5690
    %v5693 = vsub.s32 32, %v5692
    %v5694 = vshll.u32 %v5685, %v5692
    %v5695 = vshrl.u32 %v5677, %v5693
    %v5696 = vor.u32 %v5694, %v5695
    %v5697 = vsub.s32 4294967266, %v5692
    %v5698 = vadd.s32 %v5697, 127
    %v5699 = vshll.u32 %v5698, 23
    %v5700 = vor.u32 4788187, %v5699
    %v5701 = vand.u32 2147483647, %v5700
    %v5703 = vcvt.s32.f32 %v5696
    %v5704 = vmul.f32 %v5703, %v5701
    %v5705 = vxor.u32 %v5704, 2147483648
    %v5706 = vsel %vm5623, %v5705, %v5704
    %v5707 = vsub.s32 4, %v5683
    %v5708 = vsel %vm5623, %v5707, %v5683
    %v5709 = vsel %vm5622, %v4317, %v5706
    %v5710 = vsel %vm5622, 0, %v5708
    %v5711 = vcosq.f32.pop %v5709
    %v5712 = vsinq.f32.pop %v5709
    %vm5713 = vweird.f32 %v4317
    %v5714 = vand.u32 %v5710, 3
    %vm5715 = vcmp.lt.s32.totalorder %v5714, 2
    %vm5716 = vcmp.eq.s32.totalorder %v5714, 0
    %v5717 = vxor.u32 %v5712, 2147483648
    %v5718 = vsel %vm5716, %v5711, %v5717
    %vm5719 = vcmp.eq.s32.totalorder %v5714, 2
    %v5720 = vxor.u32 %v5711, 2147483648
    %v5721 = vsel %vm5719, %v5720, %v5712
    %v5722 = vsel %vm5715, %v5718, %v5721
    %v5723 = vsel %vm5713, nan, %v5722
    %v5724 = vand.u32 2147483647, %v4323
    %vm5725 = vcmp.le.f32.partialorder %v5724, 0.7853982
    %vm5726 = vcmp.lt.s32.totalorder %v4323, 0
    %v5727 = vand.u32 %v4323, 2139095040
    %v5728 = vshrl.u32 %v5727, 23
    %v5729 = vsub.s32 %v5728, 127
    %v5730 = vand.u32 2147483647, %v4323
    %v5731 = vand.u32 %v5730, 8388607
    %v5732 = vor.u32 %v5731, 8388608
    %v5733 = vsub.s32 0, %v5732
    %v5734 = vadd.s32 %v5729, 1
    %vm5735 = vcmp.gt.s32.totalorder %v5734, 0
    %v5736 = vsel %vm5735, %v5734, 0
    %v5737 = vshrl.u32 %v5736, 5
    %v5738 = vand.u32 %v5736, 31
    %v5739 = vsub.s32 32, %v5738
    %v5740 = vshrl.u32 683565275, %v5739
    %v5741 = vshll.u32 683565275, %v5738
    %v5742 = vshrl.u32 2475754826, %v5739
    %v5743 = vor.u32 %v5741, %v5742
    %v5744 = vshll.u32 2475754826, %v5738
    %v5745 = vshrl.u32 2131351028, %v5739
    %v5746 = vor.u32 %v5744, %v5745
    %v5747 = vshll.u32 2131351028, %v5738
    %v5748 = vshrl.u32 2102212464, %v5739
    %v5749 = vor.u32 %v5747, %v5748
    %v5750 = vshll.u32 2102212464, %v5738
    %v5751 = vshrl.u32 920167782, %v5739
    %v5752 = vor.u32 %v5750, %v5751
    %v5753 = vshll.u32 920167782, %v5738
    %v5754 = vshrl.u32 1326507024, %v5739
    %v5755 = vor.u32 %v5753, %v5754
    %vm5756 = vcmp.lt.s32.totalorder %v5737, 1
    %vm5757 = vcmp.lt.s32.totalorder %v5737, 2
    %vm5758 = vcmp.lt.s32.totalorder %v5737, 3
    %vm5759 = vcmp.lt.s32.totalorder %v5737, 4
    %v5760 = vsel %vm5756, %v5740, %v5743
    %v5761 = vsel %vm5759, %v5749, 2102212464
    %v5762 = vsel %vm5758, %v5746, %v5761
    %v5763 = vsel %vm5757, %v5760, %v5762
    %v5764 = vsel %vm5756, %v5743, %v5746
    %v5765 = vsel %vm5759, %v5752, 920167782
    %v5766 = vsel %vm5758, %v5749, %v5765
    %v5767 = vsel %vm5757, %v5764, %v5766
    %v5768 = vsel %vm5756, %v5746, %v5749
    %v5769 = vsel %vm5759, %v5755, 1326507024
    %v5770 = vsel %vm5758, %v5752, %v5769
    %v5771 = vsel %vm5757, %v5768, %v5770
    %v5772 = vshll.u32 %v5732, 8
    %v5773 = vmul.u32.u64.compose %v5772, %v5771
    %v5774 = vextract.low.u32 %v5773
    %v5775 = vextract.high.u32 %v5773
    %v5776 = vmul.u32.u64.compose %v5772, %v5767
    %v5777 = vextract.low.u32 %v5776
    %v5778 = vextract.high.u32 %v5776
    %v5779 = vmul.u32 %v5772, %v5763
    %v5780 = vadd.s32 %v5775, %v5777
    %vm5781 = vc.u32 %v5775, %v5777
    %v5782 = vadd.s32 %v5778, 1
    %v5783 = vsel %vm5781, %v5782, %v5778
    %v5784 = vadd.s32 %v5779, %v5783
    %v5785 = vadd.s32 %v5784, 536870912
    %v5786 = vshrl.u32 %v5785, 30
    %v5787 = vshll.u32 %v5786, 30
    %v5788 = vsub.s32 %v5784, %v5787
    %vm5789 = vcmp.lt.s32.totalorder %v5788, 0
    %v5790 = vsub.s32 0, %v5788
    %v5791 = vsel %vm5789, %v5790, %v5788
    %v5792 = vclz %v5791
    %v5793 = vsub.s32 %v5792, 2
    %vm5794 = vcmp.gt.s32.totalorder 0, %v5793
    %v5795 = vsel %vm5794, 0, %v5793
    %v5796 = vsub.s32 32, %v5795
    %v5797 = vshll.u32 %v5788, %v5795
    %v5798 = vshrl.u32 %v5780, %v5796
    %v5799 = vor.u32 %v5797, %v5798
    %v5800 = vsub.s32 4294967266, %v5795
    %v5801 = vadd.s32 %v5800, 127
    %v5802 = vshll.u32 %v5801, 23
    %v5803 = vor.u32 4788187, %v5802
    %v5804 = vand.u32 2147483647, %v5803
    %v5806 = vcvt.s32.f32 %v5799
    %v5807 = vmul.f32 %v5806, %v5804
    %v5808 = vxor.u32 %v5807, 2147483648
    %v5809 = vsel %vm5726, %v5808, %v5807
    %v5810 = vsub.s32 4, %v5786
    %v5811 = vsel %vm5726, %v5810, %v5786
    %v5812 = vsel %vm5725, %v4323, %v5809
    %v5813 = vsel %vm5725, 0, %v5811
    %v5814 = vcosq.f32.pop %v5812
    %v5815 = vsinq.f32.pop %v5812
    %vm5816 = vweird.f32 %v4323
    %v5817 = vand.u32 %v5813, 3
    %vm5818 = vcmp.lt.s32.totalorder %v5817, 2
    %vm5819 = vcmp.eq.s32.totalorder %v5817, 0
    %v5820 = vxor.u32 %v5815, 2147483648
    %v5821 = vsel %vm5819, %v5814, %v5820
    %vm5822 = vcmp.eq.s32.totalorder %v5817, 2
    %v5823 = vxor.u32 %v5814, 2147483648
    %v5824 = vsel %vm5822, %v5823, %v5815
    %v5825 = vsel %vm5818, %v5821, %v5824
    %v5826 = vsel %vm5816, nan, %v5825
    %v5827 = vand.u32 2147483647, %v4329
    %vm5828 = vcmp.le.f32.partialorder %v5827, 0.7853982
    %vm5829 = vcmp.lt.s32.totalorder %v4329, 0
    %v5830 = vand.u32 %v4329, 2139095040
    %v5831 = vshrl.u32 %v5830, 23
    %v5832 = vsub.s32 %v5831, 127
    %v5833 = vand.u32 2147483647, %v4329
    %v5834 = vand.u32 %v5833, 8388607
    %v5835 = vor.u32 %v5834, 8388608
    %v5836 = vsub.s32 0, %v5835
    %v5837 = vadd.s32 %v5832, 1
    %vm5838 = vcmp.gt.s32.totalorder %v5837, 0
    %v5839 = vsel %vm5838, %v5837, 0
    %v5840 = vshrl.u32 %v5839, 5
    %v5841 = vand.u32 %v5839, 31
    %v5842 = vsub.s32 32, %v5841
    %v5843 = vshrl.u32 683565275, %v5842
    %v5844 = vshll.u32 683565275, %v5841
    %v5845 = vshrl.u32 2475754826, %v5842
    %v5846 = vor.u32 %v5844, %v5845
    %v5847 = vshll.u32 2475754826, %v5841
    %v5848 = vshrl.u32 2131351028, %v5842
    %v5849 = vor.u32 %v5847, %v5848
    %v5850 = vshll.u32 2131351028, %v5841
    %v5851 = vshrl.u32 2102212464, %v5842
    %v5852 = vor.u32 %v5850, %v5851
    %v5853 = vshll.u32 2102212464, %v5841
    %v5854 = vshrl.u32 920167782, %v5842
    %v5855 = vor.u32 %v5853, %v5854
    %v5856 = vshll.u32 920167782, %v5841
    %v5857 = vshrl.u32 1326507024, %v5842
    %v5858 = vor.u32 %v5856, %v5857
    %vm5859 = vcmp.lt.s32.totalorder %v5840, 1
    %vm5860 = vcmp.lt.s32.totalorder %v5840, 2
    %vm5861 = vcmp.lt.s32.totalorder %v5840, 3
    %vm5862 = vcmp.lt.s32.totalorder %v5840, 4
    %v5863 = vsel %vm5859, %v5843, %v5846
    %v5864 = vsel %vm5862, %v5852, 2102212464
    %v5865 = vsel %vm5861, %v5849, %v5864
    %v5866 = vsel %vm5860, %v5863, %v5865
    %v5867 = vsel %vm5859, %v5846, %v5849
    %v5868 = vsel %vm5862, %v5855, 920167782
    %v5869 = vsel %vm5861, %v5852, %v5868
    %v5870 = vsel %vm5860, %v5867, %v5869
    %v5871 = vsel %vm5859, %v5849, %v5852
    %v5872 = vsel %vm5862, %v5858, 1326507024
    %v5873 = vsel %vm5861, %v5855, %v5872
    %v5874 = vsel %vm5860, %v5871, %v5873
    %v5875 = vshll.u32 %v5835, 8
    %v5876 = vmul.u32.u64.compose %v5875, %v5874
    %v5877 = vextract.low.u32 %v5876
    %v5878 = vextract.high.u32 %v5876
    %v5879 = vmul.u32.u64.compose %v5875, %v5870
    %v5880 = vextract.low.u32 %v5879
    %v5881 = vextract.high.u32 %v5879
    %v5882 = vmul.u32 %v5875, %v5866
    %v5883 = vadd.s32 %v5878, %v5880
    %vm5884 = vc.u32 %v5878, %v5880
    %v5885 = vadd.s32 %v5881, 1
    %v5886 = vsel %vm5884, %v5885, %v5881
    %v5887 = vadd.s32 %v5882, %v5886
    %v5888 = vadd.s32 %v5887, 536870912
    %v5889 = vshrl.u32 %v5888, 30
    %v5890 = vshll.u32 %v5889, 30
    %v5891 = vsub.s32 %v5887, %v5890
    %vm5892 = vcmp.lt.s32.totalorder %v5891, 0
    %v5893 = vsub.s32 0, %v5891
    %v5894 = vsel %vm5892, %v5893, %v5891
    %v5895 = vclz %v5894
    %v5896 = vsub.s32 %v5895, 2
    %vm5897 = vcmp.gt.s32.totalorder 0, %v5896
    %v5898 = vsel %vm5897, 0, %v5896
    %v5899 = vsub.s32 32, %v5898
    %v5900 = vshll.u32 %v5891, %v5898
    %v5901 = vshrl.u32 %v5883, %v5899
    %v5902 = vor.u32 %v5900, %v5901
    %v5903 = vsub.s32 4294967266, %v5898
    %v5904 = vadd.s32 %v5903, 127
    %v5905 = vshll.u32 %v5904, 23
    %v5906 = vor.u32 4788187, %v5905
    %v5907 = vand.u32 2147483647, %v5906
    %v5909 = vcvt.s32.f32 %v5902
    %v5910 = vmul.f32 %v5909, %v5907
    %v5911 = vxor.u32 %v5910, 2147483648
    %v5912 = vsel %vm5829, %v5911, %v5910
    %v5913 = vsub.s32 4, %v5889
    %v5914 = vsel %vm5829, %v5913, %v5889
    %v5915 = vsel %vm5828, %v4329, %v5912
    %v5916 = vsel %vm5828, 0, %v5914
    %v5917 = vcosq.f32.pop %v5915
    %v5918 = vsinq.f32.pop %v5915
    %vm5919 = vweird.f32 %v4329
    %v5920 = vand.u32 %v5916, 3
    %vm5921 = vcmp.lt.s32.totalorder %v5920, 2
    %vm5922 = vcmp.eq.s32.totalorder %v5920, 0
    %v5923 = vxor.u32 %v5918, 2147483648
    %v5924 = vsel %vm5922, %v5917, %v5923
    %vm5925 = vcmp.eq.s32.totalorder %v5920, 2
    %v5926 = vxor.u32 %v5917, 2147483648
    %v5927 = vsel %vm5925, %v5926, %v5918
    %v5928 = vsel %vm5921, %v5924, %v5927
    %v5929 = vsel %vm5919, nan, %v5928
    %v5930 = vand.u32 2147483647, %v4335
    %vm5931 = vcmp.le.f32.partialorder %v5930, 0.7853982
    %vm5932 = vcmp.lt.s32.totalorder %v4335, 0
    %v5933 = vand.u32 %v4335, 2139095040
    %v5934 = vshrl.u32 %v5933, 23
    %v5935 = vsub.s32 %v5934, 127
    %v5936 = vand.u32 2147483647, %v4335
    %v5937 = vand.u32 %v5936, 8388607
    %v5938 = vor.u32 %v5937, 8388608
    %v5939 = vsub.s32 0, %v5938
    %v5940 = vadd.s32 %v5935, 1
    %vm5941 = vcmp.gt.s32.totalorder %v5940, 0
    %v5942 = vsel %vm5941, %v5940, 0
    %v5943 = vshrl.u32 %v5942, 5
    %v5944 = vand.u32 %v5942, 31
    %v5945 = vsub.s32 32, %v5944
    %v5946 = vshrl.u32 683565275, %v5945
    %v5947 = vshll.u32 683565275, %v5944
    %v5948 = vshrl.u32 2475754826, %v5945
    %v5949 = vor.u32 %v5947, %v5948
    %v5950 = vshll.u32 2475754826, %v5944
    %v5951 = vshrl.u32 2131351028, %v5945
    %v5952 = vor.u32 %v5950, %v5951
    %v5953 = vshll.u32 2131351028, %v5944
    %v5954 = vshrl.u32 2102212464, %v5945
    %v5955 = vor.u32 %v5953, %v5954
    %v5956 = vshll.u32 2102212464, %v5944
    %v5957 = vshrl.u32 920167782, %v5945
    %v5958 = vor.u32 %v5956, %v5957
    %v5959 = vshll.u32 920167782, %v5944
    %v5960 = vshrl.u32 1326507024, %v5945
    %v5961 = vor.u32 %v5959, %v5960
    %vm5962 = vcmp.lt.s32.totalorder %v5943, 1
    %vm5963 = vcmp.lt.s32.totalorder %v5943, 2
    %vm5964 = vcmp.lt.s32.totalorder %v5943, 3
    %vm5965 = vcmp.lt.s32.totalorder %v5943, 4
    %v5966 = vsel %vm5962, %v5946, %v5949
    %v5967 = vsel %vm5965, %v5955, 2102212464
    %v5968 = vsel %vm5964, %v5952, %v5967
    %v5969 = vsel %vm5963, %v5966, %v5968
    %v5970 = vsel %vm5962, %v5949, %v5952
    %v5971 = vsel %vm5965, %v5958, 920167782
    %v5972 = vsel %vm5964, %v5955, %v5971
    %v5973 = vsel %vm5963, %v5970, %v5972
    %v5974 = vsel %vm5962, %v5952, %v5955
    %v5975 = vsel %vm5965, %v5961, 1326507024
    %v5976 = vsel %vm5964, %v5958, %v5975
    %v5977 = vsel %vm5963, %v5974, %v5976
    %v5978 = vshll.u32 %v5938, 8
    %v5979 = vmul.u32.u64.compose %v5978, %v5977
    %v5980 = vextract.low.u32 %v5979
    %v5981 = vextract.high.u32 %v5979
    %v5982 = vmul.u32.u64.compose %v5978, %v5973
    %v5983 = vextract.low.u32 %v5982
    %v5984 = vextract.high.u32 %v5982
    %v5985 = vmul.u32 %v5978, %v5969
    %v5986 = vadd.s32 %v5981, %v5983
    %vm5987 = vc.u32 %v5981, %v5983
    %v5988 = vadd.s32 %v5984, 1
    %v5989 = vsel %vm5987, %v5988, %v5984
    %v5990 = vadd.s32 %v5985, %v5989
    %v5991 = vadd.s32 %v5990, 536870912
    %v5992 = vshrl.u32 %v5991, 30
    %v5993 = vshll.u32 %v5992, 30
    %v5994 = vsub.s32 %v5990, %v5993
    %vm5995 = vcmp.lt.s32.totalorder %v5994, 0
    %v5996 = vsub.s32 0, %v5994
    %v5997 = vsel %vm5995, %v5996, %v5994
    %v5998 = vclz %v5997
    %v5999 = vsub.s32 %v5998, 2
    %vm6000 = vcmp.gt.s32.totalorder 0, %v5999
    %v6001 = vsel %vm6000, 0, %v5999
    %v6002 = vsub.s32 32, %v6001
    %v6003 = vshll.u32 %v5994, %v6001
    %v6004 = vshrl.u32 %v5986, %v6002
    %v6005 = vor.u32 %v6003, %v6004
    %v6006 = vsub.s32 4294967266, %v6001
    %v6007 = vadd.s32 %v6006, 127
    %v6008 = vshll.u32 %v6007, 23
    %v6009 = vor.u32 4788187, %v6008
    %v6010 = vand.u32 2147483647, %v6009
    %v6012 = vcvt.s32.f32 %v6005
    %v6013 = vmul.f32 %v6012, %v6010
    %v6014 = vxor.u32 %v6013, 2147483648
    %v6015 = vsel %vm5932, %v6014, %v6013
    %v6016 = vsub.s32 4, %v5992
    %v6017 = vsel %vm5932, %v6016, %v5992
    %v6018 = vsel %vm5931, %v4335, %v6015
    %v6019 = vsel %vm5931, 0, %v6017
    %v6020 = vcosq.f32.pop %v6018
    %v6021 = vsinq.f32.pop %v6018
    %vm6022 = vweird.f32 %v4335
    %v6023 = vand.u32 %v6019, 3
    %vm6024 = vcmp.lt.s32.totalorder %v6023, 2
    %vm6025 = vcmp.eq.s32.totalorder %v6023, 0
    %v6026 = vxor.u32 %v6021, 2147483648
    %v6027 = vsel %vm6025, %v6020, %v6026
    %vm6028 = vcmp.eq.s32.totalorder %v6023, 2
    %v6029 = vxor.u32 %v6020, 2147483648
    %v6030 = vsel %vm6028, %v6029, %v6021
    %v6031 = vsel %vm6024, %v6027, %v6030
    %v6032 = vsel %vm6022, nan, %v6031
    %6041 = vrot.lane.b32.xlu0 %v4369, 64
    %v6042 = vpop.permute.xlu0 %6041
    %6043 = vrot.lane.b32.xlu0 %v4370, 64
    %v6044 = vpop.permute.xlu0 %6043
    %6045 = vrot.lane.b32.xlu0 %v4371, 64
    %v6046 = vpop.permute.xlu0 %6045
    %6047 = vrot.lane.b32.xlu0 %v4372, 64
    %v6048 = vpop.permute.xlu0 %6047
    %6049 = vrot.lane.b32.xlu0 %v4373, 64
    %v6050 = vpop.permute.xlu0 %6049
    %6051 = vrot.lane.b32.xlu0 %v4374, 64
    %v6052 = vpop.permute.xlu0 %6051
    %6053 = vrot.lane.b32.xlu0 %v4375, 64
    %v6054 = vpop.permute.xlu0 %6053
    %6055 = vrot.lane.b32.xlu0 %v4376, 64
    %v6056 = vpop.permute.xlu0 %6055
    %v6065 = vmul.f32 %v4337, %v6042
    %v6066 = vmul.f32 %v4338, %v6044
    %v6067 = vmul.f32 %v4339, %v6046
    %v6068 = vmul.f32 %v4340, %v6048
    %v6069 = vmul.f32 %v4341, %v6050
    %v6070 = vmul.f32 %v4342, %v6052
    %v6071 = vmul.f32 %v4343, %v6054
    %v6072 = vmul.f32 %v4344, %v6056
    %v6073 = vmul.f32 %v6065, %v4480
    %v6074 = vmul.f32 %v6066, %v4584
    %v6075 = vmul.f32 %v6067, %v4688
    %v6076 = vmul.f32 %v6068, %v4792
    %v6077 = vmul.f32 %v6069, %v4896
    %v6078 = vmul.f32 %v6070, %v5000
    %v6079 = vmul.f32 %v6071, %v5104
    %v6080 = vmul.f32 %v6072, %v5208
    %6089 = vrot.lane.b32.xlu0 %v5311, 64
    %v6090 = vpop.permute.xlu0 %6089
    %6091 = vrot.lane.b32.xlu0 %v5414, 64
    %v6092 = vpop.permute.xlu0 %6091
    %6093 = vrot.lane.b32.xlu0 %v5517, 64
    %v6094 = vpop.permute.xlu0 %6093
    %6095 = vrot.lane.b32.xlu0 %v5620, 64
    %v6096 = vpop.permute.xlu0 %6095
    %6097 = vrot.lane.b32.xlu0 %v5723, 64
    %v6098 = vpop.permute.xlu0 %6097
    %6099 = vrot.lane.b32.xlu0 %v5826, 64
    %v6100 = vpop.permute.xlu0 %6099
    %6101 = vrot.lane.b32.xlu0 %v5929, 64
    %v6102 = vpop.permute.xlu0 %6101
    %6103 = vrot.lane.b32.xlu0 %v6032, 64
    %v6104 = vpop.permute.xlu0 %6103
    %v6113 = vmul.f32 %v6073, %v6090
    %v6114 = vmul.f32 %v6074, %v6092
    %v6115 = vmul.f32 %v6075, %v6094
    %v6116 = vmul.f32 %v6076, %v6096
    %v6117 = vmul.f32 %v6077, %v6098
    %v6118 = vmul.f32 %v6078, %v6100
    %v6119 = vmul.f32 %v6079, %v6102
    %v6120 = vmul.f32 %v6080, %v6104
    %v6121 = vld [vmem:[%s6] sm:$0xff]
    %v6122 = vld [vmem:[%s6 + $0x8] sm:$0xff]
    %v6123 = vld [vmem:[%s6 + $0x10] sm:$0xff]
    %v6124 = vld [vmem:[%s6 + $0x18] sm:$0xff]
    %v6125 = vld [vmem:[%s6 + $0x20] sm:$0xff]
    %v6126 = vld [vmem:[%s6 + $0x28] sm:$0xff]
    %v6127 = vld [vmem:[%s6 + $0x30] sm:$0xff]
    %v6128 = vld [vmem:[%s6 + $0x38] sm:$0xff]
    %v6129 = vld [vmem:[%s7] sm:$0x1]
    %v6131 = vlaneseq
    %v6132 = vshrl.u32 %v6131, 7
    %v6133 = vsub.s32 0, %v6132
    %v6134 = vrot.slane %v6129, %v6133
    %vm6136 = vcmask 523264
    %v6138 = vsel %vm6136, %v6113, 0
    %v6141 = vsel %vm6136, %v6114, 0
    %v6144 = vsel %vm6136, %v6115, 0
    %v6147 = vsel %vm6136, %v6116, 0
    %v6150 = vsel %vm6136, %v6117, 0
    %v6153 = vsel %vm6136, %v6118, 0
    %v6156 = vsel %vm6136, %v6119, 0
    %v6159 = vsel %vm6136, %v6120, 0
    %6161 = vmatprep.subr.mxu0 0.0
    %6162 = vmatpush1.msra.mxu0 %v6121
    %6163 = vmatprep.subr.mxu0 0.0
    %6164 = vmatpush1.msra.mxu0 %v6122
    %6165 = vmatprep.subr.mxu0 0.0
    %6166 = vmatpush1.msra.mxu0 %v6123
    %6167 = vmatprep.subr.mxu0 0.0
    %6168 = vmatpush1.msra.mxu0 %v6124
    %6169 = vmatprep.subr.mxu0 0.0
    %6170 = vmatpush1.msra.mxu0 %v6125
    %6171 = vmatprep.subr.mxu0 0.0
    %6172 = vmatpush1.msra.mxu0 %v6126
    %6173 = vmatprep.subr.mxu0 0.0
    %6174 = vmatpush1.msra.mxu0 %v6127
    %6175 = vmatprep.subr.mxu0 0.0
    %6176 = vmatpush1.msra.mxu0 %v6128
    %6177 = vmatprep.subr.mxu0 0.0
    %6178 = vmatpush1.msra.mxu0 0.0
    %6179 = vmatprep.subr.mxu0 0.0
    %6180 = vmatpush1.msra.mxu0 0.0
    %6181 = vmatprep.subr.mxu0 0.0
    %6182 = vmatpush1.msra.mxu0 0.0
    %6183 = vmatprep.subr.mxu0 0.0
    %6184 = vmatpush1.msra.mxu0 0.0
    %6185 = vmatprep.subr.mxu0 0.0
    %6186 = vmatpush1.msra.mxu0 0.0
    %6187 = vmatprep.subr.mxu0 0.0
    %6188 = vmatpush1.msra.mxu0 0.0
    %6189 = vmatprep.subr.mxu0 0.0
    %6190 = vmatpush1.msra.mxu0 0.0
    %6191 = vmatprep.subr.mxu0 0.0
    %6192 = vmatpush1.msra.mxu0 0.0
    %6193 = vmatprep.subr.mxu0 0.0
    %6194 = vmatpush1.msra.mxu0 0.0
    %6195 = vmatprep.subr.mxu0 0.0
    %6196 = vmatpush1.msra.mxu0 0.0
    %6197 = vmatprep.subr.mxu0 0.0
    %6198 = vmatpush1.msra.mxu0 0.0
    %6199 = vmatprep.subr.mxu0 0.0
    %6200 = vmatpush1.msra.mxu0 0.0
    %6201 = vmatprep.subr.mxu0 0.0
    %6202 = vmatpush1.msra.mxu0 0.0
    %6203 = vmatprep.subr.mxu0 0.0
    %6204 = vmatpush1.msra.mxu0 0.0
    %6205 = vmatprep.subr.mxu0 0.0
    %6206 = vmatpush1.msra.mxu0 0.0
    %6207 = vmatprep.subr.mxu0 0.0
    %6208 = vmatpush1.msra.mxu0 0.0
    %6209 = vmatprep.subr.mxu0 0.0
    %6210 = vmatpush1.msra.mxu0 0.0
    %6211 = vmatprep.subr.mxu0 0.0
    %6212 = vmatpush1.msra.mxu0 0.0
    %6213 = vmatprep.subr.mxu0 0.0
    %6214 = vmatpush1.msra.mxu0 0.0
    %6215 = vmatprep.subr.mxu0 0.0
    %6216 = vmatpush1.msra.mxu0 0.0
    %6217 = vmatprep.subr.mxu0 0.0
    %6218 = vmatpush1.msra.mxu0 0.0
    %6219 = vmatprep.subr.mxu0 0.0
    %6220 = vmatpush1.msra.mxu0 0.0
    %6221 = vmatprep.subr.mxu0 0.0
    %6222 = vmatpush1.msra.mxu0 0.0
    %6223 = vmatprep.subr.mxu0 0.0
    %6224 = vmatpush1.msra.mxu0 0.0
    %6225 = vmatprep.mubr.f32.mxu0 0.0
    %6226 = vmatmul.mubr.f32.gmra.mrb[0].mxu0 %v6138
    %v6227 = vpop.f32.mrb[0].mxu0
    %v6228 = vadd.f32 %v6134, %v6227
    %v6229 = vpop.f32.mrb[0].mxu0
    %6230 = vmatprep.mubr.f32.mxu0 0.0
    %6231 = vmatmul.mubr.f32.gmra.mrb[0].mxu0 %v6141
    %v6232 = vpop.f32.mrb[0].mxu0
    %v6233 = vadd.f32 %v6134, %v6232
    %v6234 = vpop.f32.mrb[0].mxu0
    %6235 = vmatprep.mubr.f32.mxu0 0.0
    %6236 = vmatmul.mubr.f32.gmra.mrb[0].mxu0 %v6144
    %v6237 = vpop.f32.mrb[0].mxu0
    %v6238 = vadd.f32 %v6134, %v6237
    %v6239 = vpop.f32.mrb[0].mxu0
    %6240 = vmatprep.mubr.f32.mxu0 0.0
    %6241 = vmatmul.mubr.f32.gmra.mrb[0].mxu0 %v6147
    %v6242 = vpop.f32.mrb[0].mxu0
    %v6243 = vadd.f32 %v6134, %v6242
    %v6244 = vpop.f32.mrb[0].mxu0
    %6245 = vmatprep.mubr.f32.mxu0 0.0
    %6246 = vmatmul.mubr.f32.gmra.mrb[0].mxu0 %v6150
    %v6247 = vpop.f32.mrb[0].mxu0
    %v6248 = vadd.f32 %v6134, %v6247
    %v6249 = vpop.f32.mrb[0].mxu0
    %6250 = vmatprep.mubr.f32.mxu0 0.0
    %6251 = vmatmul.mubr.f32.gmra.mrb[0].mxu0 %v6153
    %v6252 = vpop.f32.mrb[0].mxu0
    %v6253 = vadd.f32 %v6134, %v6252
    %v6254 = vpop.f32.mrb[0].mxu0
    %6255 = vmatprep.mubr.f32.mxu0 0.0
    %6256 = vmatmul.mubr.f32.gmra.mrb[0].mxu0 %v6156
    %v6257 = vpop.f32.mrb[0].mxu0
    %v6258 = vadd.f32 %v6134, %v6257
    %v6259 = vpop.f32.mrb[0].mxu0
    %6260 = vmatprep.mubr.f32.mxu0 0.0
    %6261 = vmatmul.mubr.f32.gmra.mrb[0].mxu0 %v6159
    %v6262 = vpop.f32.mrb[0].mxu0
    %v6263 = vadd.f32 %v6134, %v6262
    %v6264 = vpop.f32.mrb[0].mxu0
    %6265 = vdwg.mxu0
    %vm6266 = vcmask 23552
    %6267 = vst.msk [vmem:[%s8] sm:$0xff] %vm6266, %v6228
    %6268 = vst.msk [vmem:[%s8 + $0x8] sm:$0xff] %vm6266, %v6233
    %6269 = vst.msk [vmem:[%s8 + $0x10] sm:$0xff] %vm6266, %v6238
    %6270 = vst.msk [vmem:[%s8 + $0x18] sm:$0xff] %vm6266, %v6243
    %6271 = vst.msk [vmem:[%s8 + $0x20] sm:$0xff] %vm6266, %v6248
    %6272 = vst.msk [vmem:[%s8 + $0x28] sm:$0xff] %vm6266, %v6253
    %6273 = vst.msk [vmem:[%s8 + $0x30] sm:$0xff] %vm6266, %v6258
    %6274 = vst.msk [vmem:[%s8 + $0x38] sm:$0xff] %vm6266, %v6263
    // Predicated region
    $region42: #{tpu_custom_call.1} parent=1 // pred_check
      _
    $region43: #{tpu_custom_call.1} parent=1 // pred_check_branch
      %6276 = sbr.rel (0) target = $region45
    $region44: #{tpu_custom_call.1} parent=1 // pred_region
      _
    $region45: #{tpu_custom_call.1} parent=1 // pred_fallthru
      _
    // Predicated region
    $region46: #{tpu_custom_call.1} parent=1 // pred_check
      _
    $region47: #{tpu_custom_call.1} parent=1 // pred_check_branch
      %6278 = sbr.rel (0) target = $region49
    $region48: #{tpu_custom_call.1} parent=1 // pred_region
      _
    $region49: #{tpu_custom_call.1} parent=1 // pred_fallthru
      _
    %6279 = vsyncpa [#allocation3], 1
    %6280 = vsyncpa [#allocation5], 1

</llo_original>
